<compile_context>
chip_gen: v5e
topology: v5e:2x2
jax: 0.10.0
libtpu: 0.0.40
codegen_flags: <defaults>
</compile_context>

<pallas_src>
import jax
import jax.numpy as jnp
from jax.experimental import pallas as pl
from jax.experimental.pallas import tpu as pltpu

EMB = 16                 # embedding_dim
ATT = 32                 # attention_units
STAT = 7 * EMB           # static feature width (uid|gender|age|job|mid|cat|title)
STAT_PAD = 128           # padded to a full lane width / MXU-friendly K
BN_EPS = 1e-5            # nn.BatchNorm1d default eps (Dice assumed in eval mode)
BN_SCALE = 1.0 / (1.0 + BN_EPS) ** 0.5


def _choose_tb(batch, seq):
    """Batch tile: multiple of 128 (lane-dense stores / aligned slices), large
    enough to amortise per-grid-step overhead, small enough for scoped VMEM on
    every generation, and leaving >=2 tiles for v7x's 2nd core when possible."""
    tb = 512
    while tb > 128 and tb * seq * 700 > (6 << 20):   # per-tile activation budget
        tb //= 2
    while tb > 128 and batch < 2 * tb:               # >=2 tiles when batch allows
        tb //= 2
    # TODO(synk): for very long histories (e.g. hist_len ~ 2314) the attention
    # stream should be chunked over S inside the kernel instead of shrinking TB.
    return tb


def _dice_ref(x, alpha):
    # Canonical DIN Dice in eval mode (running_mean=0, running_var=1, identity
    # affine).  TODO(synk): Dice class body not given in the source; trained BN
    # statistics/affine would change this.
    p = jax.nn.sigmoid(x * BN_SCALE)
    return p * x + alpha * (1.0 - p) * x


def din_kernel(att_t_ref, att_nat_ref, static_ref,
               aw1t, ab1, al1, oml1,
               aw2t, ab2, al2, oml2,
               aw3c, ab3,
               pw1st, pw1ht, pb1,
               pw2t, pb2, pw3c, pb3,
               out_ref):
    """One grid step == one batch tile of TB rows; batch sits on the lane axis.

    att_t_ref   : (E, S*TB)   transposed [candidate; history] stream, col = s*TB+b
    att_nat_ref : (S, E, TB)  same data in natural order for the weighted sum
    static_ref  : (128, TB)   zero-padded static features (features on sublanes)
    out_ref     : (1, 1, TB)  lane-dense per-tile predictions
    """
    S, E, TB = att_nat_ref.shape
    cd = aw2t.dtype                      # compute dtype for matmul operands

    def dice(x, alpha, one_minus_alpha):
        p = jax.nn.sigmoid(x * BN_SCALE)                       # f32, EUP
        return x * (alpha[...] + one_minus_alpha[...] * p)

    # ---- attention MLP, lane-dense: activations are (feat, S*TB) ----
    xt = att_t_ref[...]                                                  # (E, S*TB)
    h = jnp.dot(aw1t[...], xt, preferred_element_type=jnp.float32) + ab1[...]
    h = dice(h, al1, oml1)                                               # (ATT, S*TB)
    h = jnp.dot(aw2t[...], h.astype(cd),
                preferred_element_type=jnp.float32) + ab2[...]
    h = dice(h, al2, oml2)                                               # (ATT, S*TB)
    # Linear(ATT, 1): VPU multiply + sublane (XLU) reduce, no N=1 MXU matmul
    sc = jnp.sum(h * aw3c[...], axis=0, keepdims=True) + ab3[...]        # (1, S*TB)
    w = jax.nn.sigmoid(sc)                                               # (1, S*TB)

    # ---- attention-weighted history sum: S-1 lane-dense FMAs, candidate (s=0)
    # excluded.  Replaces the old quadratic (TB, TB*S) selector matmul. ----
    hist = jnp.zeros((E, TB), jnp.float32)
    for s in range(1, S):
        hist = hist + w[:, s * TB:(s + 1) * TB] * att_nat_ref[s]         # (E, TB)

    # ---- prediction MLP 128 -> 128 -> 64 -> 1, fully transposed ----
    z = (jnp.dot(pw1st[...], static_ref[...], preferred_element_type=jnp.float32)
         + jnp.dot(pw1ht[...], hist.astype(cd), preferred_element_type=jnp.float32)
         + pb1[...])                                                     # (128, TB)
    z = jnp.maximum(z, 0.0)
    z = jnp.maximum(
        jnp.dot(pw2t[...], z.astype(cd), preferred_element_type=jnp.float32)
        + pb2[...], 0.0)                                                 # (64, TB)
    s2 = jnp.sum(z * pw3c[...], axis=0, keepdims=True) + pb3[...]        # (1, TB)
    # TODO(synk): CustomActivation definition not provided; using Sigmoid.
    out_ref[0] = jax.nn.sigmoid(s2)                                      # lane-dense


def din_forward_pallas(params, uid, gender, age, job, movie_id,
                       movie_categories, movie_titles, history_movie_ids,
                       compute_dtype=jnp.float32):
    B = uid.shape[0]
    L = history_movie_ids.shape[1]
    S = L + 1
    TB = _choose_tb(B, S)
    T = -(-B // TB)                      # number of batch tiles
    Bp = T * TB

    pad = Bp - B
    if pad:
        p1 = lambda a: jnp.pad(a, ((0, pad),) + ((0, 0),) * (a.ndim - 1))
        uid, gender, age, job, movie_id = map(p1, (uid, gender, age, job, movie_id))
        movie_categories, movie_titles, history_movie_ids = map(
            p1, (movie_categories, movie_titles, history_movie_ids))

    take = lambda tbl, idx: jnp.take(tbl, idx, axis=0)

    # --- embedding lookups + cheap pre-reductions (glue, plain XLA) ---
    uid_e = take(params['uid_emb'], uid)
    gen_e = take(params['gender_emb'], gender)
    age_e = take(params['age_emb'], age)
    job_e = take(params['job_emb'], job)
    mid_e = take(params['mid_emb'], movie_id)
    cat_mean = jnp.mean(take(params['cat_emb'], movie_categories), axis=1)
    ttl_mean = jnp.mean(take(params['title_emb'], movie_titles), axis=1)
    hist_e = take(params['hist_emb'], history_movie_ids)                 # (Bp, L, E)

    cd = compute_dtype
    att_seq = jnp.concatenate([mid_e[:, None, :], hist_e], axis=1)       # (Bp, S, E)

    # lane-dense attention stream: (E, T*S*TB), column = t*S*TB + s*TB + b
    att_t = (att_seq.reshape(T, TB, S, EMB)
             .transpose(3, 0, 2, 1)
             .reshape(EMB, T * S * TB)).astype(cd)
    # natural-order stream for the weighted history sum: (S, E, Bp)
    att_nat = att_seq.transpose(1, 2, 0).astype(cd)

    static_feat = jnp.concatenate(
        [uid_e, gen_e, age_e, job_e, mid_e, cat_mean, ttl_mean], axis=1)  # (Bp, 112)
    static_t = jnp.pad(static_feat.T,
                       ((0, STAT_PAD - STAT), (0, 0))).astype(cd)         # (128, Bp)

    f32 = jnp.float32
    colT = lambda a: a.T.astype(f32)     # (1, F) row -> (F, 1) column, f32
    # torch cat([x, x], -1) folded into the first attention weight
    aw1t = (params['aw1'][:EMB] + params['aw1'][EMB:]).T.astype(cd)       # (ATT, E)
    aw2t = params['aw2'].T.astype(cd)                                     # (ATT, ATT)
    pw1st = jnp.pad(params['pw1'][:STAT].T,
                    ((0, 0), (0, STAT_PAD - STAT))).astype(cd)            # (128, 128)
    pw1ht = params['pw1'][STAT:].T.astype(cd)                             # (128, E)
    pw2t = params['pw2'].T.astype(cd)                                     # (64, 128)

    weight_args = (
        aw1t, colT(params['ab1']), colT(params['al1']), colT(1.0 - params['al1']),
        aw2t, colT(params['ab2']), colT(params['al2']), colT(1.0 - params['al2']),
        params['aw3'].astype(f32), params['ab3'].astype(f32),
        pw1st, pw1ht, colT(params['pb1']),
        pw2t, colT(params['pb2']),
        params['pw3'].astype(f32), params['pb3'].astype(f32),
    )
    weight_specs = [pl.BlockSpec(a.shape, lambda t: (0, 0)) for a in weight_args]

    out = pl.pallas_call(
        din_kernel,
        out_shape=jax.ShapeDtypeStruct((T, 1, TB), jnp.float32),
        grid=(T,),
        in_specs=[
            pl.BlockSpec((EMB, S * TB), lambda t: (0, t)),        # transposed att
            pl.BlockSpec((S, EMB, TB), lambda t: (0, 0, t)),      # natural att
            pl.BlockSpec((STAT_PAD, TB), lambda t: (0, t)),       # static features
            *weight_specs,
        ],
        out_specs=pl.BlockSpec((1, 1, TB), lambda t: (t, 0, 0)),
        compiler_params=pltpu.CompilerParams(
            dimension_semantics=("parallel",)),
    )(att_t, att_nat, static_t, *weight_args)

    return out.reshape(Bp, 1)[:B]                                         # (B, 1)


def din_forward_ref(params, uid, gender, age, job, movie_id,
                    movie_categories, movie_titles, history_movie_ids):
    """Pure-JAX reference mirroring the PyTorch forward (unfolded weights)."""
    take = lambda tbl, idx: jnp.take(tbl, idx, axis=0)
    uid_e = take(params['uid_emb'], uid)
    gen_e = take(params['gender_emb'], gender)
    age_e = take(params['age_emb'], age)
    job_e = take(params['job_emb'], job)
    mid_e = take(params['mid_emb'], movie_id)
    cat_e = take(params['cat_emb'], movie_categories)
    ttl_e = take(params['title_emb'], movie_titles)
    hist_e = take(params['hist_emb'], history_movie_ids)

    att_in = jnp.concatenate([mid_e[:, None, :], hist_e], axis=1)
    att_in = jnp.concatenate([att_in, att_in], axis=-1)
    B, S, D = att_in.shape
    x = att_in.reshape(-1, D)
    h = _dice_ref(x @ params['aw1'] + params['ab1'], params['al1'])
    h = _dice_ref(h @ params['aw2'] + params['ab2'], params['al2'])
    w = jax.nn.sigmoid(h @ params['aw3'] + params['ab3']).reshape(B, S, 1)
    hist_att = jnp.sum(w[:, 1:, :] * hist_e, axis=1)
    cat_mean = jnp.mean(cat_e, axis=1)
    ttl_mean = jnp.mean(ttl_e, axis=1)
    feat = jnp.concatenate(
        [uid_e, gen_e, age_e, job_e, mid_e, cat_mean, ttl_mean, hist_att], axis=1)
    z = jnp.maximum(feat @ params['pw1'] + params['pb1'], 0.0)
    z = jnp.maximum(z @ params['pw2'] + params['pb2'], 0.0)
    z = z @ params['pw3'] + params['pb3']
    return jax.nn.sigmoid(z)


def init_params(key, uid_num, gender_num, age_num, job_num,
                mid_num, cat_num, title_num):
    ks = iter(jax.random.split(key, 32))

    def nrm(shape, scale=0.1):
        return scale * jax.random.normal(next(ks), shape, dtype=jnp.float32)

    return {
        # embedding tables
        'uid_emb': nrm((uid_num, EMB)),
        'gender_emb': nrm((gender_num, EMB)),
        'age_emb': nrm((age_num, EMB)),
        'job_emb': nrm((job_num, EMB)),
        'mid_emb': nrm((mid_num, EMB)),
        'cat_emb': nrm((cat_num, EMB)),
        'title_emb': nrm((title_num, EMB)),
        'hist_emb': nrm((mid_num, EMB)),
        # attention MLP: Linear(32,32)+Dice, Linear(32,32)+Dice, Linear(32,1)+Sigmoid
        'aw1': nrm((2 * EMB, ATT)), 'ab1': nrm((1, ATT)), 'al1': nrm((1, ATT)),
        'aw2': nrm((ATT, ATT)),     'ab2': nrm((1, ATT)), 'al2': nrm((1, ATT)),
        'aw3': nrm((ATT, 1)),       'ab3': nrm((1, 1)),
        # prediction MLP: 128 -> 128 -> 64 -> 1
        'pw1': nrm((8 * EMB, 128)), 'pb1': nrm((1, 128)),
        'pw2': nrm((128, 64)),      'pb2': nrm((1, 64)),
        'pw3': nrm((64, 1)),        'pb3': nrm((1, 1)),
    }


if __name__ == "__main__":
    key = jax.random.PRNGKey(0)
    pkey, dkey = jax.random.split(key)

    # vocab sizes (synthetic)
    uid_num, gender_num, age_num, job_num = 32, 2, 7, 21
    mid_num, cat_num, title_num = 64, 19, 50
    # small shapes consistent with the forward
    B, L, CL, TL = 2, 8, 18, 18

    params = init_params(pkey, uid_num, gender_num, age_num, job_num,
                         mid_num, cat_num, title_num)

    ks = jax.random.split(dkey, 8)
    uid = jax.random.randint(ks[0], (B,), 0, uid_num)
    gender = jax.random.randint(ks[1], (B,), 0, gender_num)
    age = jax.random.randint(ks[2], (B,), 0, age_num)
    job = jax.random.randint(ks[3], (B,), 0, job_num)
    movie_id = jax.random.randint(ks[4], (B,), 0, mid_num)
    movie_categories = jax.random.randint(ks[5], (B, CL), 0, cat_num)
    movie_titles = jax.random.randint(ks[6], (B, TL), 0, title_num)
    history_movie_ids = jax.random.randint(ks[7], (B, L), 0, mid_num)

    out = din_forward_pallas(params, uid, gender, age, job, movie_id,
                             movie_categories, movie_titles, history_movie_ids)
    out = jax.block_until_ready(out)
    assert out.shape == (B, 1), out.shape

    ref = din_forward_ref(params, uid, gender, age, job, movie_id,
                          movie_categories, movie_titles, history_movie_ids)
    if not jnp.allclose(out, ref, atol=2e-3, rtol=2e-2):
        raise AssertionError(f"mismatch:\n{out}\nvs ref\n{ref}")

    print("KERNEL_OK")
</pallas_src>

<mosaic_0001>
module attributes {stable_mosaic.version = 11 : i64} {
  func.func @din_kernel(%arg0: i32, %arg1: memref<16x1152xf32, #tpu.memory_space<vmem>>, %arg2: memref<9x16x128xf32, #tpu.memory_space<vmem>>, %arg3: memref<128x128xf32, #tpu.memory_space<vmem>>, %arg4: memref<32x16xf32, #tpu.memory_space<vmem>>, %arg5: memref<32x1xf32, #tpu.memory_space<vmem>>, %arg6: memref<32x1xf32, #tpu.memory_space<vmem>>, %arg7: memref<32x1xf32, #tpu.memory_space<vmem>>, %arg8: memref<32x32xf32, #tpu.memory_space<vmem>>, %arg9: memref<32x1xf32, #tpu.memory_space<vmem>>, %arg10: memref<32x1xf32, #tpu.memory_space<vmem>>, %arg11: memref<32x1xf32, #tpu.memory_space<vmem>>, %arg12: memref<32x1xf32, #tpu.memory_space<vmem>>, %arg13: memref<1x1xf32, #tpu.memory_space<vmem>>, %arg14: memref<128x128xf32, #tpu.memory_space<vmem>>, %arg15: memref<128x16xf32, #tpu.memory_space<vmem>>, %arg16: memref<128x1xf32, #tpu.memory_space<vmem>>, %arg17: memref<64x128xf32, #tpu.memory_space<vmem>>, %arg18: memref<64x1xf32, #tpu.memory_space<vmem>>, %arg19: memref<64x1xf32, #tpu.memory_space<vmem>>, %arg20: memref<1x1xf32, #tpu.memory_space<vmem>>, %arg21: memref<1x1x128xf32, #tpu.memory_space<vmem>>) attributes {dimension_semantics = [#tpu.dimension_semantics<parallel>], iteration_bounds = array<i64: 1>, scalar_prefetch = 0 : i64, scratch_operands = 0 : i64, tpu.core_type = #tpu.core_type<tc>, window_params = [{transform_indices = @transform_0, window_bounds = array<i64: 16, 1152>}, {transform_indices = @transform_1, window_bounds = array<i64: 9, 16, 128>}, {transform_indices = @transform_2, window_bounds = array<i64: 128, 128>}, {pipeline_mode = #tpu.pipeline_mode<synchronous>, transform_indices = @transform_3, window_bounds = array<i64: 32, 16>}, {pipeline_mode = #tpu.pipeline_mode<synchronous>, transform_indices = @transform_4, window_bounds = array<i64: 32, 1>}, {pipeline_mode = #tpu.pipeline_mode<synchronous>, transform_indices = @transform_5, window_bounds = array<i64: 32, 1>}, {pipeline_mode = #tpu.pipeline_mode<synchronous>, transform_indices = @transform_6, window_bounds = array<i64: 32, 1>}, {pipeline_mode = #tpu.pipeline_mode<synchronous>, transform_indices = @transform_7, window_bounds = array<i64: 32, 32>}, {pipeline_mode = #tpu.pipeline_mode<synchronous>, transform_indices = @transform_8, window_bounds = array<i64: 32, 1>}, {pipeline_mode = #tpu.pipeline_mode<synchronous>, transform_indices = @transform_9, window_bounds = array<i64: 32, 1>}, {pipeline_mode = #tpu.pipeline_mode<synchronous>, transform_indices = @transform_10, window_bounds = array<i64: 32, 1>}, {pipeline_mode = #tpu.pipeline_mode<synchronous>, transform_indices = @transform_11, window_bounds = array<i64: 32, 1>}, {pipeline_mode = #tpu.pipeline_mode<synchronous>, transform_indices = @transform_12, window_bounds = array<i64: 1, 1>}, {pipeline_mode = #tpu.pipeline_mode<synchronous>, transform_indices = @transform_13, window_bounds = array<i64: 128, 128>}, {pipeline_mode = #tpu.pipeline_mode<synchronous>, transform_indices = @transform_14, window_bounds = array<i64: 128, 16>}, {pipeline_mode = #tpu.pipeline_mode<synchronous>, transform_indices = @transform_15, window_bounds = array<i64: 128, 1>}, {pipeline_mode = #tpu.pipeline_mode<synchronous>, transform_indices = @transform_16, window_bounds = array<i64: 64, 128>}, {pipeline_mode = #tpu.pipeline_mode<synchronous>, transform_indices = @transform_17, window_bounds = array<i64: 64, 1>}, {pipeline_mode = #tpu.pipeline_mode<synchronous>, transform_indices = @transform_18, window_bounds = array<i64: 64, 1>}, {pipeline_mode = #tpu.pipeline_mode<synchronous>, transform_indices = @transform_19, window_bounds = array<i64: 1, 1>}, {transform_indices = @transform_20, window_bounds = array<i64: 1, 1, 128>}]} {
    %c0 = arith.constant 0 : index
    %c0_0 = arith.constant 0 : index
    %0 = vector.load %arg1[%c0, %c0_0] : memref<16x1152xf32, #tpu.memory_space<vmem>>, vector<16x1152xf32>
    %c0_1 = arith.constant 0 : index
    %c0_2 = arith.constant 0 : index
    %1 = vector.load %arg4[%c0_1, %c0_2] : memref<32x16xf32, #tpu.memory_space<vmem>>, vector<32x16xf32>
    %cst = arith.constant dense<0.000000e+00> : vector<32x1152xf32>
    %2 = tpu.matmul %1, %0, %cst {dimension_numbers = #tpu.dot_dimension_numbers<[1], [0], [0], [1], [0, 0, 1, 1], [], []>} : vector<32x16xf32>, vector<16x1152xf32>, vector<32x1152xf32> -> vector<32x1152xf32>
    %c0_3 = arith.constant 0 : index
    %c0_4 = arith.constant 0 : index
    %3 = vector.load %arg5[%c0_3, %c0_4] : memref<32x1xf32, #tpu.memory_space<vmem>>, vector<32x1xf32>
    %4 = vector.broadcast %3 : vector<32x1xf32> to vector<32x1152xf32>
    %5 = arith.addf %2, %4 : vector<32x1152xf32>
    %cst_5 = arith.constant 0.999994993 : f32
    %6 = vector.broadcast %cst_5 : f32 to vector<32x1152xf32>
    %7 = arith.mulf %5, %6 : vector<32x1152xf32>
    %8 = arith.negf %7 : vector<32x1152xf32>
    %9 = math.exp %8 : vector<32x1152xf32>
    %cst_6 = arith.constant 1.000000e+00 : f32
    %10 = vector.broadcast %cst_6 : f32 to vector<32x1152xf32>
    %11 = arith.addf %10, %9 : vector<32x1152xf32>
    %12 = arith.divf %10, %11 : vector<32x1152xf32>
    %c0_7 = arith.constant 0 : index
    %c0_8 = arith.constant 0 : index
    %13 = vector.load %arg6[%c0_7, %c0_8] : memref<32x1xf32, #tpu.memory_space<vmem>>, vector<32x1xf32>
    %c0_9 = arith.constant 0 : index
    %c0_10 = arith.constant 0 : index
    %14 = vector.load %arg7[%c0_9, %c0_10] : memref<32x1xf32, #tpu.memory_space<vmem>>, vector<32x1xf32>
    %15 = vector.broadcast %14 : vector<32x1xf32> to vector<32x1152xf32>
    %16 = arith.mulf %15, %12 : vector<32x1152xf32>
    %17 = vector.broadcast %13 : vector<32x1xf32> to vector<32x1152xf32>
    %18 = arith.addf %17, %16 : vector<32x1152xf32>
    %19 = arith.mulf %5, %18 : vector<32x1152xf32>
    %c0_11 = arith.constant 0 : index
    %c0_12 = arith.constant 0 : index
    %20 = vector.load %arg8[%c0_11, %c0_12] : memref<32x32xf32, #tpu.memory_space<vmem>>, vector<32x32xf32>
    %cst_13 = arith.constant dense<0.000000e+00> : vector<32x1152xf32>
    %21 = tpu.matmul %20, %19, %cst_13 {dimension_numbers = #tpu.dot_dimension_numbers<[1], [0], [0], [1], [0, 0, 1, 1], [], []>} : vector<32x32xf32>, vector<32x1152xf32>, vector<32x1152xf32> -> vector<32x1152xf32>
    %c0_14 = arith.constant 0 : index
    %c0_15 = arith.constant 0 : index
    %22 = vector.load %arg9[%c0_14, %c0_15] : memref<32x1xf32, #tpu.memory_space<vmem>>, vector<32x1xf32>
    %23 = vector.broadcast %22 : vector<32x1xf32> to vector<32x1152xf32>
    %24 = arith.addf %21, %23 : vector<32x1152xf32>
    %cst_16 = arith.constant 0.999994993 : f32
    %25 = vector.broadcast %cst_16 : f32 to vector<32x1152xf32>
    %26 = arith.mulf %24, %25 : vector<32x1152xf32>
    %27 = arith.negf %26 : vector<32x1152xf32>
    %28 = math.exp %27 : vector<32x1152xf32>
    %cst_17 = arith.constant 1.000000e+00 : f32
    %29 = vector.broadcast %cst_17 : f32 to vector<32x1152xf32>
    %30 = arith.addf %29, %28 : vector<32x1152xf32>
    %31 = arith.divf %29, %30 : vector<32x1152xf32>
    %c0_18 = arith.constant 0 : index
    %c0_19 = arith.constant 0 : index
    %32 = vector.load %arg10[%c0_18, %c0_19] : memref<32x1xf32, #tpu.memory_space<vmem>>, vector<32x1xf32>
    %c0_20 = arith.constant 0 : index
    %c0_21 = arith.constant 0 : index
    %33 = vector.load %arg11[%c0_20, %c0_21] : memref<32x1xf32, #tpu.memory_space<vmem>>, vector<32x1xf32>
    %34 = vector.broadcast %33 : vector<32x1xf32> to vector<32x1152xf32>
    %35 = arith.mulf %34, %31 : vector<32x1152xf32>
    %36 = vector.broadcast %32 : vector<32x1xf32> to vector<32x1152xf32>
    %37 = arith.addf %36, %35 : vector<32x1152xf32>
    %38 = arith.mulf %24, %37 : vector<32x1152xf32>
    %c0_22 = arith.constant 0 : index
    %c0_23 = arith.constant 0 : index
    %39 = vector.load %arg12[%c0_22, %c0_23] : memref<32x1xf32, #tpu.memory_space<vmem>>, vector<32x1xf32>
    %40 = vector.broadcast %39 : vector<32x1xf32> to vector<32x1152xf32>
    %41 = arith.mulf %38, %40 : vector<32x1152xf32>
    %cst_24 = arith.constant dense<0.000000e+00> : vector<1152xf32>
    %42 = vector.multi_reduction <add>, %41, %cst_24 [0] : vector<32x1152xf32> to vector<1152xf32>
    %43 = vector.shape_cast %42 : vector<1152xf32> to vector<1x1152xf32>
    %c0_25 = arith.constant 0 : index
    %c0_26 = arith.constant 0 : index
    %44 = vector.load %arg13[%c0_25, %c0_26] : memref<1x1xf32, #tpu.memory_space<vmem>>, vector<1x1xf32>
    %45 = vector.broadcast %44 : vector<1x1xf32> to vector<1x1152xf32>
    %46 = arith.addf %43, %45 : vector<1x1152xf32>
    %47 = arith.negf %46 : vector<1x1152xf32>
    %48 = math.exp %47 : vector<1x1152xf32>
    %cst_27 = arith.constant 1.000000e+00 : f32
    %49 = vector.broadcast %cst_27 : f32 to vector<1x1152xf32>
    %50 = arith.addf %49, %48 : vector<1x1152xf32>
    %51 = arith.divf %49, %50 : vector<1x1152xf32>
    %cst_28 = arith.constant 0.000000e+00 : f32
    %52 = vector.broadcast %cst_28 : f32 to vector<16x128xf32>
    %53 = vector.extract_strided_slice %51 {offsets = [0, 128], sizes = [1, 128], strides = [1, 1]} : vector<1x1152xf32> to vector<1x128xf32>
    %c1 = arith.constant 1 : index
    %c0_29 = arith.constant 0 : index
    %c0_30 = arith.constant 0 : index
    %54 = vector.load %arg2[%c1, %c0_29, %c0_30] : memref<9x16x128xf32, #tpu.memory_space<vmem>>, vector<1x16x128xf32>
    %55 = vector.shape_cast %54 : vector<1x16x128xf32> to vector<16x128xf32>
    %56 = vector.broadcast %53 : vector<1x128xf32> to vector<16x128xf32>
    %57 = arith.mulf %56, %55 : vector<16x128xf32>
    %58 = arith.addf %52, %57 : vector<16x128xf32>
    %59 = vector.extract_strided_slice %51 {offsets = [0, 256], sizes = [1, 128], strides = [1, 1]} : vector<1x1152xf32> to vector<1x128xf32>
    %c2 = arith.constant 2 : index
    %c0_31 = arith.constant 0 : index
    %c0_32 = arith.constant 0 : index
    %60 = vector.load %arg2[%c2, %c0_31, %c0_32] : memref<9x16x128xf32, #tpu.memory_space<vmem>>, vector<1x16x128xf32>
    %61 = vector.shape_cast %60 : vector<1x16x128xf32> to vector<16x128xf32>
    %62 = vector.broadcast %59 : vector<1x128xf32> to vector<16x128xf32>
    %63 = arith.mulf %62, %61 : vector<16x128xf32>
    %64 = arith.addf %58, %63 : vector<16x128xf32>
    %65 = vector.extract_strided_slice %51 {offsets = [0, 384], sizes = [1, 128], strides = [1, 1]} : vector<1x1152xf32> to vector<1x128xf32>
    %c3 = arith.constant 3 : index
    %c0_33 = arith.constant 0 : index
    %c0_34 = arith.constant 0 : index
    %66 = vector.load %arg2[%c3, %c0_33, %c0_34] : memref<9x16x128xf32, #tpu.memory_space<vmem>>, vector<1x16x128xf32>
    %67 = vector.shape_cast %66 : vector<1x16x128xf32> to vector<16x128xf32>
    %68 = vector.broadcast %65 : vector<1x128xf32> to vector<16x128xf32>
    %69 = arith.mulf %68, %67 : vector<16x128xf32>
    %70 = arith.addf %64, %69 : vector<16x128xf32>
    %71 = vector.extract_strided_slice %51 {offsets = [0, 512], sizes = [1, 128], strides = [1, 1]} : vector<1x1152xf32> to vector<1x128xf32>
    %c4 = arith.constant 4 : index
    %c0_35 = arith.constant 0 : index
    %c0_36 = arith.constant 0 : index
    %72 = vector.load %arg2[%c4, %c0_35, %c0_36] : memref<9x16x128xf32, #tpu.memory_space<vmem>>, vector<1x16x128xf32>
    %73 = vector.shape_cast %72 : vector<1x16x128xf32> to vector<16x128xf32>
    %74 = vector.broadcast %71 : vector<1x128xf32> to vector<16x128xf32>
    %75 = arith.mulf %74, %73 : vector<16x128xf32>
    %76 = arith.addf %70, %75 : vector<16x128xf32>
    %77 = vector.extract_strided_slice %51 {offsets = [0, 640], sizes = [1, 128], strides = [1, 1]} : vector<1x1152xf32> to vector<1x128xf32>
    %c5 = arith.constant 5 : index
    %c0_37 = arith.constant 0 : index
    %c0_38 = arith.constant 0 : index
    %78 = vector.load %arg2[%c5, %c0_37, %c0_38] : memref<9x16x128xf32, #tpu.memory_space<vmem>>, vector<1x16x128xf32>
    %79 = vector.shape_cast %78 : vector<1x16x128xf32> to vector<16x128xf32>
    %80 = vector.broadcast %77 : vector<1x128xf32> to vector<16x128xf32>
    %81 = arith.mulf %80, %79 : vector<16x128xf32>
    %82 = arith.addf %76, %81 : vector<16x128xf32>
    %83 = vector.extract_strided_slice %51 {offsets = [0, 768], sizes = [1, 128], strides = [1, 1]} : vector<1x1152xf32> to vector<1x128xf32>
    %c6 = arith.constant 6 : index
    %c0_39 = arith.constant 0 : index
    %c0_40 = arith.constant 0 : index
    %84 = vector.load %arg2[%c6, %c0_39, %c0_40] : memref<9x16x128xf32, #tpu.memory_space<vmem>>, vector<1x16x128xf32>
    %85 = vector.shape_cast %84 : vector<1x16x128xf32> to vector<16x128xf32>
    %86 = vector.broadcast %83 : vector<1x128xf32> to vector<16x128xf32>
    %87 = arith.mulf %86, %85 : vector<16x128xf32>
    %88 = arith.addf %82, %87 : vector<16x128xf32>
    %89 = vector.extract_strided_slice %51 {offsets = [0, 896], sizes = [1, 128], strides = [1, 1]} : vector<1x1152xf32> to vector<1x128xf32>
    %c7 = arith.constant 7 : index
    %c0_41 = arith.constant 0 : index
    %c0_42 = arith.constant 0 : index
    %90 = vector.load %arg2[%c7, %c0_41, %c0_42] : memref<9x16x128xf32, #tpu.memory_space<vmem>>, vector<1x16x128xf32>
    %91 = vector.shape_cast %90 : vector<1x16x128xf32> to vector<16x128xf32>
    %92 = vector.broadcast %89 : vector<1x128xf32> to vector<16x128xf32>
    %93 = arith.mulf %92, %91 : vector<16x128xf32>
    %94 = arith.addf %88, %93 : vector<16x128xf32>
    %95 = vector.extract_strided_slice %51 {offsets = [0, 1024], sizes = [1, 128], strides = [1, 1]} : vector<1x1152xf32> to vector<1x128xf32>
    %c8 = arith.constant 8 : index
    %c0_43 = arith.constant 0 : index
    %c0_44 = arith.constant 0 : index
    %96 = vector.load %arg2[%c8, %c0_43, %c0_44] : memref<9x16x128xf32, #tpu.memory_space<vmem>>, vector<1x16x128xf32>
    %97 = vector.shape_cast %96 : vector<1x16x128xf32> to vector<16x128xf32>
    %98 = vector.broadcast %95 : vector<1x128xf32> to vector<16x128xf32>
    %99 = arith.mulf %98, %97 : vector<16x128xf32>
    %100 = arith.addf %94, %99 : vector<16x128xf32>
    %c0_45 = arith.constant 0 : index
    %c0_46 = arith.constant 0 : index
    %101 = vector.load %arg14[%c0_45, %c0_46] : memref<128x128xf32, #tpu.memory_space<vmem>>, vector<128x128xf32>
    %c0_47 = arith.constant 0 : index
    %c0_48 = arith.constant 0 : index
    %102 = vector.load %arg3[%c0_47, %c0_48] : memref<128x128xf32, #tpu.memory_space<vmem>>, vector<128x128xf32>
    %cst_49 = arith.constant dense<0.000000e+00> : vector<128x128xf32>
    %103 = tpu.matmul %101, %102, %cst_49 {dimension_numbers = #tpu.dot_dimension_numbers<[1], [0], [0], [1], [0, 0, 1, 1], [], []>} : vector<128x128xf32>, vector<128x128xf32>, vector<128x128xf32> -> vector<128x128xf32>
    %c0_50 = arith.constant 0 : index
    %c0_51 = arith.constant 0 : index
    %104 = vector.load %arg15[%c0_50, %c0_51] : memref<128x16xf32, #tpu.memory_space<vmem>>, vector<128x16xf32>
    %cst_52 = arith.constant dense<0.000000e+00> : vector<128x128xf32>
    %105 = tpu.matmul %104, %100, %cst_52 {dimension_numbers = #tpu.dot_dimension_numbers<[1], [0], [0], [1], [0, 0, 1, 1], [], []>} : vector<128x16xf32>, vector<16x128xf32>, vector<128x128xf32> -> vector<128x128xf32>
    %106 = arith.addf %103, %105 : vector<128x128xf32>
    %c0_53 = arith.constant 0 : index
    %c0_54 = arith.constant 0 : index
    %107 = vector.load %arg16[%c0_53, %c0_54] : memref<128x1xf32, #tpu.memory_space<vmem>>, vector<128x1xf32>
    %108 = vector.broadcast %107 : vector<128x1xf32> to vector<128x128xf32>
    %109 = arith.addf %106, %108 : vector<128x128xf32>
    %cst_55 = arith.constant 0.000000e+00 : f32
    %110 = vector.broadcast %cst_55 : f32 to vector<128x128xf32>
    %111 = arith.maximumf %109, %110 : vector<128x128xf32>
    %c0_56 = arith.constant 0 : index
    %c0_57 = arith.constant 0 : index
    %112 = vector.load %arg17[%c0_56, %c0_57] : memref<64x128xf32, #tpu.memory_space<vmem>>, vector<64x128xf32>
    %cst_58 = arith.constant dense<0.000000e+00> : vector<64x128xf32>
    %113 = tpu.matmul %112, %111, %cst_58 {dimension_numbers = #tpu.dot_dimension_numbers<[1], [0], [0], [1], [0, 0, 1, 1], [], []>} : vector<64x128xf32>, vector<128x128xf32>, vector<64x128xf32> -> vector<64x128xf32>
    %c0_59 = arith.constant 0 : index
    %c0_60 = arith.constant 0 : index
    %114 = vector.load %arg18[%c0_59, %c0_60] : memref<64x1xf32, #tpu.memory_space<vmem>>, vector<64x1xf32>
    %115 = vector.broadcast %114 : vector<64x1xf32> to vector<64x128xf32>
    %116 = arith.addf %113, %115 : vector<64x128xf32>
    %cst_61 = arith.constant 0.000000e+00 : f32
    %117 = vector.broadcast %cst_61 : f32 to vector<64x128xf32>
    %118 = arith.maximumf %116, %117 : vector<64x128xf32>
    %c0_62 = arith.constant 0 : index
    %c0_63 = arith.constant 0 : index
    %119 = vector.load %arg19[%c0_62, %c0_63] : memref<64x1xf32, #tpu.memory_space<vmem>>, vector<64x1xf32>
    %120 = vector.broadcast %119 : vector<64x1xf32> to vector<64x128xf32>
    %121 = arith.mulf %118, %120 : vector<64x128xf32>
    %cst_64 = arith.constant dense<0.000000e+00> : vector<128xf32>
    %122 = vector.multi_reduction <add>, %121, %cst_64 [0] : vector<64x128xf32> to vector<128xf32>
    %123 = vector.shape_cast %122 : vector<128xf32> to vector<1x128xf32>
    %c0_65 = arith.constant 0 : index
    %c0_66 = arith.constant 0 : index
    %124 = vector.load %arg20[%c0_65, %c0_66] : memref<1x1xf32, #tpu.memory_space<vmem>>, vector<1x1xf32>
    %125 = vector.broadcast %124 : vector<1x1xf32> to vector<1x128xf32>
    %126 = arith.addf %123, %125 : vector<1x128xf32>
    %127 = arith.negf %126 : vector<1x128xf32>
    %128 = math.exp %127 : vector<1x128xf32>
    %cst_67 = arith.constant 1.000000e+00 : f32
    %129 = vector.broadcast %cst_67 : f32 to vector<1x128xf32>
    %130 = arith.addf %129, %128 : vector<1x128xf32>
    %131 = arith.divf %129, %130 : vector<1x128xf32>
    %c0_68 = arith.constant 0 : index
    %c0_69 = arith.constant 0 : index
    %c0_70 = arith.constant 0 : index
    %132 = vector.load %arg21[%c0_68, %c0_69, %c0_70] : memref<1x1x128xf32, #tpu.memory_space<vmem>>, vector<1x1x128xf32>
    %133 = vector.shape_cast %132 : vector<1x1x128xf32> to vector<1x128xf32>
    %134 = vector.shape_cast %131 : vector<1x128xf32> to vector<1x1x128xf32>
    tpu.vector_store %arg21[%c0_68, %c0_69, %c0_70], %134 {strides = array<i32>} : memref<1x1x128xf32, #tpu.memory_space<vmem>>, vector<1x1x128xf32>,
    return
  }
  func.func @transform_0(%arg0: i32) -> (i32, i32) {
    %c0_i32 = arith.constant 0 : i32
    %c0_i32_0 = arith.constant 0 : i32
    return %c0_i32, %arg0 : i32, i32
  }
  func.func @transform_1(%arg0: i32) -> (i32, i32, i32) {
    %c0_i32 = arith.constant 0 : i32
    %c0_i32_0 = arith.constant 0 : i32
    %c0_i32_1 = arith.constant 0 : i32
    return %c0_i32, %c0_i32_0, %arg0 : i32, i32, i32
  }
  func.func @transform_2(%arg0: i32) -> (i32, i32) {
    %c0_i32 = arith.constant 0 : i32
    %c0_i32_0 = arith.constant 0 : i32
    return %c0_i32, %arg0 : i32, i32
  }
  func.func @transform_3(%arg0: i32) -> (i32, i32) {
    %c0_i32 = arith.constant 0 : i32
    %c0_i32_0 = arith.constant 0 : i32
    %c0_i32_1 = arith.constant 0 : i32
    return %c0_i32, %c0_i32_0 : i32, i32
  }
  func.func @transform_4(%arg0: i32) -> (i32, i32) {
    %c0_i32 = arith.constant 0 : i32
    %c0_i32_0 = arith.constant 0 : i32
    %c0_i32_1 = arith.constant 0 : i32
    return %c0_i32, %c0_i32_0 : i32, i32
  }
  func.func @transform_5(%arg0: i32) -> (i32, i32) {
    %c0_i32 = arith.constant 0 : i32
    %c0_i32_0 = arith.constant 0 : i32
    %c0_i32_1 = arith.constant 0 : i32
    return %c0_i32, %c0_i32_0 : i32, i32
  }
  func.func @transform_6(%arg0: i32) -> (i32, i32) {
    %c0_i32 = arith.constant 0 : i32
    %c0_i32_0 = arith.constant 0 : i32
    %c0_i32_1 = arith.constant 0 : i32
    return %c0_i32, %c0_i32_0 : i32, i32
  }
  func.func @transform_7(%arg0: i32) -> (i32, i32) {
    %c0_i32 = arith.constant 0 : i32
    %c0_i32_0 = arith.constant 0 : i32
    %c0_i32_1 = arith.constant 0 : i32
    return %c0_i32, %c0_i32_0 : i32, i32
  }
  func.func @transform_8(%arg0: i32) -> (i32, i32) {
    %c0_i32 = arith.constant 0 : i32
    %c0_i32_0 = arith.constant 0 : i32
    %c0_i32_1 = arith.constant 0 : i32
    return %c0_i32, %c0_i32_0 : i32, i32
  }
  func.func @transform_9(%arg0: i32) -> (i32, i32) {
    %c0_i32 = arith.constant 0 : i32
    %c0_i32_0 = arith.constant 0 : i32
    %c0_i32_1 = arith.constant 0 : i32
    return %c0_i32, %c0_i32_0 : i32, i32
  }
  func.func @transform_10(%arg0: i32) -> (i32, i32) {
    %c0_i32 = arith.constant 0 : i32
    %c0_i32_0 = arith.constant 0 : i32
    %c0_i32_1 = arith.constant 0 : i32
    return %c0_i32, %c0_i32_0 : i32, i32
  }
  func.func @transform_11(%arg0: i32) -> (i32, i32) {
    %c0_i32 = arith.constant 0 : i32
    %c0_i32_0 = arith.constant 0 : i32
    %c0_i32_1 = arith.constant 0 : i32
    return %c0_i32, %c0_i32_0 : i32, i32
  }
  func.func @transform_12(%arg0: i32) -> (i32, i32) {
    %c0_i32 = arith.constant 0 : i32
    %c0_i32_0 = arith.constant 0 : i32
    %c0_i32_1 = arith.constant 0 : i32
    return %c0_i32, %c0_i32_0 : i32, i32
  }
  func.func @transform_13(%arg0: i32) -> (i32, i32) {
    %c0_i32 = arith.constant 0 : i32
    %c0_i32_0 = arith.constant 0 : i32
    %c0_i32_1 = arith.constant 0 : i32
    return %c0_i32, %c0_i32_0 : i32, i32
  }
  func.func @transform_14(%arg0: i32) -> (i32, i32) {
    %c0_i32 = arith.constant 0 : i32
    %c0_i32_0 = arith.constant 0 : i32
    %c0_i32_1 = arith.constant 0 : i32
    return %c0_i32, %c0_i32_0 : i32, i32
  }
  func.func @transform_15(%arg0: i32) -> (i32, i32) {
    %c0_i32 = arith.constant 0 : i32
    %c0_i32_0 = arith.constant 0 : i32
    %c0_i32_1 = arith.constant 0 : i32
    return %c0_i32, %c0_i32_0 : i32, i32
  }
  func.func @transform_16(%arg0: i32) -> (i32, i32) {
    %c0_i32 = arith.constant 0 : i32
    %c0_i32_0 = arith.constant 0 : i32
    %c0_i32_1 = arith.constant 0 : i32
    return %c0_i32, %c0_i32_0 : i32, i32
  }
  func.func @transform_17(%arg0: i32) -> (i32, i32) {
    %c0_i32 = arith.constant 0 : i32
    %c0_i32_0 = arith.constant 0 : i32
    %c0_i32_1 = arith.constant 0 : i32
    return %c0_i32, %c0_i32_0 : i32, i32
  }
  func.func @transform_18(%arg0: i32) -> (i32, i32) {
    %c0_i32 = arith.constant 0 : i32
    %c0_i32_0 = arith.constant 0 : i32
    %c0_i32_1 = arith.constant 0 : i32
    return %c0_i32, %c0_i32_0 : i32, i32
  }
  func.func @transform_19(%arg0: i32) -> (i32, i32) {
    %c0_i32 = arith.constant 0 : i32
    %c0_i32_0 = arith.constant 0 : i32
    %c0_i32_1 = arith.constant 0 : i32
    return %c0_i32, %c0_i32_0 : i32, i32
  }
  func.func @transform_20(%arg0: i32) -> (i32, i32, i32) {
    %c0_i32 = arith.constant 0 : i32
    %c0_i32_0 = arith.constant 0 : i32
    %c0_i32_1 = arith.constant 0 : i32
    return %arg0, %c0_i32, %c0_i32_0 : i32, i32, i32
  }
}

</mosaic_0001>

<llo_original>
// kernel: tpu_custom_call.1
$region0: #{tpu_custom_call.1}
  #allocation0 [shape = 'u32[]', space=smem, size = 0x4, offset = 0x4, fixed_abs, tag = 'smem constant byte address 0x4 - core index']
  #allocation1 [shape = 'u32[72,128]{1,0:T(1,128)}', space=vmem, size = 0x9000, scoped, tag = 'internal scratch']
  #allocation2 [shape = 'f32[1,1]{1,0:T(1,128)S(1)}', space=vmem, size = 0x200, scoped, tag = 'scoped memory for tpu_custom_call.1']
  #allocation3 [shape = 'f32[1,1]{1,0:T(1,128)S(1)}', space=vmem, size = 0x200, scoped, tag = 'scoped memory for tpu_custom_call.1']
  %s0 = inlined_call_operand.vmem [shape: f32[16,1152], index: 0, kind: input, shape index: {}]
  %s1 = inlined_call_operand.vmem [shape: f32[9,16,128], index: 1, kind: input, shape index: {}]
  %s2 = inlined_call_operand.hbm [shape: f32[128,128], index: 2, kind: input, shape index: {}]
  %s3 = inlined_call_operand.vmem [shape: f32[32,16], index: 3, kind: input, shape index: {}]
  %s4 = inlined_call_operand.vmem [shape: f32[32,1], index: 4, kind: input, shape index: {}]
  %s5 = inlined_call_operand.vmem [shape: f32[32,1], index: 5, kind: input, shape index: {}]
  %s6 = inlined_call_operand.vmem [shape: f32[32,1], index: 6, kind: input, shape index: {}]
  %s7 = inlined_call_operand.vmem [shape: f32[32,32], index: 7, kind: input, shape index: {}]
  %s8 = inlined_call_operand.vmem [shape: f32[32,1], index: 8, kind: input, shape index: {}]
  %s9 = inlined_call_operand.vmem [shape: f32[32,1], index: 9, kind: input, shape index: {}]
  %s10 = inlined_call_operand.vmem [shape: f32[32,1], index: 10, kind: input, shape index: {}]
  %s11 = inlined_call_operand.vmem [shape: f32[32,1], index: 11, kind: input, shape index: {}]
  %s12 = inlined_call_operand.<no memory space> [shape: f32[1,1], index: 12, kind: input, shape index: {}]
  %s13 = inlined_call_operand.hbm [shape: f32[128,128], index: 13, kind: input, shape index: {}]
  %s14 = inlined_call_operand.vmem [shape: f32[128,16], index: 14, kind: input, shape index: {}]
  %s15 = inlined_call_operand.vmem [shape: f32[128,1], index: 15, kind: input, shape index: {}]
  %s16 = inlined_call_operand.vmem [shape: f32[64,128], index: 16, kind: input, shape index: {}]
  %s17 = inlined_call_operand.vmem [shape: f32[64,1], index: 17, kind: input, shape index: {}]
  %s18 = inlined_call_operand.vmem [shape: f32[64,1], index: 18, kind: input, shape index: {}]
  %s19 = inlined_call_operand.<no memory space> [shape: f32[1,1], index: 19, kind: input, shape index: {}]
  %s20 = inlined_call_operand.hbm [shape: f32[1,1,128], index: 20, kind: output, shape index: {}]
  %s21 = sld [smem:[#allocation0]]
  $region98: #{tpu_custom_call.1} parent=0
    _
  %s23 = ssub.s32 1, %s21
  %s24 = scalar_select 0, %s23, %s21
  %v25 = vstv %s12
  %26 = vst [vmem:[#allocation2] sm:$0x1] %v25
  %v27 = vstv %s19
  %28 = vst [vmem:[#allocation3] sm:$0x1] %v27
  $region1: #{tpu_custom_call.1} parent=0
    #allocation4 [shape = 'u8[65536]{0}', space=vmem, size = 0x10000, scoped, tag = 'input window, operand 2, single buffered']
    #allocation5 [shape = 's32[1]{0}', space=sflag, size = 0x4, scoped, tag = 'scoped memory for tpu_custom_call.1']
    #allocation6 [shape = 's32[1]{0}', space=sflag, size = 0x4, scoped, tag = 'scoped memory for tpu_custom_call.1']
    #allocation7 [shape = 'u8[65536]{0}', space=vmem, size = 0x10000, scoped, tag = 'input window, operand 13, single buffered']
    #allocation8 [shape = 's32[1]{0}', space=sflag, size = 0x4, scoped, tag = 'scoped memory for tpu_custom_call.1']
    #allocation9 [shape = 'u8[512]{0}', space=vmem, size = 0x400, scoped, tag = 'output window, operand 0, single buffered']
    %29 = vsyncpa [#allocation5], 0
    %30 = vsyncpa [#allocation8], 0
    %31 = vsyncpa [#allocation6], 0
    // Predicated region
    $region2: #{tpu_custom_call.1} parent=1 // pred_check
      _
    $region3: #{tpu_custom_call.1} parent=1 // pred_check_branch
      %33 = sbr.rel (0) target = $region5
    $region4: #{tpu_custom_call.1} parent=1 // pred_region
      _
    $region5: #{tpu_custom_call.1} parent=1 // pred_fallthru
      _
    // Predicated region
    $region6: #{tpu_custom_call.1} parent=1 // pred_check
      _
    $region7: #{tpu_custom_call.1} parent=1 // pred_check_branch
      %35 = sbr.rel (0) target = $region9
    $region8: #{tpu_custom_call.1} parent=1 // pred_region
      _
    $region9: #{tpu_custom_call.1} parent=1 // pred_fallthru
      _
    // Predicated region
    $region10: #{tpu_custom_call.1} parent=1 // pred_check
      _
    $region11: #{tpu_custom_call.1} parent=1 // pred_check_branch
      %37 = sbr.rel (0) target = $region13
    $region12: #{tpu_custom_call.1} parent=1 // pred_region
      %39 = vsyncadd [#allocation5], 0
      %s40 = sshll.u32 %s2, 4
      %s41 = int_to_ptr.hbm [resolvable:$true] %s40
      %s42 = sshll.u32 [#allocation4], 4
      %s43 = int_to_ptr.vmem [resolvable:$true] %s42
      %48 = dma.hbm_to_vmem [thread:$0]  %s41, 2048, %s43, [#allocation5], 128, 128, 8
    $region13: #{tpu_custom_call.1} parent=1 // pred_fallthru
      _
    // Predicated region
    $region14: #{tpu_custom_call.1} parent=1 // pred_check
      _
    $region15: #{tpu_custom_call.1} parent=1 // pred_check_branch
      %50 = sbr.rel (0) target = $region17
    $region16: #{tpu_custom_call.1} parent=1 // pred_region
      _
    $region17: #{tpu_custom_call.1} parent=1 // pred_fallthru
      _
    // Predicated region
    $region18: #{tpu_custom_call.1} parent=1 // pred_check
      _
    $region19: #{tpu_custom_call.1} parent=1 // pred_check_branch
      %52 = sbr.rel (0) target = $region21
    $region20: #{tpu_custom_call.1} parent=1 // pred_region
      _
    $region21: #{tpu_custom_call.1} parent=1 // pred_fallthru
      _
    // Predicated region
    $region22: #{tpu_custom_call.1} parent=1 // pred_check
      _
    $region23: #{tpu_custom_call.1} parent=1 // pred_check_branch
      %54 = sbr.rel (0) target = $region25
    $region24: #{tpu_custom_call.1} parent=1 // pred_region
      _
    $region25: #{tpu_custom_call.1} parent=1 // pred_fallthru
      _
    // Predicated region
    $region26: #{tpu_custom_call.1} parent=1 // pred_check
      _
    $region27: #{tpu_custom_call.1} parent=1 // pred_check_branch
      %56 = sbr.rel (0) target = $region29
    $region28: #{tpu_custom_call.1} parent=1 // pred_region
      _
    $region29: #{tpu_custom_call.1} parent=1 // pred_fallthru
      _
    // Predicated region
    $region30: #{tpu_custom_call.1} parent=1 // pred_check
      _
    $region31: #{tpu_custom_call.1} parent=1 // pred_check_branch
      %58 = sbr.rel (0) target = $region33
    $region32: #{tpu_custom_call.1} parent=1 // pred_region
      _
    $region33: #{tpu_custom_call.1} parent=1 // pred_fallthru
      _
    // Predicated region
    $region34: #{tpu_custom_call.1} parent=1 // pred_check
      _
    $region35: #{tpu_custom_call.1} parent=1 // pred_check_branch
      %60 = sbr.rel (0) target = $region37
    $region36: #{tpu_custom_call.1} parent=1 // pred_region
      _
    $region37: #{tpu_custom_call.1} parent=1 // pred_fallthru
      _
    // Predicated region
    $region38: #{tpu_custom_call.1} parent=1 // pred_check
      _
    $region39: #{tpu_custom_call.1} parent=1 // pred_check_branch
      %62 = sbr.rel (0) target = $region41
    $region40: #{tpu_custom_call.1} parent=1 // pred_region
      _
    $region41: #{tpu_custom_call.1} parent=1 // pred_fallthru
      _
    // Predicated region
    $region42: #{tpu_custom_call.1} parent=1 // pred_check
      _
    $region43: #{tpu_custom_call.1} parent=1 // pred_check_branch
      %64 = sbr.rel (0) target = $region45
    $region44: #{tpu_custom_call.1} parent=1 // pred_region
      _
    $region45: #{tpu_custom_call.1} parent=1 // pred_fallthru
      _
    // Predicated region
    $region46: #{tpu_custom_call.1} parent=1 // pred_check
      _
    $region47: #{tpu_custom_call.1} parent=1 // pred_check_branch
      %66 = sbr.rel (0) target = $region49
    $region48: #{tpu_custom_call.1} parent=1 // pred_region
      _
    $region49: #{tpu_custom_call.1} parent=1 // pred_fallthru
      _
    // Predicated region
    $region50: #{tpu_custom_call.1} parent=1 // pred_check
      _
    $region51: #{tpu_custom_call.1} parent=1 // pred_check_branch
      %68 = sbr.rel (0) target = $region53
    $region52: #{tpu_custom_call.1} parent=1 // pred_region
      _
    $region53: #{tpu_custom_call.1} parent=1 // pred_fallthru
      _
    // Predicated region
    $region54: #{tpu_custom_call.1} parent=1 // pred_check
      _
    $region55: #{tpu_custom_call.1} parent=1 // pred_check_branch
      %70 = sbr.rel (0) target = $region57
    $region56: #{tpu_custom_call.1} parent=1 // pred_region
      %72 = vsyncadd [#allocation8], 0
      %s73 = sshll.u32 %s13, 4
      %s74 = int_to_ptr.hbm [resolvable:$true] %s73
      %s75 = sshll.u32 [#allocation7], 4
      %s76 = int_to_ptr.vmem [resolvable:$true] %s75
      %81 = dma.hbm_to_vmem [thread:$0]  %s74, 2048, %s76, [#allocation8], 128, 128, 8
    $region57: #{tpu_custom_call.1} parent=1 // pred_fallthru
      _
    // Predicated region
    $region58: #{tpu_custom_call.1} parent=1 // pred_check
      _
    $region59: #{tpu_custom_call.1} parent=1 // pred_check_branch
      %83 = sbr.rel (0) target = $region61
    $region60: #{tpu_custom_call.1} parent=1 // pred_region
      _
    $region61: #{tpu_custom_call.1} parent=1 // pred_fallthru
      _
    // Predicated region
    $region62: #{tpu_custom_call.1} parent=1 // pred_check
      _
    $region63: #{tpu_custom_call.1} parent=1 // pred_check_branch
      %85 = sbr.rel (0) target = $region65
    $region64: #{tpu_custom_call.1} parent=1 // pred_region
      _
    $region65: #{tpu_custom_call.1} parent=1 // pred_fallthru
      _
    // Predicated region
    $region66: #{tpu_custom_call.1} parent=1 // pred_check
      _
    $region67: #{tpu_custom_call.1} parent=1 // pred_check_branch
      %87 = sbr.rel (0) target = $region69
    $region68: #{tpu_custom_call.1} parent=1 // pred_region
      _
    $region69: #{tpu_custom_call.1} parent=1 // pred_fallthru
      _
    // Predicated region
    $region70: #{tpu_custom_call.1} parent=1 // pred_check
      _
    $region71: #{tpu_custom_call.1} parent=1 // pred_check_branch
      %89 = sbr.rel (0) target = $region73
    $region72: #{tpu_custom_call.1} parent=1 // pred_region
      _
    $region73: #{tpu_custom_call.1} parent=1 // pred_fallthru
      _
    // Predicated region
    $region74: #{tpu_custom_call.1} parent=1 // pred_check
      _
    $region75: #{tpu_custom_call.1} parent=1 // pred_check_branch
      %91 = sbr.rel (0) target = $region77
    $region76: #{tpu_custom_call.1} parent=1 // pred_region
      _
    $region77: #{tpu_custom_call.1} parent=1 // pred_fallthru
      _
    // Predicated region
    $region78: #{tpu_custom_call.1} parent=1 // pred_check
      _
    $region79: #{tpu_custom_call.1} parent=1 // pred_check_branch
      %93 = sbr.rel (0) target = $region81
    $region80: #{tpu_custom_call.1} parent=1 // pred_region
      _
    $region81: #{tpu_custom_call.1} parent=1 // pred_fallthru
      _
    // Predicated region
    $region82: #{tpu_custom_call.1} parent=1 // pred_check
      _
    $region83: #{tpu_custom_call.1} parent=1 // pred_check_branch
      %95 = sbr.rel (0) target = $region85
    $region84: #{tpu_custom_call.1} parent=1 // pred_region
      %97 = dma.done [#allocation5], 2048
    $region85: #{tpu_custom_call.1} parent=1 // pred_fallthru
      _
    // Predicated region
    $region86: #{tpu_custom_call.1} parent=1 // pred_check
      _
    $region87: #{tpu_custom_call.1} parent=1 // pred_check_branch
      %99 = sbr.rel (0) target = $region89
    $region88: #{tpu_custom_call.1} parent=1 // pred_region
      %101 = dma.done [#allocation8], 2048
    $region89: #{tpu_custom_call.1} parent=1 // pred_fallthru
      _
    %v102 = vld [vmem:[%s0 + $0x8] sm:$0xff]
    %v103 = vld [vmem:[%s0 + $0x10] sm:$0xff]
    %v104 = vld [vmem:[%s0 + $0x18] sm:$0xff]
    %v105 = vld [vmem:[%s0 + $0x20] sm:$0xff]
    %v106 = vld [vmem:[%s0 + $0x28] sm:$0xff]
    %v107 = vld [vmem:[%s0 + $0x30] sm:$0xff]
    %v108 = vld [vmem:[%s0 + $0x38] sm:$0xff]
    %v109 = vld [vmem:[%s0 + $0x40] sm:$0xff]
    %v110 = vld [vmem:[%s0 + $0x50] sm:$0xff]
    %v111 = vld [vmem:[%s0 + $0x58] sm:$0xff]
    %v112 = vld [vmem:[%s0 + $0x60] sm:$0xff]
    %v113 = vld [vmem:[%s0 + $0x68] sm:$0xff]
    %v114 = vld [vmem:[%s0 + $0x70] sm:$0xff]
    %v115 = vld [vmem:[%s0 + $0x78] sm:$0xff]
    %v116 = vld [vmem:[%s0 + $0x80] sm:$0xff]
    %v117 = vld [vmem:[%s0 + $0x88] sm:$0xff]
    %v118 = vld [vmem:[%s3] sm:$0xff]
    %v119 = vld [vmem:[%s3 + $0x8] sm:$0xff]
    %v120 = vld [vmem:[%s3 + $0x10] sm:$0xff]
    %v121 = vld [vmem:[%s3 + $0x18] sm:$0xff]
    %v122 = vld [vmem:[%s4] sm:$0xff]
    %v123 = vld [vmem:[%s4 + $0x8] sm:$0xff]
    %v124 = vld [vmem:[%s4 + $0x10] sm:$0xff]
    %v125 = vld [vmem:[%s4 + $0x18] sm:$0xff]
    %127 = vset.pattern.permute.xlu0 0
    %128 = vperm.xlu0 %127, %v122
    %v129 = vpop.permute.xlu0 %128
    %132 = vset.pattern.permute.xlu0 0
    %133 = vperm.xlu0 %132, %v123
    %v134 = vpop.permute.xlu0 %133
    %137 = vset.pattern.permute.xlu0 0
    %138 = vperm.xlu0 %137, %v124
    %v139 = vpop.permute.xlu0 %138
    %142 = vset.pattern.permute.xlu0 0
    %143 = vperm.xlu0 %142, %v125
    %v144 = vpop.permute.xlu0 %143
    %vm146 = vcmask 130048
    %v148 = vsel %vm146, %v118, 0
    %v151 = vsel %vm146, %v119, 0
    %v154 = vsel %vm146, %v120, 0
    %v157 = vsel %vm146, %v121, 0
    %159 = vmatpush.msra.mxu0 0.0
    %160 = vmatpush.msra.mxu0 0.0
    %161 = vmatpush.msra.mxu0 0.0
    %162 = vmatpush.msra.mxu0 0.0
    %163 = vmatpush.msra.mxu0 0.0
    %164 = vmatpush.msra.mxu0 0.0
    %165 = vmatpush.msra.mxu0 0.0
    %166 = vmatpush.msra.mxu0 0.0
    %167 = vmatpush.msra.mxu0 0.0
    %168 = vmatpush.msra.mxu0 0.0
    %169 = vmatpush.msra.mxu0 0.0
    %170 = vmatpush.msra.mxu0 0.0
    %171 = vmatpush.msra.mxu0 0.0
    %172 = vmatpush.msra.mxu0 0.0
    %173 = vmatpush.msra.mxu0 %v110
    %174 = vmatpush.msra.mxu0 %v102
    %175 = vmatmul.f32.gmra.mxu0 %v148
    %v176 = vpop.f32.mrf.mxu0
    %v177 = vadd.f32 %v129, %v176
    %178 = vmatmul.f32.gmra.mxu0 %v151
    %v179 = vpop.f32.mrf.mxu0
    %v180 = vadd.f32 %v134, %v179
    %181 = vmatmul.f32.gmra.mxu0 %v154
    %v182 = vpop.f32.mrf.mxu0
    %v183 = vadd.f32 %v139, %v182
    %184 = vmatmul.f32.gmra.mxu0 %v157
    %v185 = vpop.f32.mrf.mxu0
    %v186 = vadd.f32 %v144, %v185
    %187 = vdwg.mxu0
    %188 = vmatpush.msra.mxu0 0.0
    %189 = vmatpush.msra.mxu0 0.0
    %190 = vmatpush.msra.mxu0 0.0
    %191 = vmatpush.msra.mxu0 0.0
    %192 = vmatpush.msra.mxu0 0.0
    %193 = vmatpush.msra.mxu0 0.0
    %194 = vmatpush.msra.mxu0 0.0
    %195 = vmatpush.msra.mxu0 0.0
    %196 = vmatpush.msra.mxu0 0.0
    %197 = vmatpush.msra.mxu0 0.0
    %198 = vmatpush.msra.mxu0 0.0
    %199 = vmatpush.msra.mxu0 0.0
    %200 = vmatpush.msra.mxu0 0.0
    %201 = vmatpush.msra.mxu0 0.0
    %202 = vmatpush.msra.mxu0 %v111
    %203 = vmatpush.msra.mxu0 %v103
    %204 = vmatmul.f32.gmra.mxu0 %v148
    %v205 = vpop.f32.mrf.mxu0
    %v206 = vadd.f32 %v129, %v205
    %207 = vmatmul.f32.gmra.mxu0 %v151
    %v208 = vpop.f32.mrf.mxu0
    %v209 = vadd.f32 %v134, %v208
    %210 = vmatmul.f32.gmra.mxu0 %v154
    %v211 = vpop.f32.mrf.mxu0
    %v212 = vadd.f32 %v139, %v211
    %213 = vmatmul.f32.gmra.mxu0 %v157
    %v214 = vpop.f32.mrf.mxu0
    %v215 = vadd.f32 %v144, %v214
    %216 = vdwg.mxu0
    %217 = vmatpush.msra.mxu0 0.0
    %218 = vmatpush.msra.mxu0 0.0
    %219 = vmatpush.msra.mxu0 0.0
    %220 = vmatpush.msra.mxu0 0.0
    %221 = vmatpush.msra.mxu0 0.0
    %222 = vmatpush.msra.mxu0 0.0
    %223 = vmatpush.msra.mxu0 0.0
    %224 = vmatpush.msra.mxu0 0.0
    %225 = vmatpush.msra.mxu0 0.0
    %226 = vmatpush.msra.mxu0 0.0
    %227 = vmatpush.msra.mxu0 0.0
    %228 = vmatpush.msra.mxu0 0.0
    %229 = vmatpush.msra.mxu0 0.0
    %230 = vmatpush.msra.mxu0 0.0
    %231 = vmatpush.msra.mxu0 %v112
    %232 = vmatpush.msra.mxu0 %v104
    %233 = vmatmul.f32.gmra.mxu0 %v148
    %v234 = vpop.f32.mrf.mxu0
    %v235 = vadd.f32 %v129, %v234
    %236 = vmatmul.f32.gmra.mxu0 %v151
    %v237 = vpop.f32.mrf.mxu0
    %v238 = vadd.f32 %v134, %v237
    %239 = vmatmul.f32.gmra.mxu0 %v154
    %v240 = vpop.f32.mrf.mxu0
    %v241 = vadd.f32 %v139, %v240
    %242 = vmatmul.f32.gmra.mxu0 %v157
    %v243 = vpop.f32.mrf.mxu0
    %v244 = vadd.f32 %v144, %v243
    %245 = vdwg.mxu0
    %246 = vmatpush.msra.mxu0 0.0
    %247 = vmatpush.msra.mxu0 0.0
    %248 = vmatpush.msra.mxu0 0.0
    %249 = vmatpush.msra.mxu0 0.0
    %250 = vmatpush.msra.mxu0 0.0
    %251 = vmatpush.msra.mxu0 0.0
    %252 = vmatpush.msra.mxu0 0.0
    %253 = vmatpush.msra.mxu0 0.0
    %254 = vmatpush.msra.mxu0 0.0
    %255 = vmatpush.msra.mxu0 0.0
    %256 = vmatpush.msra.mxu0 0.0
    %257 = vmatpush.msra.mxu0 0.0
    %258 = vmatpush.msra.mxu0 0.0
    %259 = vmatpush.msra.mxu0 0.0
    %260 = vmatpush.msra.mxu0 %v113
    %261 = vmatpush.msra.mxu0 %v105
    %262 = vmatmul.f32.gmra.mxu0 %v148
    %v263 = vpop.f32.mrf.mxu0
    %v264 = vadd.f32 %v129, %v263
    %265 = vmatmul.f32.gmra.mxu0 %v151
    %v266 = vpop.f32.mrf.mxu0
    %v267 = vadd.f32 %v134, %v266
    %268 = vmatmul.f32.gmra.mxu0 %v154
    %v269 = vpop.f32.mrf.mxu0
    %v270 = vadd.f32 %v139, %v269
    %271 = vmatmul.f32.gmra.mxu0 %v157
    %v272 = vpop.f32.mrf.mxu0
    %v273 = vadd.f32 %v144, %v272
    %274 = vdwg.mxu0
    %275 = vmatpush.msra.mxu0 0.0
    %276 = vmatpush.msra.mxu0 0.0
    %277 = vmatpush.msra.mxu0 0.0
    %278 = vmatpush.msra.mxu0 0.0
    %279 = vmatpush.msra.mxu0 0.0
    %280 = vmatpush.msra.mxu0 0.0
    %281 = vmatpush.msra.mxu0 0.0
    %282 = vmatpush.msra.mxu0 0.0
    %283 = vmatpush.msra.mxu0 0.0
    %284 = vmatpush.msra.mxu0 0.0
    %285 = vmatpush.msra.mxu0 0.0
    %286 = vmatpush.msra.mxu0 0.0
    %287 = vmatpush.msra.mxu0 0.0
    %288 = vmatpush.msra.mxu0 0.0
    %289 = vmatpush.msra.mxu0 %v114
    %290 = vmatpush.msra.mxu0 %v106
    %291 = vmatmul.f32.gmra.mxu0 %v148
    %v292 = vpop.f32.mrf.mxu0
    %v293 = vadd.f32 %v129, %v292
    %294 = vmatmul.f32.gmra.mxu0 %v151
    %v295 = vpop.f32.mrf.mxu0
    %v296 = vadd.f32 %v134, %v295
    %297 = vmatmul.f32.gmra.mxu0 %v154
    %v298 = vpop.f32.mrf.mxu0
    %v299 = vadd.f32 %v139, %v298
    %300 = vmatmul.f32.gmra.mxu0 %v157
    %v301 = vpop.f32.mrf.mxu0
    %v302 = vadd.f32 %v144, %v301
    %303 = vdwg.mxu0
    %304 = vmatpush.msra.mxu0 0.0
    %305 = vmatpush.msra.mxu0 0.0
    %306 = vmatpush.msra.mxu0 0.0
    %307 = vmatpush.msra.mxu0 0.0
    %308 = vmatpush.msra.mxu0 0.0
    %309 = vmatpush.msra.mxu0 0.0
    %310 = vmatpush.msra.mxu0 0.0
    %311 = vmatpush.msra.mxu0 0.0
    %312 = vmatpush.msra.mxu0 0.0
    %313 = vmatpush.msra.mxu0 0.0
    %314 = vmatpush.msra.mxu0 0.0
    %315 = vmatpush.msra.mxu0 0.0
    %316 = vmatpush.msra.mxu0 0.0
    %317 = vmatpush.msra.mxu0 0.0
    %318 = vmatpush.msra.mxu0 %v115
    %319 = vmatpush.msra.mxu0 %v107
    %320 = vmatmul.f32.gmra.mxu0 %v148
    %v321 = vpop.f32.mrf.mxu0
    %v322 = vadd.f32 %v129, %v321
    %323 = vmatmul.f32.gmra.mxu0 %v151
    %v324 = vpop.f32.mrf.mxu0
    %v325 = vadd.f32 %v134, %v324
    %326 = vmatmul.f32.gmra.mxu0 %v154
    %v327 = vpop.f32.mrf.mxu0
    %v328 = vadd.f32 %v139, %v327
    %329 = vmatmul.f32.gmra.mxu0 %v157
    %v330 = vpop.f32.mrf.mxu0
    %v331 = vadd.f32 %v144, %v330
    %332 = vdwg.mxu0
    %333 = vmatpush.msra.mxu0 0.0
    %334 = vmatpush.msra.mxu0 0.0
    %335 = vmatpush.msra.mxu0 0.0
    %336 = vmatpush.msra.mxu0 0.0
    %337 = vmatpush.msra.mxu0 0.0
    %338 = vmatpush.msra.mxu0 0.0
    %339 = vmatpush.msra.mxu0 0.0
    %340 = vmatpush.msra.mxu0 0.0
    %341 = vmatpush.msra.mxu0 0.0
    %342 = vmatpush.msra.mxu0 0.0
    %343 = vmatpush.msra.mxu0 0.0
    %344 = vmatpush.msra.mxu0 0.0
    %345 = vmatpush.msra.mxu0 0.0
    %346 = vmatpush.msra.mxu0 0.0
    %347 = vmatpush.msra.mxu0 %v116
    %348 = vmatpush.msra.mxu0 %v108
    %349 = vmatmul.f32.gmra.mxu0 %v148
    %v350 = vpop.f32.mrf.mxu0
    %v351 = vadd.f32 %v129, %v350
    %352 = vmatmul.f32.gmra.mxu0 %v151
    %v353 = vpop.f32.mrf.mxu0
    %v354 = vadd.f32 %v134, %v353
    %355 = vmatmul.f32.gmra.mxu0 %v154
    %v356 = vpop.f32.mrf.mxu0
    %v357 = vadd.f32 %v139, %v356
    %358 = vmatmul.f32.gmra.mxu0 %v157
    %v359 = vpop.f32.mrf.mxu0
    %v360 = vadd.f32 %v144, %v359
    %361 = vdwg.mxu0
    %362 = vmatpush.msra.mxu0 0.0
    %363 = vmatpush.msra.mxu0 0.0
    %364 = vmatpush.msra.mxu0 0.0
    %365 = vmatpush.msra.mxu0 0.0
    %366 = vmatpush.msra.mxu0 0.0
    %367 = vmatpush.msra.mxu0 0.0
    %368 = vmatpush.msra.mxu0 0.0
    %369 = vmatpush.msra.mxu0 0.0
    %370 = vmatpush.msra.mxu0 0.0
    %371 = vmatpush.msra.mxu0 0.0
    %372 = vmatpush.msra.mxu0 0.0
    %373 = vmatpush.msra.mxu0 0.0
    %374 = vmatpush.msra.mxu0 0.0
    %375 = vmatpush.msra.mxu0 0.0
    %376 = vmatpush.msra.mxu0 %v117
    %377 = vmatpush.msra.mxu0 %v109
    %378 = vmatmul.f32.gmra.mxu0 %v148
    %v379 = vpop.f32.mrf.mxu0
    %v380 = vadd.f32 %v129, %v379
    %381 = vmatmul.f32.gmra.mxu0 %v151
    %v382 = vpop.f32.mrf.mxu0
    %v383 = vadd.f32 %v134, %v382
    %384 = vmatmul.f32.gmra.mxu0 %v154
    %v385 = vpop.f32.mrf.mxu0
    %v386 = vadd.f32 %v139, %v385
    %387 = vmatmul.f32.gmra.mxu0 %v157
    %v388 = vpop.f32.mrf.mxu0
    %v389 = vadd.f32 %v144, %v388
    %390 = vdwg.mxu0
    %v391 = vmul.f32 %v177, 0.999995
    %v392 = vmul.f32 %v206, 0.999995
    %v393 = vmul.f32 %v235, 0.999995
    %v394 = vmul.f32 %v264, 0.999995
    %v395 = vmul.f32 %v293, 0.999995
    %v396 = vmul.f32 %v322, 0.999995
    %v397 = vmul.f32 %v351, 0.999995
    %v398 = vmul.f32 %v380, 0.999995
    %v399 = vmul.f32 %v180, 0.999995
    %v400 = vmul.f32 %v209, 0.999995
    %v401 = vmul.f32 %v238, 0.999995
    %v402 = vmul.f32 %v267, 0.999995
    %v403 = vmul.f32 %v296, 0.999995
    %v404 = vmul.f32 %v325, 0.999995
    %v405 = vmul.f32 %v354, 0.999995
    %v406 = vmul.f32 %v383, 0.999995
    %v407 = vmul.f32 %v183, 0.999995
    %v408 = vmul.f32 %v212, 0.999995
    %v409 = vmul.f32 %v241, 0.999995
    %v410 = vmul.f32 %v270, 0.999995
    %v411 = vmul.f32 %v299, 0.999995
    %v412 = vmul.f32 %v328, 0.999995
    %v413 = vmul.f32 %v357, 0.999995
    %v414 = vmul.f32 %v386, 0.999995
    %v415 = vmul.f32 %v186, 0.999995
    %v416 = vmul.f32 %v215, 0.999995
    %v417 = vmul.f32 %v244, 0.999995
    %v418 = vmul.f32 %v273, 0.999995
    %v419 = vmul.f32 %v302, 0.999995
    %v420 = vmul.f32 %v331, 0.999995
    %v421 = vmul.f32 %v360, 0.999995
    %v422 = vmul.f32 %v389, 0.999995
    %v423 = vxor.u32 %v391, 2147483648
    %v424 = vxor.u32 %v392, 2147483648
    %v425 = vxor.u32 %v393, 2147483648
    %v426 = vxor.u32 %v394, 2147483648
    %v427 = vxor.u32 %v395, 2147483648
    %v428 = vxor.u32 %v396, 2147483648
    %v429 = vxor.u32 %v397, 2147483648
    %v430 = vxor.u32 %v398, 2147483648
    %v431 = vxor.u32 %v399, 2147483648
    %v432 = vxor.u32 %v400, 2147483648
    %v433 = vxor.u32 %v401, 2147483648
    %v434 = vxor.u32 %v402, 2147483648
    %v435 = vxor.u32 %v403, 2147483648
    %v436 = vxor.u32 %v404, 2147483648
    %v437 = vxor.u32 %v405, 2147483648
    %v438 = vxor.u32 %v406, 2147483648
    %v439 = vxor.u32 %v407, 2147483648
    %v440 = vxor.u32 %v408, 2147483648
    %v441 = vxor.u32 %v409, 2147483648
    %v442 = vxor.u32 %v410, 2147483648
    %v443 = vxor.u32 %v411, 2147483648
    %v444 = vxor.u32 %v412, 2147483648
    %v445 = vxor.u32 %v413, 2147483648
    %v446 = vxor.u32 %v414, 2147483648
    %v447 = vxor.u32 %v415, 2147483648
    %v448 = vxor.u32 %v416, 2147483648
    %v449 = vxor.u32 %v417, 2147483648
    %v450 = vxor.u32 %v418, 2147483648
    %v451 = vxor.u32 %v419, 2147483648
    %v452 = vxor.u32 %v420, 2147483648
    %v453 = vxor.u32 %v421, 2147483648
    %v454 = vxor.u32 %v422, 2147483648
    %v455 = vmul.f32 %v423, 1.442695
    %v456 = vpow.pop %v455
    %v457 = vmul.f32 %v424, 1.442695
    %v458 = vpow.pop %v457
    %v459 = vmul.f32 %v425, 1.442695
    %v460 = vpow.pop %v459
    %v461 = vmul.f32 %v426, 1.442695
    %v462 = vpow.pop %v461
    %v463 = vmul.f32 %v427, 1.442695
    %v464 = vpow.pop %v463
    %v465 = vmul.f32 %v428, 1.442695
    %v466 = vpow.pop %v465
    %v467 = vmul.f32 %v429, 1.442695
    %v468 = vpow.pop %v467
    %v469 = vmul.f32 %v430, 1.442695
    %v470 = vpow.pop %v469
    %v471 = vmul.f32 %v431, 1.442695
    %v472 = vpow.pop %v471
    %v473 = vmul.f32 %v432, 1.442695
    %v474 = vpow.pop %v473
    %v475 = vmul.f32 %v433, 1.442695
    %v476 = vpow.pop %v475
    %v477 = vmul.f32 %v434, 1.442695
    %v478 = vpow.pop %v477
    %v479 = vmul.f32 %v435, 1.442695
    %v480 = vpow.pop %v479
    %v481 = vmul.f32 %v436, 1.442695
    %v482 = vpow.pop %v481
    %v483 = vmul.f32 %v437, 1.442695
    %v484 = vpow.pop %v483
    %v485 = vmul.f32 %v438, 1.442695
    %v486 = vpow.pop %v485
    %v487 = vmul.f32 %v439, 1.442695
    %v488 = vpow.pop %v487
    %v489 = vmul.f32 %v440, 1.442695
    %v490 = vpow.pop %v489
    %v491 = vmul.f32 %v441, 1.442695
    %v492 = vpow.pop %v491
    %v493 = vmul.f32 %v442, 1.442695
    %v494 = vpow.pop %v493
    %v495 = vmul.f32 %v443, 1.442695
    %v496 = vpow.pop %v495
    %v497 = vmul.f32 %v444, 1.442695
    %v498 = vpow.pop %v497
    %v499 = vmul.f32 %v445, 1.442695
    %v500 = vpow.pop %v499
    %v501 = vmul.f32 %v446, 1.442695
    %v502 = vpow.pop %v501
    %v503 = vmul.f32 %v447, 1.442695
    %v504 = vpow.pop %v503
    %v505 = vmul.f32 %v448, 1.442695
    %v506 = vpow.pop %v505
    %v507 = vmul.f32 %v449, 1.442695
    %v508 = vpow.pop %v507
    %v509 = vmul.f32 %v450, 1.442695
    %v510 = vpow.pop %v509
    %v511 = vmul.f32 %v451, 1.442695
    %v512 = vpow.pop %v511
    %v513 = vmul.f32 %v452, 1.442695
    %v514 = vpow.pop %v513
    %v515 = vmul.f32 %v453, 1.442695
    %v516 = vpow.pop %v515
    %v517 = vmul.f32 %v454, 1.442695
    %v518 = vpow.pop %v517
    %v519 = vadd.f32 %v456, 1.0
    %v520 = vadd.f32 %v458, 1.0
    %v521 = vadd.f32 %v460, 1.0
    %v522 = vadd.f32 %v462, 1.0
    %v523 = vadd.f32 %v464, 1.0
    %v524 = vadd.f32 %v466, 1.0
    %v525 = vadd.f32 %v468, 1.0
    %v526 = vadd.f32 %v470, 1.0
    %v527 = vadd.f32 %v472, 1.0
    %v528 = vadd.f32 %v474, 1.0
    %v529 = vadd.f32 %v476, 1.0
    %v530 = vadd.f32 %v478, 1.0
    %v531 = vadd.f32 %v480, 1.0
    %v532 = vadd.f32 %v482, 1.0
    %v533 = vadd.f32 %v484, 1.0
    %v534 = vadd.f32 %v486, 1.0
    %v535 = vadd.f32 %v488, 1.0
    %v536 = vadd.f32 %v490, 1.0
    %v537 = vadd.f32 %v492, 1.0
    %v538 = vadd.f32 %v494, 1.0
    %v539 = vadd.f32 %v496, 1.0
    %v540 = vadd.f32 %v498, 1.0
    %v541 = vadd.f32 %v500, 1.0
    %v542 = vadd.f32 %v502, 1.0
    %v543 = vadd.f32 %v504, 1.0
    %v544 = vadd.f32 %v506, 1.0
    %v545 = vadd.f32 %v508, 1.0
    %v546 = vadd.f32 %v510, 1.0
    %v547 = vadd.f32 %v512, 1.0
    %v548 = vadd.f32 %v514, 1.0
    %v549 = vadd.f32 %v516, 1.0
    %v550 = vadd.f32 %v518, 1.0
    %v551 = vrcp.pop %v519
    %v552 = vmul.f32 %v519, %v551
    %v553 = vsub.f32 1.0, %v552
    %v554 = vmul.f32 %v551, %v553
    %v555 = vadd.f32 %v551, %v554
    %vm556 = vweird.f32 %v519
    %vm557 = vweird.f32 %v551
    %vm558 = vmor %vm556, %vm557
    %v559 = vsel %vm558, %v551, %v555
    %v560 = vand.u32 2147483647, %v519
    %vm561 = vcmp.eq.f32.partialorder %v560, 8.507059e+37
    %v562 = vand.u32 %v519, 2147483648
    %v563 = vor.u32 1.1754944e-38, %v562
    %v564 = vsel %vm561, %v563, %v559
    %v565 = vmul.f32 1.0, %v564
    %v566 = vrcp.pop %v520
    %v567 = vmul.f32 %v520, %v566
    %v568 = vsub.f32 1.0, %v567
    %v569 = vmul.f32 %v566, %v568
    %v570 = vadd.f32 %v566, %v569
    %vm571 = vweird.f32 %v520
    %vm572 = vweird.f32 %v566
    %vm573 = vmor %vm571, %vm572
    %v574 = vsel %vm573, %v566, %v570
    %v575 = vand.u32 2147483647, %v520
    %vm576 = vcmp.eq.f32.partialorder %v575, 8.507059e+37
    %v577 = vand.u32 %v520, 2147483648
    %v578 = vor.u32 1.1754944e-38, %v577
    %v579 = vsel %vm576, %v578, %v574
    %v580 = vmul.f32 1.0, %v579
    %v581 = vrcp.pop %v521
    %v582 = vmul.f32 %v521, %v581
    %v583 = vsub.f32 1.0, %v582
    %v584 = vmul.f32 %v581, %v583
    %v585 = vadd.f32 %v581, %v584
    %vm586 = vweird.f32 %v521
    %vm587 = vweird.f32 %v581
    %vm588 = vmor %vm586, %vm587
    %v589 = vsel %vm588, %v581, %v585
    %v590 = vand.u32 2147483647, %v521
    %vm591 = vcmp.eq.f32.partialorder %v590, 8.507059e+37
    %v592 = vand.u32 %v521, 2147483648
    %v593 = vor.u32 1.1754944e-38, %v592
    %v594 = vsel %vm591, %v593, %v589
    %v595 = vmul.f32 1.0, %v594
    %v596 = vrcp.pop %v522
    %v597 = vmul.f32 %v522, %v596
    %v598 = vsub.f32 1.0, %v597
    %v599 = vmul.f32 %v596, %v598
    %v600 = vadd.f32 %v596, %v599
    %vm601 = vweird.f32 %v522
    %vm602 = vweird.f32 %v596
    %vm603 = vmor %vm601, %vm602
    %v604 = vsel %vm603, %v596, %v600
    %v605 = vand.u32 2147483647, %v522
    %vm606 = vcmp.eq.f32.partialorder %v605, 8.507059e+37
    %v607 = vand.u32 %v522, 2147483648
    %v608 = vor.u32 1.1754944e-38, %v607
    %v609 = vsel %vm606, %v608, %v604
    %v610 = vmul.f32 1.0, %v609
    %v611 = vrcp.pop %v523
    %v612 = vmul.f32 %v523, %v611
    %v613 = vsub.f32 1.0, %v612
    %v614 = vmul.f32 %v611, %v613
    %v615 = vadd.f32 %v611, %v614
    %vm616 = vweird.f32 %v523
    %vm617 = vweird.f32 %v611
    %vm618 = vmor %vm616, %vm617
    %v619 = vsel %vm618, %v611, %v615
    %v620 = vand.u32 2147483647, %v523
    %vm621 = vcmp.eq.f32.partialorder %v620, 8.507059e+37
    %v622 = vand.u32 %v523, 2147483648
    %v623 = vor.u32 1.1754944e-38, %v622
    %v624 = vsel %vm621, %v623, %v619
    %v625 = vmul.f32 1.0, %v624
    %v626 = vrcp.pop %v524
    %v627 = vmul.f32 %v524, %v626
    %v628 = vsub.f32 1.0, %v627
    %v629 = vmul.f32 %v626, %v628
    %v630 = vadd.f32 %v626, %v629
    %vm631 = vweird.f32 %v524
    %vm632 = vweird.f32 %v626
    %vm633 = vmor %vm631, %vm632
    %v634 = vsel %vm633, %v626, %v630
    %v635 = vand.u32 2147483647, %v524
    %vm636 = vcmp.eq.f32.partialorder %v635, 8.507059e+37
    %v637 = vand.u32 %v524, 2147483648
    %v638 = vor.u32 1.1754944e-38, %v637
    %v639 = vsel %vm636, %v638, %v634
    %v640 = vmul.f32 1.0, %v639
    %v641 = vrcp.pop %v525
    %v642 = vmul.f32 %v525, %v641
    %v643 = vsub.f32 1.0, %v642
    %v644 = vmul.f32 %v641, %v643
    %v645 = vadd.f32 %v641, %v644
    %vm646 = vweird.f32 %v525
    %vm647 = vweird.f32 %v641
    %vm648 = vmor %vm646, %vm647
    %v649 = vsel %vm648, %v641, %v645
    %v650 = vand.u32 2147483647, %v525
    %vm651 = vcmp.eq.f32.partialorder %v650, 8.507059e+37
    %v652 = vand.u32 %v525, 2147483648
    %v653 = vor.u32 1.1754944e-38, %v652
    %v654 = vsel %vm651, %v653, %v649
    %v655 = vmul.f32 1.0, %v654
    %v656 = vrcp.pop %v526
    %v657 = vmul.f32 %v526, %v656
    %v658 = vsub.f32 1.0, %v657
    %v659 = vmul.f32 %v656, %v658
    %v660 = vadd.f32 %v656, %v659
    %vm661 = vweird.f32 %v526
    %vm662 = vweird.f32 %v656
    %vm663 = vmor %vm661, %vm662
    %v664 = vsel %vm663, %v656, %v660
    %v665 = vand.u32 2147483647, %v526
    %vm666 = vcmp.eq.f32.partialorder %v665, 8.507059e+37
    %v667 = vand.u32 %v526, 2147483648
    %v668 = vor.u32 1.1754944e-38, %v667
    %v669 = vsel %vm666, %v668, %v664
    %v670 = vmul.f32 1.0, %v669
    %v671 = vrcp.pop %v527
    %v672 = vmul.f32 %v527, %v671
    %v673 = vsub.f32 1.0, %v672
    %v674 = vmul.f32 %v671, %v673
    %v675 = vadd.f32 %v671, %v674
    %vm676 = vweird.f32 %v527
    %vm677 = vweird.f32 %v671
    %vm678 = vmor %vm676, %vm677
    %v679 = vsel %vm678, %v671, %v675
    %v680 = vand.u32 2147483647, %v527
    %vm681 = vcmp.eq.f32.partialorder %v680, 8.507059e+37
    %v682 = vand.u32 %v527, 2147483648
    %v683 = vor.u32 1.1754944e-38, %v682
    %v684 = vsel %vm681, %v683, %v679
    %v685 = vmul.f32 1.0, %v684
    %v686 = vrcp.pop %v528
    %v687 = vmul.f32 %v528, %v686
    %v688 = vsub.f32 1.0, %v687
    %v689 = vmul.f32 %v686, %v688
    %v690 = vadd.f32 %v686, %v689
    %vm691 = vweird.f32 %v528
    %vm692 = vweird.f32 %v686
    %vm693 = vmor %vm691, %vm692
    %v694 = vsel %vm693, %v686, %v690
    %v695 = vand.u32 2147483647, %v528
    %vm696 = vcmp.eq.f32.partialorder %v695, 8.507059e+37
    %v697 = vand.u32 %v528, 2147483648
    %v698 = vor.u32 1.1754944e-38, %v697
    %v699 = vsel %vm696, %v698, %v694
    %v700 = vmul.f32 1.0, %v699
    %v701 = vrcp.pop %v529
    %v702 = vmul.f32 %v529, %v701
    %v703 = vsub.f32 1.0, %v702
    %v704 = vmul.f32 %v701, %v703
    %v705 = vadd.f32 %v701, %v704
    %vm706 = vweird.f32 %v529
    %vm707 = vweird.f32 %v701
    %vm708 = vmor %vm706, %vm707
    %v709 = vsel %vm708, %v701, %v705
    %v710 = vand.u32 2147483647, %v529
    %vm711 = vcmp.eq.f32.partialorder %v710, 8.507059e+37
    %v712 = vand.u32 %v529, 2147483648
    %v713 = vor.u32 1.1754944e-38, %v712
    %v714 = vsel %vm711, %v713, %v709
    %v715 = vmul.f32 1.0, %v714
    %v716 = vrcp.pop %v530
    %v717 = vmul.f32 %v530, %v716
    %v718 = vsub.f32 1.0, %v717
    %v719 = vmul.f32 %v716, %v718
    %v720 = vadd.f32 %v716, %v719
    %vm721 = vweird.f32 %v530
    %vm722 = vweird.f32 %v716
    %vm723 = vmor %vm721, %vm722
    %v724 = vsel %vm723, %v716, %v720
    %v725 = vand.u32 2147483647, %v530
    %vm726 = vcmp.eq.f32.partialorder %v725, 8.507059e+37
    %v727 = vand.u32 %v530, 2147483648
    %v728 = vor.u32 1.1754944e-38, %v727
    %v729 = vsel %vm726, %v728, %v724
    %v730 = vmul.f32 1.0, %v729
    %v731 = vrcp.pop %v531
    %v732 = vmul.f32 %v531, %v731
    %v733 = vsub.f32 1.0, %v732
    %v734 = vmul.f32 %v731, %v733
    %v735 = vadd.f32 %v731, %v734
    %vm736 = vweird.f32 %v531
    %vm737 = vweird.f32 %v731
    %vm738 = vmor %vm736, %vm737
    %v739 = vsel %vm738, %v731, %v735
    %v740 = vand.u32 2147483647, %v531
    %vm741 = vcmp.eq.f32.partialorder %v740, 8.507059e+37
    %v742 = vand.u32 %v531, 2147483648
    %v743 = vor.u32 1.1754944e-38, %v742
    %v744 = vsel %vm741, %v743, %v739
    %v745 = vmul.f32 1.0, %v744
    %v746 = vrcp.pop %v532
    %v747 = vmul.f32 %v532, %v746
    %v748 = vsub.f32 1.0, %v747
    %v749 = vmul.f32 %v746, %v748
    %v750 = vadd.f32 %v746, %v749
    %vm751 = vweird.f32 %v532
    %vm752 = vweird.f32 %v746
    %vm753 = vmor %vm751, %vm752
    %v754 = vsel %vm753, %v746, %v750
    %v755 = vand.u32 2147483647, %v532
    %vm756 = vcmp.eq.f32.partialorder %v755, 8.507059e+37
    %v757 = vand.u32 %v532, 2147483648
    %v758 = vor.u32 1.1754944e-38, %v757
    %v759 = vsel %vm756, %v758, %v754
    %v760 = vmul.f32 1.0, %v759
    %v761 = vrcp.pop %v533
    %v762 = vmul.f32 %v533, %v761
    %v763 = vsub.f32 1.0, %v762
    %v764 = vmul.f32 %v761, %v763
    %v765 = vadd.f32 %v761, %v764
    %vm766 = vweird.f32 %v533
    %vm767 = vweird.f32 %v761
    %vm768 = vmor %vm766, %vm767
    %v769 = vsel %vm768, %v761, %v765
    %v770 = vand.u32 2147483647, %v533
    %vm771 = vcmp.eq.f32.partialorder %v770, 8.507059e+37
    %v772 = vand.u32 %v533, 2147483648
    %v773 = vor.u32 1.1754944e-38, %v772
    %v774 = vsel %vm771, %v773, %v769
    %v775 = vmul.f32 1.0, %v774
    %v776 = vrcp.pop %v534
    %v777 = vmul.f32 %v534, %v776
    %v778 = vsub.f32 1.0, %v777
    %v779 = vmul.f32 %v776, %v778
    %v780 = vadd.f32 %v776, %v779
    %vm781 = vweird.f32 %v534
    %vm782 = vweird.f32 %v776
    %vm783 = vmor %vm781, %vm782
    %v784 = vsel %vm783, %v776, %v780
    %v785 = vand.u32 2147483647, %v534
    %vm786 = vcmp.eq.f32.partialorder %v785, 8.507059e+37
    %v787 = vand.u32 %v534, 2147483648
    %v788 = vor.u32 1.1754944e-38, %v787
    %v789 = vsel %vm786, %v788, %v784
    %v790 = vmul.f32 1.0, %v789
    %v791 = vrcp.pop %v535
    %v792 = vmul.f32 %v535, %v791
    %v793 = vsub.f32 1.0, %v792
    %v794 = vmul.f32 %v791, %v793
    %v795 = vadd.f32 %v791, %v794
    %vm796 = vweird.f32 %v535
    %vm797 = vweird.f32 %v791
    %vm798 = vmor %vm796, %vm797
    %v799 = vsel %vm798, %v791, %v795
    %v800 = vand.u32 2147483647, %v535
    %vm801 = vcmp.eq.f32.partialorder %v800, 8.507059e+37
    %v802 = vand.u32 %v535, 2147483648
    %v803 = vor.u32 1.1754944e-38, %v802
    %v804 = vsel %vm801, %v803, %v799
    %v805 = vmul.f32 1.0, %v804
    %v806 = vrcp.pop %v536
    %v807 = vmul.f32 %v536, %v806
    %v808 = vsub.f32 1.0, %v807
    %v809 = vmul.f32 %v806, %v808
    %v810 = vadd.f32 %v806, %v809
    %vm811 = vweird.f32 %v536
    %vm812 = vweird.f32 %v806
    %vm813 = vmor %vm811, %vm812
    %v814 = vsel %vm813, %v806, %v810
    %v815 = vand.u32 2147483647, %v536
    %vm816 = vcmp.eq.f32.partialorder %v815, 8.507059e+37
    %v817 = vand.u32 %v536, 2147483648
    %v818 = vor.u32 1.1754944e-38, %v817
    %v819 = vsel %vm816, %v818, %v814
    %v820 = vmul.f32 1.0, %v819
    %v821 = vrcp.pop %v537
    %v822 = vmul.f32 %v537, %v821
    %v823 = vsub.f32 1.0, %v822
    %v824 = vmul.f32 %v821, %v823
    %v825 = vadd.f32 %v821, %v824
    %vm826 = vweird.f32 %v537
    %vm827 = vweird.f32 %v821
    %vm828 = vmor %vm826, %vm827
    %v829 = vsel %vm828, %v821, %v825
    %v830 = vand.u32 2147483647, %v537
    %vm831 = vcmp.eq.f32.partialorder %v830, 8.507059e+37
    %v832 = vand.u32 %v537, 2147483648
    %v833 = vor.u32 1.1754944e-38, %v832
    %v834 = vsel %vm831, %v833, %v829
    %v835 = vmul.f32 1.0, %v834
    %v836 = vrcp.pop %v538
    %v837 = vmul.f32 %v538, %v836
    %v838 = vsub.f32 1.0, %v837
    %v839 = vmul.f32 %v836, %v838
    %v840 = vadd.f32 %v836, %v839
    %vm841 = vweird.f32 %v538
    %vm842 = vweird.f32 %v836
    %vm843 = vmor %vm841, %vm842
    %v844 = vsel %vm843, %v836, %v840
    %v845 = vand.u32 2147483647, %v538
    %vm846 = vcmp.eq.f32.partialorder %v845, 8.507059e+37
    %v847 = vand.u32 %v538, 2147483648
    %v848 = vor.u32 1.1754944e-38, %v847
    %v849 = vsel %vm846, %v848, %v844
    %v850 = vmul.f32 1.0, %v849
    %v851 = vrcp.pop %v539
    %v852 = vmul.f32 %v539, %v851
    %v853 = vsub.f32 1.0, %v852
    %v854 = vmul.f32 %v851, %v853
    %v855 = vadd.f32 %v851, %v854
    %vm856 = vweird.f32 %v539
    %vm857 = vweird.f32 %v851
    %vm858 = vmor %vm856, %vm857
    %v859 = vsel %vm858, %v851, %v855
    %v860 = vand.u32 2147483647, %v539
    %vm861 = vcmp.eq.f32.partialorder %v860, 8.507059e+37
    %v862 = vand.u32 %v539, 2147483648
    %v863 = vor.u32 1.1754944e-38, %v862
    %v864 = vsel %vm861, %v863, %v859
    %v865 = vmul.f32 1.0, %v864
    %v866 = vrcp.pop %v540
    %v867 = vmul.f32 %v540, %v866
    %v868 = vsub.f32 1.0, %v867
    %v869 = vmul.f32 %v866, %v868
    %v870 = vadd.f32 %v866, %v869
    %vm871 = vweird.f32 %v540
    %vm872 = vweird.f32 %v866
    %vm873 = vmor %vm871, %vm872
    %v874 = vsel %vm873, %v866, %v870
    %v875 = vand.u32 2147483647, %v540
    %vm876 = vcmp.eq.f32.partialorder %v875, 8.507059e+37
    %v877 = vand.u32 %v540, 2147483648
    %v878 = vor.u32 1.1754944e-38, %v877
    %v879 = vsel %vm876, %v878, %v874
    %v880 = vmul.f32 1.0, %v879
    %v881 = vrcp.pop %v541
    %v882 = vmul.f32 %v541, %v881
    %v883 = vsub.f32 1.0, %v882
    %v884 = vmul.f32 %v881, %v883
    %v885 = vadd.f32 %v881, %v884
    %vm886 = vweird.f32 %v541
    %vm887 = vweird.f32 %v881
    %vm888 = vmor %vm886, %vm887
    %v889 = vsel %vm888, %v881, %v885
    %v890 = vand.u32 2147483647, %v541
    %vm891 = vcmp.eq.f32.partialorder %v890, 8.507059e+37
    %v892 = vand.u32 %v541, 2147483648
    %v893 = vor.u32 1.1754944e-38, %v892
    %v894 = vsel %vm891, %v893, %v889
    %v895 = vmul.f32 1.0, %v894
    %v896 = vrcp.pop %v542
    %v897 = vmul.f32 %v542, %v896
    %v898 = vsub.f32 1.0, %v897
    %v899 = vmul.f32 %v896, %v898
    %v900 = vadd.f32 %v896, %v899
    %vm901 = vweird.f32 %v542
    %vm902 = vweird.f32 %v896
    %vm903 = vmor %vm901, %vm902
    %v904 = vsel %vm903, %v896, %v900
    %v905 = vand.u32 2147483647, %v542
    %vm906 = vcmp.eq.f32.partialorder %v905, 8.507059e+37
    %v907 = vand.u32 %v542, 2147483648
    %v908 = vor.u32 1.1754944e-38, %v907
    %v909 = vsel %vm906, %v908, %v904
    %v910 = vmul.f32 1.0, %v909
    %v911 = vrcp.pop %v543
    %v912 = vmul.f32 %v543, %v911
    %v913 = vsub.f32 1.0, %v912
    %v914 = vmul.f32 %v911, %v913
    %v915 = vadd.f32 %v911, %v914
    %vm916 = vweird.f32 %v543
    %vm917 = vweird.f32 %v911
    %vm918 = vmor %vm916, %vm917
    %v919 = vsel %vm918, %v911, %v915
    %v920 = vand.u32 2147483647, %v543
    %vm921 = vcmp.eq.f32.partialorder %v920, 8.507059e+37
    %v922 = vand.u32 %v543, 2147483648
    %v923 = vor.u32 1.1754944e-38, %v922
    %v924 = vsel %vm921, %v923, %v919
    %v925 = vmul.f32 1.0, %v924
    %v926 = vrcp.pop %v544
    %v927 = vmul.f32 %v544, %v926
    %v928 = vsub.f32 1.0, %v927
    %v929 = vmul.f32 %v926, %v928
    %v930 = vadd.f32 %v926, %v929
    %vm931 = vweird.f32 %v544
    %vm932 = vweird.f32 %v926
    %vm933 = vmor %vm931, %vm932
    %v934 = vsel %vm933, %v926, %v930
    %v935 = vand.u32 2147483647, %v544
    %vm936 = vcmp.eq.f32.partialorder %v935, 8.507059e+37
    %v937 = vand.u32 %v544, 2147483648
    %v938 = vor.u32 1.1754944e-38, %v937
    %v939 = vsel %vm936, %v938, %v934
    %v940 = vmul.f32 1.0, %v939
    %v941 = vrcp.pop %v545
    %v942 = vmul.f32 %v545, %v941
    %v943 = vsub.f32 1.0, %v942
    %v944 = vmul.f32 %v941, %v943
    %v945 = vadd.f32 %v941, %v944
    %vm946 = vweird.f32 %v545
    %vm947 = vweird.f32 %v941
    %vm948 = vmor %vm946, %vm947
    %v949 = vsel %vm948, %v941, %v945
    %v950 = vand.u32 2147483647, %v545
    %vm951 = vcmp.eq.f32.partialorder %v950, 8.507059e+37
    %v952 = vand.u32 %v545, 2147483648
    %v953 = vor.u32 1.1754944e-38, %v952
    %v954 = vsel %vm951, %v953, %v949
    %v955 = vmul.f32 1.0, %v954
    %v956 = vrcp.pop %v546
    %v957 = vmul.f32 %v546, %v956
    %v958 = vsub.f32 1.0, %v957
    %v959 = vmul.f32 %v956, %v958
    %v960 = vadd.f32 %v956, %v959
    %vm961 = vweird.f32 %v546
    %vm962 = vweird.f32 %v956
    %vm963 = vmor %vm961, %vm962
    %v964 = vsel %vm963, %v956, %v960
    %v965 = vand.u32 2147483647, %v546
    %vm966 = vcmp.eq.f32.partialorder %v965, 8.507059e+37
    %v967 = vand.u32 %v546, 2147483648
    %v968 = vor.u32 1.1754944e-38, %v967
    %v969 = vsel %vm966, %v968, %v964
    %v970 = vmul.f32 1.0, %v969
    %v971 = vrcp.pop %v547
    %v972 = vmul.f32 %v547, %v971
    %v973 = vsub.f32 1.0, %v972
    %v974 = vmul.f32 %v971, %v973
    %v975 = vadd.f32 %v971, %v974
    %vm976 = vweird.f32 %v547
    %vm977 = vweird.f32 %v971
    %vm978 = vmor %vm976, %vm977
    %v979 = vsel %vm978, %v971, %v975
    %v980 = vand.u32 2147483647, %v547
    %vm981 = vcmp.eq.f32.partialorder %v980, 8.507059e+37
    %v982 = vand.u32 %v547, 2147483648
    %v983 = vor.u32 1.1754944e-38, %v982
    %v984 = vsel %vm981, %v983, %v979
    %v985 = vmul.f32 1.0, %v984
    %v986 = vrcp.pop %v548
    %v987 = vmul.f32 %v548, %v986
    %v988 = vsub.f32 1.0, %v987
    %v989 = vmul.f32 %v986, %v988
    %v990 = vadd.f32 %v986, %v989
    %vm991 = vweird.f32 %v548
    %vm992 = vweird.f32 %v986
    %vm993 = vmor %vm991, %vm992
    %v994 = vsel %vm993, %v986, %v990
    %v995 = vand.u32 2147483647, %v548
    %vm996 = vcmp.eq.f32.partialorder %v995, 8.507059e+37
    %v997 = vand.u32 %v548, 2147483648
    %v998 = vor.u32 1.1754944e-38, %v997
    %v999 = vsel %vm996, %v998, %v994
    %v1000 = vmul.f32 1.0, %v999
    %v1001 = vrcp.pop %v549
    %v1002 = vmul.f32 %v549, %v1001
    %v1003 = vsub.f32 1.0, %v1002
    %v1004 = vmul.f32 %v1001, %v1003
    %v1005 = vadd.f32 %v1001, %v1004
    %vm1006 = vweird.f32 %v549
    %vm1007 = vweird.f32 %v1001
    %vm1008 = vmor %vm1006, %vm1007
    %v1009 = vsel %vm1008, %v1001, %v1005
    %v1010 = vand.u32 2147483647, %v549
    %vm1011 = vcmp.eq.f32.partialorder %v1010, 8.507059e+37
    %v1012 = vand.u32 %v549, 2147483648
    %v1013 = vor.u32 1.1754944e-38, %v1012
    %v1014 = vsel %vm1011, %v1013, %v1009
    %v1015 = vmul.f32 1.0, %v1014
    %v1016 = vrcp.pop %v550
    %v1017 = vmul.f32 %v550, %v1016
    %v1018 = vsub.f32 1.0, %v1017
    %v1019 = vmul.f32 %v1016, %v1018
    %v1020 = vadd.f32 %v1016, %v1019
    %vm1021 = vweird.f32 %v550
    %vm1022 = vweird.f32 %v1016
    %vm1023 = vmor %vm1021, %vm1022
    %v1024 = vsel %vm1023, %v1016, %v1020
    %v1025 = vand.u32 2147483647, %v550
    %vm1026 = vcmp.eq.f32.partialorder %v1025, 8.507059e+37
    %v1027 = vand.u32 %v550, 2147483648
    %v1028 = vor.u32 1.1754944e-38, %v1027
    %v1029 = vsel %vm1026, %v1028, %v1024
    %v1030 = vmul.f32 1.0, %v1029
    %v1031 = vld [vmem:[%s5] sm:$0xff]
    %v1032 = vld [vmem:[%s5 + $0x8] sm:$0xff]
    %v1033 = vld [vmem:[%s5 + $0x10] sm:$0xff]
    %v1034 = vld [vmem:[%s5 + $0x18] sm:$0xff]
    %v1035 = vld [vmem:[%s6] sm:$0xff]
    %v1036 = vld [vmem:[%s6 + $0x8] sm:$0xff]
    %v1037 = vld [vmem:[%s6 + $0x10] sm:$0xff]
    %v1038 = vld [vmem:[%s6 + $0x18] sm:$0xff]
    %1040 = vset.pattern.permute.xlu0 0
    %1041 = vperm.xlu0 %1040, %v1035
    %v1042 = vpop.permute.xlu0 %1041
    %1045 = vset.pattern.permute.xlu0 0
    %1046 = vperm.xlu0 %1045, %v1036
    %v1047 = vpop.permute.xlu0 %1046
    %1050 = vset.pattern.permute.xlu0 0
    %1051 = vperm.xlu0 %1050, %v1037
    %v1052 = vpop.permute.xlu0 %1051
    %1055 = vset.pattern.permute.xlu0 0
    %1056 = vperm.xlu0 %1055, %v1038
    %v1057 = vpop.permute.xlu0 %1056
    %v1059 = vmul.f32 %v1042, %v565
    %v1060 = vmul.f32 %v1042, %v580
    %v1061 = vmul.f32 %v1042, %v595
    %v1062 = vmul.f32 %v1042, %v610
    %v1063 = vmul.f32 %v1042, %v625
    %v1064 = vmul.f32 %v1042, %v640
    %v1065 = vmul.f32 %v1042, %v655
    %v1066 = vmul.f32 %v1042, %v670
    %v1067 = vmul.f32 %v1047, %v685
    %v1068 = vmul.f32 %v1047, %v700
    %v1069 = vmul.f32 %v1047, %v715
    %v1070 = vmul.f32 %v1047, %v730
    %v1071 = vmul.f32 %v1047, %v745
    %v1072 = vmul.f32 %v1047, %v760
    %v1073 = vmul.f32 %v1047, %v775
    %v1074 = vmul.f32 %v1047, %v790
    %v1075 = vmul.f32 %v1052, %v805
    %v1076 = vmul.f32 %v1052, %v820
    %v1077 = vmul.f32 %v1052, %v835
    %v1078 = vmul.f32 %v1052, %v850
    %v1079 = vmul.f32 %v1052, %v865
    %v1080 = vmul.f32 %v1052, %v880
    %v1081 = vmul.f32 %v1052, %v895
    %v1082 = vmul.f32 %v1052, %v910
    %v1083 = vmul.f32 %v1057, %v925
    %v1084 = vmul.f32 %v1057, %v940
    %v1085 = vmul.f32 %v1057, %v955
    %v1086 = vmul.f32 %v1057, %v970
    %v1087 = vmul.f32 %v1057, %v985
    %v1088 = vmul.f32 %v1057, %v1000
    %v1089 = vmul.f32 %v1057, %v1015
    %v1090 = vmul.f32 %v1057, %v1030
    %1092 = vset.pattern.permute.xlu0 0
    %1093 = vperm.xlu0 %1092, %v1031
    %v1094 = vpop.permute.xlu0 %1093
    %1097 = vset.pattern.permute.xlu0 0
    %1098 = vperm.xlu0 %1097, %v1032
    %v1099 = vpop.permute.xlu0 %1098
    %1102 = vset.pattern.permute.xlu0 0
    %1103 = vperm.xlu0 %1102, %v1033
    %v1104 = vpop.permute.xlu0 %1103
    %1107 = vset.pattern.permute.xlu0 0
    %1108 = vperm.xlu0 %1107, %v1034
    %v1109 = vpop.permute.xlu0 %1108
    %v1111 = vadd.f32 %v1094, %v1059
    %v1112 = vadd.f32 %v1094, %v1060
    %v1113 = vadd.f32 %v1094, %v1061
    %v1114 = vadd.f32 %v1094, %v1062
    %v1115 = vadd.f32 %v1094, %v1063
    %v1116 = vadd.f32 %v1094, %v1064
    %v1117 = vadd.f32 %v1094, %v1065
    %v1118 = vadd.f32 %v1094, %v1066
    %v1119 = vadd.f32 %v1099, %v1067
    %v1120 = vadd.f32 %v1099, %v1068
    %v1121 = vadd.f32 %v1099, %v1069
    %v1122 = vadd.f32 %v1099, %v1070
    %v1123 = vadd.f32 %v1099, %v1071
    %v1124 = vadd.f32 %v1099, %v1072
    %v1125 = vadd.f32 %v1099, %v1073
    %v1126 = vadd.f32 %v1099, %v1074
    %v1127 = vadd.f32 %v1104, %v1075
    %v1128 = vadd.f32 %v1104, %v1076
    %v1129 = vadd.f32 %v1104, %v1077
    %v1130 = vadd.f32 %v1104, %v1078
    %v1131 = vadd.f32 %v1104, %v1079
    %v1132 = vadd.f32 %v1104, %v1080
    %v1133 = vadd.f32 %v1104, %v1081
    %v1134 = vadd.f32 %v1104, %v1082
    %v1135 = vadd.f32 %v1109, %v1083
    %v1136 = vadd.f32 %v1109, %v1084
    %v1137 = vadd.f32 %v1109, %v1085
    %v1138 = vadd.f32 %v1109, %v1086
    %v1139 = vadd.f32 %v1109, %v1087
    %v1140 = vadd.f32 %v1109, %v1088
    %v1141 = vadd.f32 %v1109, %v1089
    %v1142 = vadd.f32 %v1109, %v1090
    %v1143 = vmul.f32 %v177, %v1111
    %v1144 = vmul.f32 %v206, %v1112
    %v1145 = vmul.f32 %v235, %v1113
    %v1146 = vmul.f32 %v264, %v1114
    %v1147 = vmul.f32 %v293, %v1115
    %v1148 = vmul.f32 %v322, %v1116
    %v1149 = vmul.f32 %v351, %v1117
    %v1150 = vmul.f32 %v380, %v1118
    %v1151 = vmul.f32 %v180, %v1119
    %v1152 = vmul.f32 %v209, %v1120
    %v1153 = vmul.f32 %v238, %v1121
    %v1154 = vmul.f32 %v267, %v1122
    %v1155 = vmul.f32 %v296, %v1123
    %v1156 = vmul.f32 %v325, %v1124
    %v1157 = vmul.f32 %v354, %v1125
    %v1158 = vmul.f32 %v383, %v1126
    %v1159 = vmul.f32 %v183, %v1127
    %v1160 = vmul.f32 %v212, %v1128
    %v1161 = vmul.f32 %v241, %v1129
    %v1162 = vmul.f32 %v270, %v1130
    %v1163 = vmul.f32 %v299, %v1131
    %v1164 = vmul.f32 %v328, %v1132
    %v1165 = vmul.f32 %v357, %v1133
    %v1166 = vmul.f32 %v386, %v1134
    %v1167 = vmul.f32 %v186, %v1135
    %v1168 = vmul.f32 %v215, %v1136
    %v1169 = vmul.f32 %v244, %v1137
    %v1170 = vmul.f32 %v273, %v1138
    %v1171 = vmul.f32 %v302, %v1139
    %v1172 = vmul.f32 %v331, %v1140
    %v1173 = vmul.f32 %v360, %v1141
    %v1174 = vmul.f32 %v389, %v1142
    %v1175 = vld [vmem:[%s7] sm:$0xff]
    %v1176 = vld [vmem:[%s7 + $0x8] sm:$0xff]
    %v1177 = vld [vmem:[%s7 + $0x10] sm:$0xff]
    %v1178 = vld [vmem:[%s7 + $0x18] sm:$0xff]
    %v1179 = vld [vmem:[%s8] sm:$0xff]
    %v1180 = vld [vmem:[%s8 + $0x8] sm:$0xff]
    %v1181 = vld [vmem:[%s8 + $0x10] sm:$0xff]
    %v1182 = vld [vmem:[%s8 + $0x18] sm:$0xff]
    %1184 = vset.pattern.permute.xlu0 0
    %1185 = vperm.xlu0 %1184, %v1179
    %v1186 = vpop.permute.xlu0 %1185
    %1189 = vset.pattern.permute.xlu0 0
    %1190 = vperm.xlu0 %1189, %v1180
    %v1191 = vpop.permute.xlu0 %1190
    %1194 = vset.pattern.permute.xlu0 0
    %1195 = vperm.xlu0 %1194, %v1181
    %v1196 = vpop.permute.xlu0 %1195
    %1199 = vset.pattern.permute.xlu0 0
    %1200 = vperm.xlu0 %1199, %v1182
    %v1201 = vpop.permute.xlu0 %1200
    %vm1203 = vcmask 261120
    %v1205 = vsel %vm1203, %v1175, 0
    %v1208 = vsel %vm1203, %v1176, 0
    %v1211 = vsel %vm1203, %v1177, 0
    %v1214 = vsel %vm1203, %v1178, 0
    %1216 = vmatpush.msra.mxu0 0.0
    %1217 = vmatpush.msra.mxu0 0.0
    %1218 = vmatpush.msra.mxu0 0.0
    %1219 = vmatpush.msra.mxu0 0.0
    %1220 = vmatpush.msra.mxu0 0.0
    %1221 = vmatpush.msra.mxu0 0.0
    %1222 = vmatpush.msra.mxu0 0.0
    %1223 = vmatpush.msra.mxu0 0.0
    %1224 = vmatpush.msra.mxu0 0.0
    %1225 = vmatpush.msra.mxu0 0.0
    %1226 = vmatpush.msra.mxu0 0.0
    %1227 = vmatpush.msra.mxu0 0.0
    %1228 = vmatpush.msra.mxu0 %v1167
    %1229 = vmatpush.msra.mxu0 %v1159
    %1230 = vmatpush.msra.mxu0 %v1151
    %1231 = vmatpush.msra.mxu0 %v1143
    %1232 = vmatmul.f32.gmra.mxu0 %v1205
    %v1233 = vpop.f32.mrf.mxu0
    %v1234 = vadd.f32 %v1186, %v1233
    %1235 = vmatmul.f32.gmra.mxu0 %v1208
    %v1236 = vpop.f32.mrf.mxu0
    %v1237 = vadd.f32 %v1191, %v1236
    %1238 = vmatmul.f32.gmra.mxu0 %v1211
    %v1239 = vpop.f32.mrf.mxu0
    %v1240 = vadd.f32 %v1196, %v1239
    %1241 = vmatmul.f32.gmra.mxu0 %v1214
    %v1242 = vpop.f32.mrf.mxu0
    %v1243 = vadd.f32 %v1201, %v1242
    %1244 = vdwg.mxu0
    %1245 = vmatpush.msra.mxu0 0.0
    %1246 = vmatpush.msra.mxu0 0.0
    %1247 = vmatpush.msra.mxu0 0.0
    %1248 = vmatpush.msra.mxu0 0.0
    %1249 = vmatpush.msra.mxu0 0.0
    %1250 = vmatpush.msra.mxu0 0.0
    %1251 = vmatpush.msra.mxu0 0.0
    %1252 = vmatpush.msra.mxu0 0.0
    %1253 = vmatpush.msra.mxu0 0.0
    %1254 = vmatpush.msra.mxu0 0.0
    %1255 = vmatpush.msra.mxu0 0.0
    %1256 = vmatpush.msra.mxu0 0.0
    %1257 = vmatpush.msra.mxu0 %v1168
    %1258 = vmatpush.msra.mxu0 %v1160
    %1259 = vmatpush.msra.mxu0 %v1152
    %1260 = vmatpush.msra.mxu0 %v1144
    %1261 = vmatmul.f32.gmra.mxu0 %v1205
    %v1262 = vpop.f32.mrf.mxu0
    %v1263 = vadd.f32 %v1186, %v1262
    %1264 = vmatmul.f32.gmra.mxu0 %v1208
    %v1265 = vpop.f32.mrf.mxu0
    %v1266 = vadd.f32 %v1191, %v1265
    %1267 = vmatmul.f32.gmra.mxu0 %v1211
    %v1268 = vpop.f32.mrf.mxu0
    %v1269 = vadd.f32 %v1196, %v1268
    %1270 = vmatmul.f32.gmra.mxu0 %v1214
    %v1271 = vpop.f32.mrf.mxu0
    %v1272 = vadd.f32 %v1201, %v1271
    %1273 = vdwg.mxu0
    %1274 = vmatpush.msra.mxu0 0.0
    %1275 = vmatpush.msra.mxu0 0.0
    %1276 = vmatpush.msra.mxu0 0.0
    %1277 = vmatpush.msra.mxu0 0.0
    %1278 = vmatpush.msra.mxu0 0.0
    %1279 = vmatpush.msra.mxu0 0.0
    %1280 = vmatpush.msra.mxu0 0.0
    %1281 = vmatpush.msra.mxu0 0.0
    %1282 = vmatpush.msra.mxu0 0.0
    %1283 = vmatpush.msra.mxu0 0.0
    %1284 = vmatpush.msra.mxu0 0.0
    %1285 = vmatpush.msra.mxu0 0.0
    %1286 = vmatpush.msra.mxu0 %v1169
    %1287 = vmatpush.msra.mxu0 %v1161
    %1288 = vmatpush.msra.mxu0 %v1153
    %1289 = vmatpush.msra.mxu0 %v1145
    %1290 = vmatmul.f32.gmra.mxu0 %v1205
    %v1291 = vpop.f32.mrf.mxu0
    %v1292 = vadd.f32 %v1186, %v1291
    %1293 = vmatmul.f32.gmra.mxu0 %v1208
    %v1294 = vpop.f32.mrf.mxu0
    %v1295 = vadd.f32 %v1191, %v1294
    %1296 = vmatmul.f32.gmra.mxu0 %v1211
    %v1297 = vpop.f32.mrf.mxu0
    %v1298 = vadd.f32 %v1196, %v1297
    %1299 = vmatmul.f32.gmra.mxu0 %v1214
    %v1300 = vpop.f32.mrf.mxu0
    %v1301 = vadd.f32 %v1201, %v1300
    %1302 = vdwg.mxu0
    %1303 = vmatpush.msra.mxu0 0.0
    %1304 = vmatpush.msra.mxu0 0.0
    %1305 = vmatpush.msra.mxu0 0.0
    %1306 = vmatpush.msra.mxu0 0.0
    %1307 = vmatpush.msra.mxu0 0.0
    %1308 = vmatpush.msra.mxu0 0.0
    %1309 = vmatpush.msra.mxu0 0.0
    %1310 = vmatpush.msra.mxu0 0.0
    %1311 = vmatpush.msra.mxu0 0.0
    %1312 = vmatpush.msra.mxu0 0.0
    %1313 = vmatpush.msra.mxu0 0.0
    %1314 = vmatpush.msra.mxu0 0.0
    %1315 = vmatpush.msra.mxu0 %v1170
    %1316 = vmatpush.msra.mxu0 %v1162
    %1317 = vmatpush.msra.mxu0 %v1154
    %1318 = vmatpush.msra.mxu0 %v1146
    %1319 = vmatmul.f32.gmra.mxu0 %v1205
    %v1320 = vpop.f32.mrf.mxu0
    %v1321 = vadd.f32 %v1186, %v1320
    %1322 = vmatmul.f32.gmra.mxu0 %v1208
    %v1323 = vpop.f32.mrf.mxu0
    %v1324 = vadd.f32 %v1191, %v1323
    %1325 = vmatmul.f32.gmra.mxu0 %v1211
    %v1326 = vpop.f32.mrf.mxu0
    %v1327 = vadd.f32 %v1196, %v1326
    %1328 = vmatmul.f32.gmra.mxu0 %v1214
    %v1329 = vpop.f32.mrf.mxu0
    %v1330 = vadd.f32 %v1201, %v1329
    %1331 = vdwg.mxu0
    %1332 = vmatpush.msra.mxu0 0.0
    %1333 = vmatpush.msra.mxu0 0.0
    %1334 = vmatpush.msra.mxu0 0.0
    %1335 = vmatpush.msra.mxu0 0.0
    %1336 = vmatpush.msra.mxu0 0.0
    %1337 = vmatpush.msra.mxu0 0.0
    %1338 = vmatpush.msra.mxu0 0.0
    %1339 = vmatpush.msra.mxu0 0.0
    %1340 = vmatpush.msra.mxu0 0.0
    %1341 = vmatpush.msra.mxu0 0.0
    %1342 = vmatpush.msra.mxu0 0.0
    %1343 = vmatpush.msra.mxu0 0.0
    %1344 = vmatpush.msra.mxu0 %v1171
    %1345 = vmatpush.msra.mxu0 %v1163
    %1346 = vmatpush.msra.mxu0 %v1155
    %1347 = vmatpush.msra.mxu0 %v1147
    %1348 = vmatmul.f32.gmra.mxu0 %v1205
    %v1349 = vpop.f32.mrf.mxu0
    %v1350 = vadd.f32 %v1186, %v1349
    %1351 = vmatmul.f32.gmra.mxu0 %v1208
    %v1352 = vpop.f32.mrf.mxu0
    %v1353 = vadd.f32 %v1191, %v1352
    %1354 = vmatmul.f32.gmra.mxu0 %v1211
    %v1355 = vpop.f32.mrf.mxu0
    %v1356 = vadd.f32 %v1196, %v1355
    %1357 = vmatmul.f32.gmra.mxu0 %v1214
    %v1358 = vpop.f32.mrf.mxu0
    %v1359 = vadd.f32 %v1201, %v1358
    %1360 = vdwg.mxu0
    %1361 = vmatpush.msra.mxu0 0.0
    %1362 = vmatpush.msra.mxu0 0.0
    %1363 = vmatpush.msra.mxu0 0.0
    %1364 = vmatpush.msra.mxu0 0.0
    %1365 = vmatpush.msra.mxu0 0.0
    %1366 = vmatpush.msra.mxu0 0.0
    %1367 = vmatpush.msra.mxu0 0.0
    %1368 = vmatpush.msra.mxu0 0.0
    %1369 = vmatpush.msra.mxu0 0.0
    %1370 = vmatpush.msra.mxu0 0.0
    %1371 = vmatpush.msra.mxu0 0.0
    %1372 = vmatpush.msra.mxu0 0.0
    %1373 = vmatpush.msra.mxu0 %v1172
    %1374 = vmatpush.msra.mxu0 %v1164
    %1375 = vmatpush.msra.mxu0 %v1156
    %1376 = vmatpush.msra.mxu0 %v1148
    %1377 = vmatmul.f32.gmra.mxu0 %v1205
    %v1378 = vpop.f32.mrf.mxu0
    %v1379 = vadd.f32 %v1186, %v1378
    %1380 = vmatmul.f32.gmra.mxu0 %v1208
    %v1381 = vpop.f32.mrf.mxu0
    %v1382 = vadd.f32 %v1191, %v1381
    %1383 = vmatmul.f32.gmra.mxu0 %v1211
    %v1384 = vpop.f32.mrf.mxu0
    %v1385 = vadd.f32 %v1196, %v1384
    %1386 = vmatmul.f32.gmra.mxu0 %v1214
    %v1387 = vpop.f32.mrf.mxu0
    %v1388 = vadd.f32 %v1201, %v1387
    %1389 = vdwg.mxu0
    %1390 = vmatpush.msra.mxu0 0.0
    %1391 = vmatpush.msra.mxu0 0.0
    %1392 = vmatpush.msra.mxu0 0.0
    %1393 = vmatpush.msra.mxu0 0.0
    %1394 = vmatpush.msra.mxu0 0.0
    %1395 = vmatpush.msra.mxu0 0.0
    %1396 = vmatpush.msra.mxu0 0.0
    %1397 = vmatpush.msra.mxu0 0.0
    %1398 = vmatpush.msra.mxu0 0.0
    %1399 = vmatpush.msra.mxu0 0.0
    %1400 = vmatpush.msra.mxu0 0.0
    %1401 = vmatpush.msra.mxu0 0.0
    %1402 = vmatpush.msra.mxu0 %v1173
    %1403 = vmatpush.msra.mxu0 %v1165
    %1404 = vmatpush.msra.mxu0 %v1157
    %1405 = vmatpush.msra.mxu0 %v1149
    %1406 = vmatmul.f32.gmra.mxu0 %v1205
    %v1407 = vpop.f32.mrf.mxu0
    %v1408 = vadd.f32 %v1186, %v1407
    %1409 = vmatmul.f32.gmra.mxu0 %v1208
    %v1410 = vpop.f32.mrf.mxu0
    %v1411 = vadd.f32 %v1191, %v1410
    %1412 = vmatmul.f32.gmra.mxu0 %v1211
    %v1413 = vpop.f32.mrf.mxu0
    %v1414 = vadd.f32 %v1196, %v1413
    %1415 = vmatmul.f32.gmra.mxu0 %v1214
    %v1416 = vpop.f32.mrf.mxu0
    %v1417 = vadd.f32 %v1201, %v1416
    %1418 = vdwg.mxu0
    %1419 = vmatpush.msra.mxu0 0.0
    %1420 = vmatpush.msra.mxu0 0.0
    %1421 = vmatpush.msra.mxu0 0.0
    %1422 = vmatpush.msra.mxu0 0.0
    %1423 = vmatpush.msra.mxu0 0.0
    %1424 = vmatpush.msra.mxu0 0.0
    %1425 = vmatpush.msra.mxu0 0.0
    %1426 = vmatpush.msra.mxu0 0.0
    %1427 = vmatpush.msra.mxu0 0.0
    %1428 = vmatpush.msra.mxu0 0.0
    %1429 = vmatpush.msra.mxu0 0.0
    %1430 = vmatpush.msra.mxu0 0.0
    %1431 = vmatpush.msra.mxu0 %v1174
    %1432 = vmatpush.msra.mxu0 %v1166
    %1433 = vmatpush.msra.mxu0 %v1158
    %1434 = vmatpush.msra.mxu0 %v1150
    %1435 = vmatmul.f32.gmra.mxu0 %v1205
    %v1436 = vpop.f32.mrf.mxu0
    %v1437 = vadd.f32 %v1186, %v1436
    %1438 = vmatmul.f32.gmra.mxu0 %v1208
    %v1439 = vpop.f32.mrf.mxu0
    %v1440 = vadd.f32 %v1191, %v1439
    %1441 = vmatmul.f32.gmra.mxu0 %v1211
    %v1442 = vpop.f32.mrf.mxu0
    %v1443 = vadd.f32 %v1196, %v1442
    %1444 = vmatmul.f32.gmra.mxu0 %v1214
    %v1445 = vpop.f32.mrf.mxu0
    %v1446 = vadd.f32 %v1201, %v1445
    %1447 = vdwg.mxu0
    %v1448 = vmul.f32 %v1234, 0.999995
    %v1449 = vmul.f32 %v1263, 0.999995
    %v1450 = vmul.f32 %v1292, 0.999995
    %v1451 = vmul.f32 %v1321, 0.999995
    %v1452 = vmul.f32 %v1350, 0.999995
    %v1453 = vmul.f32 %v1379, 0.999995
    %v1454 = vmul.f32 %v1408, 0.999995
    %v1455 = vmul.f32 %v1437, 0.999995
    %v1456 = vmul.f32 %v1237, 0.999995
    %v1457 = vmul.f32 %v1266, 0.999995
    %v1458 = vmul.f32 %v1295, 0.999995
    %v1459 = vmul.f32 %v1324, 0.999995
    %v1460 = vmul.f32 %v1353, 0.999995
    %v1461 = vmul.f32 %v1382, 0.999995
    %v1462 = vmul.f32 %v1411, 0.999995
    %v1463 = vmul.f32 %v1440, 0.999995
    %v1464 = vmul.f32 %v1240, 0.999995
    %v1465 = vmul.f32 %v1269, 0.999995
    %v1466 = vmul.f32 %v1298, 0.999995
    %v1467 = vmul.f32 %v1327, 0.999995
    %v1468 = vmul.f32 %v1356, 0.999995
    %v1469 = vmul.f32 %v1385, 0.999995
    %v1470 = vmul.f32 %v1414, 0.999995
    %v1471 = vmul.f32 %v1443, 0.999995
    %v1472 = vmul.f32 %v1243, 0.999995
    %v1473 = vmul.f32 %v1272, 0.999995
    %v1474 = vmul.f32 %v1301, 0.999995
    %v1475 = vmul.f32 %v1330, 0.999995
    %v1476 = vmul.f32 %v1359, 0.999995
    %v1477 = vmul.f32 %v1388, 0.999995
    %v1478 = vmul.f32 %v1417, 0.999995
    %v1479 = vmul.f32 %v1446, 0.999995
    %v1480 = vxor.u32 %v1448, 2147483648
    %v1481 = vxor.u32 %v1449, 2147483648
    %v1482 = vxor.u32 %v1450, 2147483648
    %v1483 = vxor.u32 %v1451, 2147483648
    %v1484 = vxor.u32 %v1452, 2147483648
    %v1485 = vxor.u32 %v1453, 2147483648
    %v1486 = vxor.u32 %v1454, 2147483648
    %v1487 = vxor.u32 %v1455, 2147483648
    %v1488 = vxor.u32 %v1456, 2147483648
    %v1489 = vxor.u32 %v1457, 2147483648
    %v1490 = vxor.u32 %v1458, 2147483648
    %v1491 = vxor.u32 %v1459, 2147483648
    %v1492 = vxor.u32 %v1460, 2147483648
    %v1493 = vxor.u32 %v1461, 2147483648
    %v1494 = vxor.u32 %v1462, 2147483648
    %v1495 = vxor.u32 %v1463, 2147483648
    %v1496 = vxor.u32 %v1464, 2147483648
    %v1497 = vxor.u32 %v1465, 2147483648
    %v1498 = vxor.u32 %v1466, 2147483648
    %v1499 = vxor.u32 %v1467, 2147483648
    %v1500 = vxor.u32 %v1468, 2147483648
    %v1501 = vxor.u32 %v1469, 2147483648
    %v1502 = vxor.u32 %v1470, 2147483648
    %v1503 = vxor.u32 %v1471, 2147483648
    %v1504 = vxor.u32 %v1472, 2147483648
    %v1505 = vxor.u32 %v1473, 2147483648
    %v1506 = vxor.u32 %v1474, 2147483648
    %v1507 = vxor.u32 %v1475, 2147483648
    %v1508 = vxor.u32 %v1476, 2147483648
    %v1509 = vxor.u32 %v1477, 2147483648
    %v1510 = vxor.u32 %v1478, 2147483648
    %v1511 = vxor.u32 %v1479, 2147483648
    %v1512 = vmul.f32 %v1480, 1.442695
    %v1513 = vpow.pop %v1512
    %v1514 = vmul.f32 %v1481, 1.442695
    %v1515 = vpow.pop %v1514
    %v1516 = vmul.f32 %v1482, 1.442695
    %v1517 = vpow.pop %v1516
    %v1518 = vmul.f32 %v1483, 1.442695
    %v1519 = vpow.pop %v1518
    %v1520 = vmul.f32 %v1484, 1.442695
    %v1521 = vpow.pop %v1520
    %v1522 = vmul.f32 %v1485, 1.442695
    %v1523 = vpow.pop %v1522
    %v1524 = vmul.f32 %v1486, 1.442695
    %v1525 = vpow.pop %v1524
    %v1526 = vmul.f32 %v1487, 1.442695
    %v1527 = vpow.pop %v1526
    %v1528 = vmul.f32 %v1488, 1.442695
    %v1529 = vpow.pop %v1528
    %v1530 = vmul.f32 %v1489, 1.442695
    %v1531 = vpow.pop %v1530
    %v1532 = vmul.f32 %v1490, 1.442695
    %v1533 = vpow.pop %v1532
    %v1534 = vmul.f32 %v1491, 1.442695
    %v1535 = vpow.pop %v1534
    %v1536 = vmul.f32 %v1492, 1.442695
    %v1537 = vpow.pop %v1536
    %v1538 = vmul.f32 %v1493, 1.442695
    %v1539 = vpow.pop %v1538
    %v1540 = vmul.f32 %v1494, 1.442695
    %v1541 = vpow.pop %v1540
    %v1542 = vmul.f32 %v1495, 1.442695
    %v1543 = vpow.pop %v1542
    %v1544 = vmul.f32 %v1496, 1.442695
    %v1545 = vpow.pop %v1544
    %v1546 = vmul.f32 %v1497, 1.442695
    %v1547 = vpow.pop %v1546
    %v1548 = vmul.f32 %v1498, 1.442695
    %v1549 = vpow.pop %v1548
    %v1550 = vmul.f32 %v1499, 1.442695
    %v1551 = vpow.pop %v1550
    %v1552 = vmul.f32 %v1500, 1.442695
    %v1553 = vpow.pop %v1552
    %v1554 = vmul.f32 %v1501, 1.442695
    %v1555 = vpow.pop %v1554
    %v1556 = vmul.f32 %v1502, 1.442695
    %v1557 = vpow.pop %v1556
    %v1558 = vmul.f32 %v1503, 1.442695
    %v1559 = vpow.pop %v1558
    %v1560 = vmul.f32 %v1504, 1.442695
    %v1561 = vpow.pop %v1560
    %v1562 = vmul.f32 %v1505, 1.442695
    %v1563 = vpow.pop %v1562
    %v1564 = vmul.f32 %v1506, 1.442695
    %v1565 = vpow.pop %v1564
    %v1566 = vmul.f32 %v1507, 1.442695
    %v1567 = vpow.pop %v1566
    %v1568 = vmul.f32 %v1508, 1.442695
    %v1569 = vpow.pop %v1568
    %v1570 = vmul.f32 %v1509, 1.442695
    %v1571 = vpow.pop %v1570
    %v1572 = vmul.f32 %v1510, 1.442695
    %v1573 = vpow.pop %v1572
    %v1574 = vmul.f32 %v1511, 1.442695
    %v1575 = vpow.pop %v1574
    %v1576 = vadd.f32 %v1513, 1.0
    %v1577 = vadd.f32 %v1515, 1.0
    %v1578 = vadd.f32 %v1517, 1.0
    %v1579 = vadd.f32 %v1519, 1.0
    %v1580 = vadd.f32 %v1521, 1.0
    %v1581 = vadd.f32 %v1523, 1.0
    %v1582 = vadd.f32 %v1525, 1.0
    %v1583 = vadd.f32 %v1527, 1.0
    %v1584 = vadd.f32 %v1529, 1.0
    %v1585 = vadd.f32 %v1531, 1.0
    %v1586 = vadd.f32 %v1533, 1.0
    %v1587 = vadd.f32 %v1535, 1.0
    %v1588 = vadd.f32 %v1537, 1.0
    %v1589 = vadd.f32 %v1539, 1.0
    %v1590 = vadd.f32 %v1541, 1.0
    %v1591 = vadd.f32 %v1543, 1.0
    %v1592 = vadd.f32 %v1545, 1.0
    %v1593 = vadd.f32 %v1547, 1.0
    %v1594 = vadd.f32 %v1549, 1.0
    %v1595 = vadd.f32 %v1551, 1.0
    %v1596 = vadd.f32 %v1553, 1.0
    %v1597 = vadd.f32 %v1555, 1.0
    %v1598 = vadd.f32 %v1557, 1.0
    %v1599 = vadd.f32 %v1559, 1.0
    %v1600 = vadd.f32 %v1561, 1.0
    %v1601 = vadd.f32 %v1563, 1.0
    %v1602 = vadd.f32 %v1565, 1.0
    %v1603 = vadd.f32 %v1567, 1.0
    %v1604 = vadd.f32 %v1569, 1.0
    %v1605 = vadd.f32 %v1571, 1.0
    %v1606 = vadd.f32 %v1573, 1.0
    %v1607 = vadd.f32 %v1575, 1.0
    %v1608 = vrcp.pop %v1576
    %v1609 = vmul.f32 %v1576, %v1608
    %v1610 = vsub.f32 1.0, %v1609
    %v1611 = vmul.f32 %v1608, %v1610
    %v1612 = vadd.f32 %v1608, %v1611
    %vm1613 = vweird.f32 %v1576
    %vm1614 = vweird.f32 %v1608
    %vm1615 = vmor %vm1613, %vm1614
    %v1616 = vsel %vm1615, %v1608, %v1612
    %v1617 = vand.u32 2147483647, %v1576
    %vm1618 = vcmp.eq.f32.partialorder %v1617, 8.507059e+37
    %v1619 = vand.u32 %v1576, 2147483648
    %v1620 = vor.u32 1.1754944e-38, %v1619
    %v1621 = vsel %vm1618, %v1620, %v1616
    %v1622 = vmul.f32 1.0, %v1621
    %v1623 = vrcp.pop %v1577
    %v1624 = vmul.f32 %v1577, %v1623
    %v1625 = vsub.f32 1.0, %v1624
    %v1626 = vmul.f32 %v1623, %v1625
    %v1627 = vadd.f32 %v1623, %v1626
    %vm1628 = vweird.f32 %v1577
    %vm1629 = vweird.f32 %v1623
    %vm1630 = vmor %vm1628, %vm1629
    %v1631 = vsel %vm1630, %v1623, %v1627
    %v1632 = vand.u32 2147483647, %v1577
    %vm1633 = vcmp.eq.f32.partialorder %v1632, 8.507059e+37
    %v1634 = vand.u32 %v1577, 2147483648
    %v1635 = vor.u32 1.1754944e-38, %v1634
    %v1636 = vsel %vm1633, %v1635, %v1631
    %v1637 = vmul.f32 1.0, %v1636
    %v1638 = vrcp.pop %v1578
    %v1639 = vmul.f32 %v1578, %v1638
    %v1640 = vsub.f32 1.0, %v1639
    %v1641 = vmul.f32 %v1638, %v1640
    %v1642 = vadd.f32 %v1638, %v1641
    %vm1643 = vweird.f32 %v1578
    %vm1644 = vweird.f32 %v1638
    %vm1645 = vmor %vm1643, %vm1644
    %v1646 = vsel %vm1645, %v1638, %v1642
    %v1647 = vand.u32 2147483647, %v1578
    %vm1648 = vcmp.eq.f32.partialorder %v1647, 8.507059e+37
    %v1649 = vand.u32 %v1578, 2147483648
    %v1650 = vor.u32 1.1754944e-38, %v1649
    %v1651 = vsel %vm1648, %v1650, %v1646
    %v1652 = vmul.f32 1.0, %v1651
    %v1653 = vrcp.pop %v1579
    %v1654 = vmul.f32 %v1579, %v1653
    %v1655 = vsub.f32 1.0, %v1654
    %v1656 = vmul.f32 %v1653, %v1655
    %v1657 = vadd.f32 %v1653, %v1656
    %vm1658 = vweird.f32 %v1579
    %vm1659 = vweird.f32 %v1653
    %vm1660 = vmor %vm1658, %vm1659
    %v1661 = vsel %vm1660, %v1653, %v1657
    %v1662 = vand.u32 2147483647, %v1579
    %vm1663 = vcmp.eq.f32.partialorder %v1662, 8.507059e+37
    %v1664 = vand.u32 %v1579, 2147483648
    %v1665 = vor.u32 1.1754944e-38, %v1664
    %v1666 = vsel %vm1663, %v1665, %v1661
    %v1667 = vmul.f32 1.0, %v1666
    %v1668 = vrcp.pop %v1580
    %v1669 = vmul.f32 %v1580, %v1668
    %v1670 = vsub.f32 1.0, %v1669
    %v1671 = vmul.f32 %v1668, %v1670
    %v1672 = vadd.f32 %v1668, %v1671
    %vm1673 = vweird.f32 %v1580
    %vm1674 = vweird.f32 %v1668
    %vm1675 = vmor %vm1673, %vm1674
    %v1676 = vsel %vm1675, %v1668, %v1672
    %v1677 = vand.u32 2147483647, %v1580
    %vm1678 = vcmp.eq.f32.partialorder %v1677, 8.507059e+37
    %v1679 = vand.u32 %v1580, 2147483648
    %v1680 = vor.u32 1.1754944e-38, %v1679
    %v1681 = vsel %vm1678, %v1680, %v1676
    %v1682 = vmul.f32 1.0, %v1681
    %v1683 = vrcp.pop %v1581
    %v1684 = vmul.f32 %v1581, %v1683
    %v1685 = vsub.f32 1.0, %v1684
    %v1686 = vmul.f32 %v1683, %v1685
    %v1687 = vadd.f32 %v1683, %v1686
    %vm1688 = vweird.f32 %v1581
    %vm1689 = vweird.f32 %v1683
    %vm1690 = vmor %vm1688, %vm1689
    %v1691 = vsel %vm1690, %v1683, %v1687
    %v1692 = vand.u32 2147483647, %v1581
    %vm1693 = vcmp.eq.f32.partialorder %v1692, 8.507059e+37
    %v1694 = vand.u32 %v1581, 2147483648
    %v1695 = vor.u32 1.1754944e-38, %v1694
    %v1696 = vsel %vm1693, %v1695, %v1691
    %v1697 = vmul.f32 1.0, %v1696
    %v1698 = vrcp.pop %v1582
    %v1699 = vmul.f32 %v1582, %v1698
    %v1700 = vsub.f32 1.0, %v1699
    %v1701 = vmul.f32 %v1698, %v1700
    %v1702 = vadd.f32 %v1698, %v1701
    %vm1703 = vweird.f32 %v1582
    %vm1704 = vweird.f32 %v1698
    %vm1705 = vmor %vm1703, %vm1704
    %v1706 = vsel %vm1705, %v1698, %v1702
    %v1707 = vand.u32 2147483647, %v1582
    %vm1708 = vcmp.eq.f32.partialorder %v1707, 8.507059e+37
    %v1709 = vand.u32 %v1582, 2147483648
    %v1710 = vor.u32 1.1754944e-38, %v1709
    %v1711 = vsel %vm1708, %v1710, %v1706
    %v1712 = vmul.f32 1.0, %v1711
    %v1713 = vrcp.pop %v1583
    %v1714 = vmul.f32 %v1583, %v1713
    %v1715 = vsub.f32 1.0, %v1714
    %v1716 = vmul.f32 %v1713, %v1715
    %v1717 = vadd.f32 %v1713, %v1716
    %vm1718 = vweird.f32 %v1583
    %vm1719 = vweird.f32 %v1713
    %vm1720 = vmor %vm1718, %vm1719
    %v1721 = vsel %vm1720, %v1713, %v1717
    %v1722 = vand.u32 2147483647, %v1583
    %vm1723 = vcmp.eq.f32.partialorder %v1722, 8.507059e+37
    %v1724 = vand.u32 %v1583, 2147483648
    %v1725 = vor.u32 1.1754944e-38, %v1724
    %v1726 = vsel %vm1723, %v1725, %v1721
    %v1727 = vmul.f32 1.0, %v1726
    %v1728 = vrcp.pop %v1584
    %v1729 = vmul.f32 %v1584, %v1728
    %v1730 = vsub.f32 1.0, %v1729
    %v1731 = vmul.f32 %v1728, %v1730
    %v1732 = vadd.f32 %v1728, %v1731
    %vm1733 = vweird.f32 %v1584
    %vm1734 = vweird.f32 %v1728
    %vm1735 = vmor %vm1733, %vm1734
    %v1736 = vsel %vm1735, %v1728, %v1732
    %v1737 = vand.u32 2147483647, %v1584
    %vm1738 = vcmp.eq.f32.partialorder %v1737, 8.507059e+37
    %v1739 = vand.u32 %v1584, 2147483648
    %v1740 = vor.u32 1.1754944e-38, %v1739
    %v1741 = vsel %vm1738, %v1740, %v1736
    %v1742 = vmul.f32 1.0, %v1741
    %v1743 = vrcp.pop %v1585
    %v1744 = vmul.f32 %v1585, %v1743
    %v1745 = vsub.f32 1.0, %v1744
    %v1746 = vmul.f32 %v1743, %v1745
    %v1747 = vadd.f32 %v1743, %v1746
    %vm1748 = vweird.f32 %v1585
    %vm1749 = vweird.f32 %v1743
    %vm1750 = vmor %vm1748, %vm1749
    %v1751 = vsel %vm1750, %v1743, %v1747
    %v1752 = vand.u32 2147483647, %v1585
    %vm1753 = vcmp.eq.f32.partialorder %v1752, 8.507059e+37
    %v1754 = vand.u32 %v1585, 2147483648
    %v1755 = vor.u32 1.1754944e-38, %v1754
    %v1756 = vsel %vm1753, %v1755, %v1751
    %v1757 = vmul.f32 1.0, %v1756
    %v1758 = vrcp.pop %v1586
    %v1759 = vmul.f32 %v1586, %v1758
    %v1760 = vsub.f32 1.0, %v1759
    %v1761 = vmul.f32 %v1758, %v1760
    %v1762 = vadd.f32 %v1758, %v1761
    %vm1763 = vweird.f32 %v1586
    %vm1764 = vweird.f32 %v1758
    %vm1765 = vmor %vm1763, %vm1764
    %v1766 = vsel %vm1765, %v1758, %v1762
    %v1767 = vand.u32 2147483647, %v1586
    %vm1768 = vcmp.eq.f32.partialorder %v1767, 8.507059e+37
    %v1769 = vand.u32 %v1586, 2147483648
    %v1770 = vor.u32 1.1754944e-38, %v1769
    %v1771 = vsel %vm1768, %v1770, %v1766
    %v1772 = vmul.f32 1.0, %v1771
    %v1773 = vrcp.pop %v1587
    %v1774 = vmul.f32 %v1587, %v1773
    %v1775 = vsub.f32 1.0, %v1774
    %v1776 = vmul.f32 %v1773, %v1775
    %v1777 = vadd.f32 %v1773, %v1776
    %vm1778 = vweird.f32 %v1587
    %vm1779 = vweird.f32 %v1773
    %vm1780 = vmor %vm1778, %vm1779
    %v1781 = vsel %vm1780, %v1773, %v1777
    %v1782 = vand.u32 2147483647, %v1587
    %vm1783 = vcmp.eq.f32.partialorder %v1782, 8.507059e+37
    %v1784 = vand.u32 %v1587, 2147483648
    %v1785 = vor.u32 1.1754944e-38, %v1784
    %v1786 = vsel %vm1783, %v1785, %v1781
    %v1787 = vmul.f32 1.0, %v1786
    %v1788 = vrcp.pop %v1588
    %v1789 = vmul.f32 %v1588, %v1788
    %v1790 = vsub.f32 1.0, %v1789
    %v1791 = vmul.f32 %v1788, %v1790
    %v1792 = vadd.f32 %v1788, %v1791
    %vm1793 = vweird.f32 %v1588
    %vm1794 = vweird.f32 %v1788
    %vm1795 = vmor %vm1793, %vm1794
    %v1796 = vsel %vm1795, %v1788, %v1792
    %v1797 = vand.u32 2147483647, %v1588
    %vm1798 = vcmp.eq.f32.partialorder %v1797, 8.507059e+37
    %v1799 = vand.u32 %v1588, 2147483648
    %v1800 = vor.u32 1.1754944e-38, %v1799
    %v1801 = vsel %vm1798, %v1800, %v1796
    %v1802 = vmul.f32 1.0, %v1801
    %v1803 = vrcp.pop %v1589
    %v1804 = vmul.f32 %v1589, %v1803
    %v1805 = vsub.f32 1.0, %v1804
    %v1806 = vmul.f32 %v1803, %v1805
    %v1807 = vadd.f32 %v1803, %v1806
    %vm1808 = vweird.f32 %v1589
    %vm1809 = vweird.f32 %v1803
    %vm1810 = vmor %vm1808, %vm1809
    %v1811 = vsel %vm1810, %v1803, %v1807
    %v1812 = vand.u32 2147483647, %v1589
    %vm1813 = vcmp.eq.f32.partialorder %v1812, 8.507059e+37
    %v1814 = vand.u32 %v1589, 2147483648
    %v1815 = vor.u32 1.1754944e-38, %v1814
    %v1816 = vsel %vm1813, %v1815, %v1811
    %v1817 = vmul.f32 1.0, %v1816
    %v1818 = vrcp.pop %v1590
    %v1819 = vmul.f32 %v1590, %v1818
    %v1820 = vsub.f32 1.0, %v1819
    %v1821 = vmul.f32 %v1818, %v1820
    %v1822 = vadd.f32 %v1818, %v1821
    %vm1823 = vweird.f32 %v1590
    %vm1824 = vweird.f32 %v1818
    %vm1825 = vmor %vm1823, %vm1824
    %v1826 = vsel %vm1825, %v1818, %v1822
    %v1827 = vand.u32 2147483647, %v1590
    %vm1828 = vcmp.eq.f32.partialorder %v1827, 8.507059e+37
    %v1829 = vand.u32 %v1590, 2147483648
    %v1830 = vor.u32 1.1754944e-38, %v1829
    %v1831 = vsel %vm1828, %v1830, %v1826
    %v1832 = vmul.f32 1.0, %v1831
    %v1833 = vrcp.pop %v1591
    %v1834 = vmul.f32 %v1591, %v1833
    %v1835 = vsub.f32 1.0, %v1834
    %v1836 = vmul.f32 %v1833, %v1835
    %v1837 = vadd.f32 %v1833, %v1836
    %vm1838 = vweird.f32 %v1591
    %vm1839 = vweird.f32 %v1833
    %vm1840 = vmor %vm1838, %vm1839
    %v1841 = vsel %vm1840, %v1833, %v1837
    %v1842 = vand.u32 2147483647, %v1591
    %vm1843 = vcmp.eq.f32.partialorder %v1842, 8.507059e+37
    %v1844 = vand.u32 %v1591, 2147483648
    %v1845 = vor.u32 1.1754944e-38, %v1844
    %v1846 = vsel %vm1843, %v1845, %v1841
    %v1847 = vmul.f32 1.0, %v1846
    %v1848 = vrcp.pop %v1592
    %v1849 = vmul.f32 %v1592, %v1848
    %v1850 = vsub.f32 1.0, %v1849
    %v1851 = vmul.f32 %v1848, %v1850
    %v1852 = vadd.f32 %v1848, %v1851
    %vm1853 = vweird.f32 %v1592
    %vm1854 = vweird.f32 %v1848
    %vm1855 = vmor %vm1853, %vm1854
    %v1856 = vsel %vm1855, %v1848, %v1852
    %v1857 = vand.u32 2147483647, %v1592
    %vm1858 = vcmp.eq.f32.partialorder %v1857, 8.507059e+37
    %v1859 = vand.u32 %v1592, 2147483648
    %v1860 = vor.u32 1.1754944e-38, %v1859
    %v1861 = vsel %vm1858, %v1860, %v1856
    %v1862 = vmul.f32 1.0, %v1861
    %v1863 = vrcp.pop %v1593
    %v1864 = vmul.f32 %v1593, %v1863
    %v1865 = vsub.f32 1.0, %v1864
    %v1866 = vmul.f32 %v1863, %v1865
    %v1867 = vadd.f32 %v1863, %v1866
    %vm1868 = vweird.f32 %v1593
    %vm1869 = vweird.f32 %v1863
    %vm1870 = vmor %vm1868, %vm1869
    %v1871 = vsel %vm1870, %v1863, %v1867
    %v1872 = vand.u32 2147483647, %v1593
    %vm1873 = vcmp.eq.f32.partialorder %v1872, 8.507059e+37
    %v1874 = vand.u32 %v1593, 2147483648
    %v1875 = vor.u32 1.1754944e-38, %v1874
    %v1876 = vsel %vm1873, %v1875, %v1871
    %v1877 = vmul.f32 1.0, %v1876
    %v1878 = vrcp.pop %v1594
    %v1879 = vmul.f32 %v1594, %v1878
    %v1880 = vsub.f32 1.0, %v1879
    %v1881 = vmul.f32 %v1878, %v1880
    %v1882 = vadd.f32 %v1878, %v1881
    %vm1883 = vweird.f32 %v1594
    %vm1884 = vweird.f32 %v1878
    %vm1885 = vmor %vm1883, %vm1884
    %v1886 = vsel %vm1885, %v1878, %v1882
    %v1887 = vand.u32 2147483647, %v1594
    %vm1888 = vcmp.eq.f32.partialorder %v1887, 8.507059e+37
    %v1889 = vand.u32 %v1594, 2147483648
    %v1890 = vor.u32 1.1754944e-38, %v1889
    %v1891 = vsel %vm1888, %v1890, %v1886
    %v1892 = vmul.f32 1.0, %v1891
    %v1893 = vrcp.pop %v1595
    %v1894 = vmul.f32 %v1595, %v1893
    %v1895 = vsub.f32 1.0, %v1894
    %v1896 = vmul.f32 %v1893, %v1895
    %v1897 = vadd.f32 %v1893, %v1896
    %vm1898 = vweird.f32 %v1595
    %vm1899 = vweird.f32 %v1893
    %vm1900 = vmor %vm1898, %vm1899
    %v1901 = vsel %vm1900, %v1893, %v1897
    %v1902 = vand.u32 2147483647, %v1595
    %vm1903 = vcmp.eq.f32.partialorder %v1902, 8.507059e+37
    %v1904 = vand.u32 %v1595, 2147483648
    %v1905 = vor.u32 1.1754944e-38, %v1904
    %v1906 = vsel %vm1903, %v1905, %v1901
    %v1907 = vmul.f32 1.0, %v1906
    %v1908 = vrcp.pop %v1596
    %v1909 = vmul.f32 %v1596, %v1908
    %v1910 = vsub.f32 1.0, %v1909
    %v1911 = vmul.f32 %v1908, %v1910
    %v1912 = vadd.f32 %v1908, %v1911
    %vm1913 = vweird.f32 %v1596
    %vm1914 = vweird.f32 %v1908
    %vm1915 = vmor %vm1913, %vm1914
    %v1916 = vsel %vm1915, %v1908, %v1912
    %v1917 = vand.u32 2147483647, %v1596
    %vm1918 = vcmp.eq.f32.partialorder %v1917, 8.507059e+37
    %v1919 = vand.u32 %v1596, 2147483648
    %v1920 = vor.u32 1.1754944e-38, %v1919
    %v1921 = vsel %vm1918, %v1920, %v1916
    %v1922 = vmul.f32 1.0, %v1921
    %v1923 = vrcp.pop %v1597
    %v1924 = vmul.f32 %v1597, %v1923
    %v1925 = vsub.f32 1.0, %v1924
    %v1926 = vmul.f32 %v1923, %v1925
    %v1927 = vadd.f32 %v1923, %v1926
    %vm1928 = vweird.f32 %v1597
    %vm1929 = vweird.f32 %v1923
    %vm1930 = vmor %vm1928, %vm1929
    %v1931 = vsel %vm1930, %v1923, %v1927
    %v1932 = vand.u32 2147483647, %v1597
    %vm1933 = vcmp.eq.f32.partialorder %v1932, 8.507059e+37
    %v1934 = vand.u32 %v1597, 2147483648
    %v1935 = vor.u32 1.1754944e-38, %v1934
    %v1936 = vsel %vm1933, %v1935, %v1931
    %v1937 = vmul.f32 1.0, %v1936
    %v1938 = vrcp.pop %v1598
    %v1939 = vmul.f32 %v1598, %v1938
    %v1940 = vsub.f32 1.0, %v1939
    %v1941 = vmul.f32 %v1938, %v1940
    %v1942 = vadd.f32 %v1938, %v1941
    %vm1943 = vweird.f32 %v1598
    %vm1944 = vweird.f32 %v1938
    %vm1945 = vmor %vm1943, %vm1944
    %v1946 = vsel %vm1945, %v1938, %v1942
    %v1947 = vand.u32 2147483647, %v1598
    %vm1948 = vcmp.eq.f32.partialorder %v1947, 8.507059e+37
    %v1949 = vand.u32 %v1598, 2147483648
    %v1950 = vor.u32 1.1754944e-38, %v1949
    %v1951 = vsel %vm1948, %v1950, %v1946
    %v1952 = vmul.f32 1.0, %v1951
    %v1953 = vrcp.pop %v1599
    %v1954 = vmul.f32 %v1599, %v1953
    %v1955 = vsub.f32 1.0, %v1954
    %v1956 = vmul.f32 %v1953, %v1955
    %v1957 = vadd.f32 %v1953, %v1956
    %vm1958 = vweird.f32 %v1599
    %vm1959 = vweird.f32 %v1953
    %vm1960 = vmor %vm1958, %vm1959
    %v1961 = vsel %vm1960, %v1953, %v1957
    %v1962 = vand.u32 2147483647, %v1599
    %vm1963 = vcmp.eq.f32.partialorder %v1962, 8.507059e+37
    %v1964 = vand.u32 %v1599, 2147483648
    %v1965 = vor.u32 1.1754944e-38, %v1964
    %v1966 = vsel %vm1963, %v1965, %v1961
    %v1967 = vmul.f32 1.0, %v1966
    %v1968 = vrcp.pop %v1600
    %v1969 = vmul.f32 %v1600, %v1968
    %v1970 = vsub.f32 1.0, %v1969
    %v1971 = vmul.f32 %v1968, %v1970
    %v1972 = vadd.f32 %v1968, %v1971
    %vm1973 = vweird.f32 %v1600
    %vm1974 = vweird.f32 %v1968
    %vm1975 = vmor %vm1973, %vm1974
    %v1976 = vsel %vm1975, %v1968, %v1972
    %v1977 = vand.u32 2147483647, %v1600
    %vm1978 = vcmp.eq.f32.partialorder %v1977, 8.507059e+37
    %v1979 = vand.u32 %v1600, 2147483648
    %v1980 = vor.u32 1.1754944e-38, %v1979
    %v1981 = vsel %vm1978, %v1980, %v1976
    %v1982 = vmul.f32 1.0, %v1981
    %v1983 = vrcp.pop %v1601
    %v1984 = vmul.f32 %v1601, %v1983
    %v1985 = vsub.f32 1.0, %v1984
    %v1986 = vmul.f32 %v1983, %v1985
    %v1987 = vadd.f32 %v1983, %v1986
    %vm1988 = vweird.f32 %v1601
    %vm1989 = vweird.f32 %v1983
    %vm1990 = vmor %vm1988, %vm1989
    %v1991 = vsel %vm1990, %v1983, %v1987
    %v1992 = vand.u32 2147483647, %v1601
    %vm1993 = vcmp.eq.f32.partialorder %v1992, 8.507059e+37
    %v1994 = vand.u32 %v1601, 2147483648
    %v1995 = vor.u32 1.1754944e-38, %v1994
    %v1996 = vsel %vm1993, %v1995, %v1991
    %v1997 = vmul.f32 1.0, %v1996
    %v1998 = vrcp.pop %v1602
    %v1999 = vmul.f32 %v1602, %v1998
    %v2000 = vsub.f32 1.0, %v1999
    %v2001 = vmul.f32 %v1998, %v2000
    %v2002 = vadd.f32 %v1998, %v2001
    %vm2003 = vweird.f32 %v1602
    %vm2004 = vweird.f32 %v1998
    %vm2005 = vmor %vm2003, %vm2004
    %v2006 = vsel %vm2005, %v1998, %v2002
    %v2007 = vand.u32 2147483647, %v1602
    %vm2008 = vcmp.eq.f32.partialorder %v2007, 8.507059e+37
    %v2009 = vand.u32 %v1602, 2147483648
    %v2010 = vor.u32 1.1754944e-38, %v2009
    %v2011 = vsel %vm2008, %v2010, %v2006
    %v2012 = vmul.f32 1.0, %v2011
    %v2013 = vrcp.pop %v1603
    %v2014 = vmul.f32 %v1603, %v2013
    %v2015 = vsub.f32 1.0, %v2014
    %v2016 = vmul.f32 %v2013, %v2015
    %v2017 = vadd.f32 %v2013, %v2016
    %vm2018 = vweird.f32 %v1603
    %vm2019 = vweird.f32 %v2013
    %vm2020 = vmor %vm2018, %vm2019
    %v2021 = vsel %vm2020, %v2013, %v2017
    %v2022 = vand.u32 2147483647, %v1603
    %vm2023 = vcmp.eq.f32.partialorder %v2022, 8.507059e+37
    %v2024 = vand.u32 %v1603, 2147483648
    %v2025 = vor.u32 1.1754944e-38, %v2024
    %v2026 = vsel %vm2023, %v2025, %v2021
    %v2027 = vmul.f32 1.0, %v2026
    %v2028 = vrcp.pop %v1604
    %v2029 = vmul.f32 %v1604, %v2028
    %v2030 = vsub.f32 1.0, %v2029
    %v2031 = vmul.f32 %v2028, %v2030
    %v2032 = vadd.f32 %v2028, %v2031
    %vm2033 = vweird.f32 %v1604
    %vm2034 = vweird.f32 %v2028
    %vm2035 = vmor %vm2033, %vm2034
    %v2036 = vsel %vm2035, %v2028, %v2032
    %v2037 = vand.u32 2147483647, %v1604
    %vm2038 = vcmp.eq.f32.partialorder %v2037, 8.507059e+37
    %v2039 = vand.u32 %v1604, 2147483648
    %v2040 = vor.u32 1.1754944e-38, %v2039
    %v2041 = vsel %vm2038, %v2040, %v2036
    %v2042 = vmul.f32 1.0, %v2041
    %v2043 = vrcp.pop %v1605
    %v2044 = vmul.f32 %v1605, %v2043
    %v2045 = vsub.f32 1.0, %v2044
    %v2046 = vmul.f32 %v2043, %v2045
    %v2047 = vadd.f32 %v2043, %v2046
    %vm2048 = vweird.f32 %v1605
    %vm2049 = vweird.f32 %v2043
    %vm2050 = vmor %vm2048, %vm2049
    %v2051 = vsel %vm2050, %v2043, %v2047
    %v2052 = vand.u32 2147483647, %v1605
    %vm2053 = vcmp.eq.f32.partialorder %v2052, 8.507059e+37
    %v2054 = vand.u32 %v1605, 2147483648
    %v2055 = vor.u32 1.1754944e-38, %v2054
    %v2056 = vsel %vm2053, %v2055, %v2051
    %v2057 = vmul.f32 1.0, %v2056
    %v2058 = vrcp.pop %v1606
    %v2059 = vmul.f32 %v1606, %v2058
    %v2060 = vsub.f32 1.0, %v2059
    %v2061 = vmul.f32 %v2058, %v2060
    %v2062 = vadd.f32 %v2058, %v2061
    %vm2063 = vweird.f32 %v1606
    %vm2064 = vweird.f32 %v2058
    %vm2065 = vmor %vm2063, %vm2064
    %v2066 = vsel %vm2065, %v2058, %v2062
    %v2067 = vand.u32 2147483647, %v1606
    %vm2068 = vcmp.eq.f32.partialorder %v2067, 8.507059e+37
    %v2069 = vand.u32 %v1606, 2147483648
    %v2070 = vor.u32 1.1754944e-38, %v2069
    %v2071 = vsel %vm2068, %v2070, %v2066
    %v2072 = vmul.f32 1.0, %v2071
    %v2073 = vrcp.pop %v1607
    %v2074 = vmul.f32 %v1607, %v2073
    %v2075 = vsub.f32 1.0, %v2074
    %v2076 = vmul.f32 %v2073, %v2075
    %v2077 = vadd.f32 %v2073, %v2076
    %vm2078 = vweird.f32 %v1607
    %vm2079 = vweird.f32 %v2073
    %vm2080 = vmor %vm2078, %vm2079
    %v2081 = vsel %vm2080, %v2073, %v2077
    %v2082 = vand.u32 2147483647, %v1607
    %vm2083 = vcmp.eq.f32.partialorder %v2082, 8.507059e+37
    %v2084 = vand.u32 %v1607, 2147483648
    %v2085 = vor.u32 1.1754944e-38, %v2084
    %v2086 = vsel %vm2083, %v2085, %v2081
    %v2087 = vmul.f32 1.0, %v2086
    %v2088 = vld [vmem:[%s9] sm:$0xff]
    %v2089 = vld [vmem:[%s9 + $0x8] sm:$0xff]
    %v2090 = vld [vmem:[%s9 + $0x10] sm:$0xff]
    %v2091 = vld [vmem:[%s9 + $0x18] sm:$0xff]
    %v2092 = vld [vmem:[%s10] sm:$0xff]
    %v2093 = vld [vmem:[%s10 + $0x8] sm:$0xff]
    %v2094 = vld [vmem:[%s10 + $0x10] sm:$0xff]
    %v2095 = vld [vmem:[%s10 + $0x18] sm:$0xff]
    %2097 = vset.pattern.permute.xlu0 0
    %2098 = vperm.xlu0 %2097, %v2092
    %v2099 = vpop.permute.xlu0 %2098
    %2102 = vset.pattern.permute.xlu0 0
    %2103 = vperm.xlu0 %2102, %v2093
    %v2104 = vpop.permute.xlu0 %2103
    %2107 = vset.pattern.permute.xlu0 0
    %2108 = vperm.xlu0 %2107, %v2094
    %v2109 = vpop.permute.xlu0 %2108
    %2112 = vset.pattern.permute.xlu0 0
    %2113 = vperm.xlu0 %2112, %v2095
    %v2114 = vpop.permute.xlu0 %2113
    %v2116 = vmul.f32 %v2099, %v1622
    %v2117 = vmul.f32 %v2099, %v1637
    %v2118 = vmul.f32 %v2099, %v1652
    %v2119 = vmul.f32 %v2099, %v1667
    %v2120 = vmul.f32 %v2099, %v1682
    %v2121 = vmul.f32 %v2099, %v1697
    %v2122 = vmul.f32 %v2099, %v1712
    %v2123 = vmul.f32 %v2099, %v1727
    %v2124 = vmul.f32 %v2104, %v1742
    %v2125 = vmul.f32 %v2104, %v1757
    %v2126 = vmul.f32 %v2104, %v1772
    %v2127 = vmul.f32 %v2104, %v1787
    %v2128 = vmul.f32 %v2104, %v1802
    %v2129 = vmul.f32 %v2104, %v1817
    %v2130 = vmul.f32 %v2104, %v1832
    %v2131 = vmul.f32 %v2104, %v1847
    %v2132 = vmul.f32 %v2109, %v1862
    %v2133 = vmul.f32 %v2109, %v1877
    %v2134 = vmul.f32 %v2109, %v1892
    %v2135 = vmul.f32 %v2109, %v1907
    %v2136 = vmul.f32 %v2109, %v1922
    %v2137 = vmul.f32 %v2109, %v1937
    %v2138 = vmul.f32 %v2109, %v1952
    %v2139 = vmul.f32 %v2109, %v1967
    %v2140 = vmul.f32 %v2114, %v1982
    %v2141 = vmul.f32 %v2114, %v1997
    %v2142 = vmul.f32 %v2114, %v2012
    %v2143 = vmul.f32 %v2114, %v2027
    %v2144 = vmul.f32 %v2114, %v2042
    %v2145 = vmul.f32 %v2114, %v2057
    %v2146 = vmul.f32 %v2114, %v2072
    %v2147 = vmul.f32 %v2114, %v2087
    %2149 = vset.pattern.permute.xlu0 0
    %2150 = vperm.xlu0 %2149, %v2088
    %v2151 = vpop.permute.xlu0 %2150
    %2154 = vset.pattern.permute.xlu0 0
    %2155 = vperm.xlu0 %2154, %v2089
    %v2156 = vpop.permute.xlu0 %2155
    %2159 = vset.pattern.permute.xlu0 0
    %2160 = vperm.xlu0 %2159, %v2090
    %v2161 = vpop.permute.xlu0 %2160
    %2164 = vset.pattern.permute.xlu0 0
    %2165 = vperm.xlu0 %2164, %v2091
    %v2166 = vpop.permute.xlu0 %2165
    %v2168 = vadd.f32 %v2151, %v2116
    %v2169 = vadd.f32 %v2151, %v2117
    %v2170 = vadd.f32 %v2151, %v2118
    %v2171 = vadd.f32 %v2151, %v2119
    %v2172 = vadd.f32 %v2151, %v2120
    %v2173 = vadd.f32 %v2151, %v2121
    %v2174 = vadd.f32 %v2151, %v2122
    %v2175 = vadd.f32 %v2151, %v2123
    %v2176 = vadd.f32 %v2156, %v2124
    %v2177 = vadd.f32 %v2156, %v2125
    %v2178 = vadd.f32 %v2156, %v2126
    %v2179 = vadd.f32 %v2156, %v2127
    %v2180 = vadd.f32 %v2156, %v2128
    %v2181 = vadd.f32 %v2156, %v2129
    %v2182 = vadd.f32 %v2156, %v2130
    %v2183 = vadd.f32 %v2156, %v2131
    %v2184 = vadd.f32 %v2161, %v2132
    %v2185 = vadd.f32 %v2161, %v2133
    %v2186 = vadd.f32 %v2161, %v2134
    %v2187 = vadd.f32 %v2161, %v2135
    %v2188 = vadd.f32 %v2161, %v2136
    %v2189 = vadd.f32 %v2161, %v2137
    %v2190 = vadd.f32 %v2161, %v2138
    %v2191 = vadd.f32 %v2161, %v2139
    %v2192 = vadd.f32 %v2166, %v2140
    %v2193 = vadd.f32 %v2166, %v2141
    %v2194 = vadd.f32 %v2166, %v2142
    %v2195 = vadd.f32 %v2166, %v2143
    %v2196 = vadd.f32 %v2166, %v2144
    %v2197 = vadd.f32 %v2166, %v2145
    %v2198 = vadd.f32 %v2166, %v2146
    %v2199 = vadd.f32 %v2166, %v2147
    %v2200 = vmul.f32 %v1234, %v2168
    %v2201 = vmul.f32 %v1263, %v2169
    %v2202 = vmul.f32 %v1292, %v2170
    %v2203 = vmul.f32 %v1321, %v2171
    %v2204 = vmul.f32 %v1350, %v2172
    %v2205 = vmul.f32 %v1379, %v2173
    %v2206 = vmul.f32 %v1408, %v2174
    %v2207 = vmul.f32 %v1437, %v2175
    %v2208 = vmul.f32 %v1237, %v2176
    %v2209 = vmul.f32 %v1266, %v2177
    %v2210 = vmul.f32 %v1295, %v2178
    %v2211 = vmul.f32 %v1324, %v2179
    %v2212 = vmul.f32 %v1353, %v2180
    %v2213 = vmul.f32 %v1382, %v2181
    %v2214 = vmul.f32 %v1411, %v2182
    %v2215 = vmul.f32 %v1440, %v2183
    %v2216 = vmul.f32 %v1240, %v2184
    %v2217 = vmul.f32 %v1269, %v2185
    %v2218 = vmul.f32 %v1298, %v2186
    %v2219 = vmul.f32 %v1327, %v2187
    %v2220 = vmul.f32 %v1356, %v2188
    %v2221 = vmul.f32 %v1385, %v2189
    %v2222 = vmul.f32 %v1414, %v2190
    %v2223 = vmul.f32 %v1443, %v2191
    %v2224 = vmul.f32 %v1243, %v2192
    %v2225 = vmul.f32 %v1272, %v2193
    %v2226 = vmul.f32 %v1301, %v2194
    %v2227 = vmul.f32 %v1330, %v2195
    %v2228 = vmul.f32 %v1359, %v2196
    %v2229 = vmul.f32 %v1388, %v2197
    %v2230 = vmul.f32 %v1417, %v2198
    %v2231 = vmul.f32 %v1446, %v2199
    %v2232 = vld [vmem:[%s11] sm:$0xff]
    %v2233 = vld [vmem:[%s11 + $0x8] sm:$0xff]
    %v2234 = vld [vmem:[%s11 + $0x10] sm:$0xff]
    %v2235 = vld [vmem:[%s11 + $0x18] sm:$0xff]
    %2237 = vset.pattern.permute.xlu0 0
    %2238 = vperm.xlu0 %2237, %v2232
    %v2239 = vpop.permute.xlu0 %2238
    %2242 = vset.pattern.permute.xlu0 0
    %2243 = vperm.xlu0 %2242, %v2233
    %v2244 = vpop.permute.xlu0 %2243
    %2247 = vset.pattern.permute.xlu0 0
    %2248 = vperm.xlu0 %2247, %v2234
    %v2249 = vpop.permute.xlu0 %2248
    %2252 = vset.pattern.permute.xlu0 0
    %2253 = vperm.xlu0 %2252, %v2235
    %v2254 = vpop.permute.xlu0 %2253
    %v2256 = vmul.f32 %v2200, %v2239
    %v2257 = vmul.f32 %v2201, %v2239
    %v2258 = vmul.f32 %v2202, %v2239
    %v2259 = vmul.f32 %v2203, %v2239
    %v2260 = vmul.f32 %v2204, %v2239
    %v2261 = vmul.f32 %v2205, %v2239
    %v2262 = vmul.f32 %v2206, %v2239
    %v2263 = vmul.f32 %v2207, %v2239
    %v2264 = vmul.f32 %v2208, %v2244
    %v2265 = vmul.f32 %v2209, %v2244
    %v2266 = vmul.f32 %v2210, %v2244
    %v2267 = vmul.f32 %v2211, %v2244
    %v2268 = vmul.f32 %v2212, %v2244
    %v2269 = vmul.f32 %v2213, %v2244
    %v2270 = vmul.f32 %v2214, %v2244
    %v2271 = vmul.f32 %v2215, %v2244
    %v2272 = vmul.f32 %v2216, %v2249
    %v2273 = vmul.f32 %v2217, %v2249
    %v2274 = vmul.f32 %v2218, %v2249
    %v2275 = vmul.f32 %v2219, %v2249
    %v2276 = vmul.f32 %v2220, %v2249
    %v2277 = vmul.f32 %v2221, %v2249
    %v2278 = vmul.f32 %v2222, %v2249
    %v2279 = vmul.f32 %v2223, %v2249
    %v2280 = vmul.f32 %v2224, %v2254
    %v2281 = vmul.f32 %v2225, %v2254
    %v2282 = vmul.f32 %v2226, %v2254
    %v2283 = vmul.f32 %v2227, %v2254
    %v2284 = vmul.f32 %v2228, %v2254
    %v2285 = vmul.f32 %v2229, %v2254
    %v2286 = vmul.f32 %v2230, %v2254
    %v2287 = vmul.f32 %v2231, %v2254
    %v2288 = vadd.f32 %v2256, %v2264
    %v2289 = vadd.f32 %v2288, %v2272
    %v2290 = vadd.f32 %v2289, %v2280
    %v2291 = vrot.slane %v2290, 4
    %v2292 = vadd.f32 %v2290, %v2291
    %v2293 = vrot.slane %v2292, 2
    %v2294 = vadd.f32 %v2292, %v2293
    %v2295 = vrot.slane %v2294, 1
    %v2296 = vadd.f32 %v2294, %v2295
    %v2297 = vadd.f32 %v2257, %v2265
    %v2298 = vadd.f32 %v2297, %v2273
    %v2299 = vadd.f32 %v2298, %v2281
    %v2300 = vrot.slane %v2299, 4
    %v2301 = vadd.f32 %v2299, %v2300
    %v2302 = vrot.slane %v2301, 2
    %v2303 = vadd.f32 %v2301, %v2302
    %v2304 = vrot.slane %v2303, 1
    %v2305 = vadd.f32 %v2303, %v2304
    %v2306 = vadd.f32 %v2258, %v2266
    %v2307 = vadd.f32 %v2306, %v2274
    %v2308 = vadd.f32 %v2307, %v2282
    %v2309 = vrot.slane %v2308, 4
    %v2310 = vadd.f32 %v2308, %v2309
    %v2311 = vrot.slane %v2310, 2
    %v2312 = vadd.f32 %v2310, %v2311
    %v2313 = vrot.slane %v2312, 1
    %v2314 = vadd.f32 %v2312, %v2313
    %v2315 = vadd.f32 %v2259, %v2267
    %v2316 = vadd.f32 %v2315, %v2275
    %v2317 = vadd.f32 %v2316, %v2283
    %v2318 = vrot.slane %v2317, 4
    %v2319 = vadd.f32 %v2317, %v2318
    %v2320 = vrot.slane %v2319, 2
    %v2321 = vadd.f32 %v2319, %v2320
    %v2322 = vrot.slane %v2321, 1
    %v2323 = vadd.f32 %v2321, %v2322
    %v2324 = vadd.f32 %v2260, %v2268
    %v2325 = vadd.f32 %v2324, %v2276
    %v2326 = vadd.f32 %v2325, %v2284
    %v2327 = vrot.slane %v2326, 4
    %v2328 = vadd.f32 %v2326, %v2327
    %v2329 = vrot.slane %v2328, 2
    %v2330 = vadd.f32 %v2328, %v2329
    %v2331 = vrot.slane %v2330, 1
    %v2332 = vadd.f32 %v2330, %v2331
    %v2333 = vadd.f32 %v2261, %v2269
    %v2334 = vadd.f32 %v2333, %v2277
    %v2335 = vadd.f32 %v2334, %v2285
    %v2336 = vrot.slane %v2335, 4
    %v2337 = vadd.f32 %v2335, %v2336
    %v2338 = vrot.slane %v2337, 2
    %v2339 = vadd.f32 %v2337, %v2338
    %v2340 = vrot.slane %v2339, 1
    %v2341 = vadd.f32 %v2339, %v2340
    %v2342 = vadd.f32 %v2262, %v2270
    %v2343 = vadd.f32 %v2342, %v2278
    %v2344 = vadd.f32 %v2343, %v2286
    %v2345 = vrot.slane %v2344, 4
    %v2346 = vadd.f32 %v2344, %v2345
    %v2347 = vrot.slane %v2346, 2
    %v2348 = vadd.f32 %v2346, %v2347
    %v2349 = vrot.slane %v2348, 1
    %v2350 = vadd.f32 %v2348, %v2349
    %v2351 = vadd.f32 %v2263, %v2271
    %v2352 = vadd.f32 %v2351, %v2279
    %v2353 = vadd.f32 %v2352, %v2287
    %v2354 = vrot.slane %v2353, 4
    %v2355 = vadd.f32 %v2353, %v2354
    %v2356 = vrot.slane %v2355, 2
    %v2357 = vadd.f32 %v2355, %v2356
    %v2358 = vrot.slane %v2357, 1
    %v2359 = vadd.f32 %v2357, %v2358
    %v2360 = vld [vmem:[#allocation2] sm:$0x1]
    %2362 = vset.pattern.permute.xlu0 0
    %2363 = vperm.xlu0 %2362, %v2360
    %v2364 = vpop.permute.xlu0 %2363
    %v2366 = vperm.slane %v2364, 0
    %v2367 = vadd.f32 %v2296, %v2366
    %v2368 = vadd.f32 %v2305, %v2366
    %v2369 = vadd.f32 %v2314, %v2366
    %v2370 = vadd.f32 %v2323, %v2366
    %v2371 = vadd.f32 %v2332, %v2366
    %v2372 = vadd.f32 %v2341, %v2366
    %v2373 = vadd.f32 %v2350, %v2366
    %v2374 = vadd.f32 %v2359, %v2366
    %v2375 = vxor.u32 %v2367, 2147483648
    %v2376 = vxor.u32 %v2368, 2147483648
    %v2377 = vxor.u32 %v2369, 2147483648
    %v2378 = vxor.u32 %v2370, 2147483648
    %v2379 = vxor.u32 %v2371, 2147483648
    %v2380 = vxor.u32 %v2372, 2147483648
    %v2381 = vxor.u32 %v2373, 2147483648
    %v2382 = vxor.u32 %v2374, 2147483648
    %v2383 = vmul.f32 %v2375, 1.442695
    %v2384 = vpow.pop %v2383
    %v2385 = vmul.f32 %v2376, 1.442695
    %v2386 = vpow.pop %v2385
    %v2387 = vmul.f32 %v2377, 1.442695
    %v2388 = vpow.pop %v2387
    %v2389 = vmul.f32 %v2378, 1.442695
    %v2390 = vpow.pop %v2389
    %v2391 = vmul.f32 %v2379, 1.442695
    %v2392 = vpow.pop %v2391
    %v2393 = vmul.f32 %v2380, 1.442695
    %v2394 = vpow.pop %v2393
    %v2395 = vmul.f32 %v2381, 1.442695
    %v2396 = vpow.pop %v2395
    %v2397 = vmul.f32 %v2382, 1.442695
    %v2398 = vpow.pop %v2397
    %v2399 = vadd.f32 %v2384, 1.0
    %v2400 = vadd.f32 %v2386, 1.0
    %v2401 = vadd.f32 %v2388, 1.0
    %v2402 = vadd.f32 %v2390, 1.0
    %v2403 = vadd.f32 %v2392, 1.0
    %v2404 = vadd.f32 %v2394, 1.0
    %v2405 = vadd.f32 %v2396, 1.0
    %v2406 = vadd.f32 %v2398, 1.0
    %v2407 = vrcp.pop %v2399
    %v2408 = vmul.f32 %v2399, %v2407
    %v2409 = vsub.f32 1.0, %v2408
    %v2410 = vmul.f32 %v2407, %v2409
    %v2411 = vadd.f32 %v2407, %v2410
    %vm2412 = vweird.f32 %v2399
    %vm2413 = vweird.f32 %v2407
    %vm2414 = vmor %vm2412, %vm2413
    %v2415 = vsel %vm2414, %v2407, %v2411
    %v2416 = vand.u32 2147483647, %v2399
    %vm2417 = vcmp.eq.f32.partialorder %v2416, 8.507059e+37
    %v2418 = vand.u32 %v2399, 2147483648
    %v2419 = vor.u32 1.1754944e-38, %v2418
    %v2420 = vsel %vm2417, %v2419, %v2415
    %v2421 = vmul.f32 1.0, %v2420
    %v2422 = vrcp.pop %v2400
    %v2423 = vmul.f32 %v2400, %v2422
    %v2424 = vsub.f32 1.0, %v2423
    %v2425 = vmul.f32 %v2422, %v2424
    %v2426 = vadd.f32 %v2422, %v2425
    %vm2427 = vweird.f32 %v2400
    %vm2428 = vweird.f32 %v2422
    %vm2429 = vmor %vm2427, %vm2428
    %v2430 = vsel %vm2429, %v2422, %v2426
    %v2431 = vand.u32 2147483647, %v2400
    %vm2432 = vcmp.eq.f32.partialorder %v2431, 8.507059e+37
    %v2433 = vand.u32 %v2400, 2147483648
    %v2434 = vor.u32 1.1754944e-38, %v2433
    %v2435 = vsel %vm2432, %v2434, %v2430
    %v2436 = vmul.f32 1.0, %v2435
    %v2437 = vrcp.pop %v2401
    %v2438 = vmul.f32 %v2401, %v2437
    %v2439 = vsub.f32 1.0, %v2438
    %v2440 = vmul.f32 %v2437, %v2439
    %v2441 = vadd.f32 %v2437, %v2440
    %vm2442 = vweird.f32 %v2401
    %vm2443 = vweird.f32 %v2437
    %vm2444 = vmor %vm2442, %vm2443
    %v2445 = vsel %vm2444, %v2437, %v2441
    %v2446 = vand.u32 2147483647, %v2401
    %vm2447 = vcmp.eq.f32.partialorder %v2446, 8.507059e+37
    %v2448 = vand.u32 %v2401, 2147483648
    %v2449 = vor.u32 1.1754944e-38, %v2448
    %v2450 = vsel %vm2447, %v2449, %v2445
    %v2451 = vmul.f32 1.0, %v2450
    %v2452 = vrcp.pop %v2402
    %v2453 = vmul.f32 %v2402, %v2452
    %v2454 = vsub.f32 1.0, %v2453
    %v2455 = vmul.f32 %v2452, %v2454
    %v2456 = vadd.f32 %v2452, %v2455
    %vm2457 = vweird.f32 %v2402
    %vm2458 = vweird.f32 %v2452
    %vm2459 = vmor %vm2457, %vm2458
    %v2460 = vsel %vm2459, %v2452, %v2456
    %v2461 = vand.u32 2147483647, %v2402
    %vm2462 = vcmp.eq.f32.partialorder %v2461, 8.507059e+37
    %v2463 = vand.u32 %v2402, 2147483648
    %v2464 = vor.u32 1.1754944e-38, %v2463
    %v2465 = vsel %vm2462, %v2464, %v2460
    %v2466 = vmul.f32 1.0, %v2465
    %v2467 = vrcp.pop %v2403
    %v2468 = vmul.f32 %v2403, %v2467
    %v2469 = vsub.f32 1.0, %v2468
    %v2470 = vmul.f32 %v2467, %v2469
    %v2471 = vadd.f32 %v2467, %v2470
    %vm2472 = vweird.f32 %v2403
    %vm2473 = vweird.f32 %v2467
    %vm2474 = vmor %vm2472, %vm2473
    %v2475 = vsel %vm2474, %v2467, %v2471
    %v2476 = vand.u32 2147483647, %v2403
    %vm2477 = vcmp.eq.f32.partialorder %v2476, 8.507059e+37
    %v2478 = vand.u32 %v2403, 2147483648
    %v2479 = vor.u32 1.1754944e-38, %v2478
    %v2480 = vsel %vm2477, %v2479, %v2475
    %v2481 = vmul.f32 1.0, %v2480
    %v2482 = vrcp.pop %v2404
    %v2483 = vmul.f32 %v2404, %v2482
    %v2484 = vsub.f32 1.0, %v2483
    %v2485 = vmul.f32 %v2482, %v2484
    %v2486 = vadd.f32 %v2482, %v2485
    %vm2487 = vweird.f32 %v2404
    %vm2488 = vweird.f32 %v2482
    %vm2489 = vmor %vm2487, %vm2488
    %v2490 = vsel %vm2489, %v2482, %v2486
    %v2491 = vand.u32 2147483647, %v2404
    %vm2492 = vcmp.eq.f32.partialorder %v2491, 8.507059e+37
    %v2493 = vand.u32 %v2404, 2147483648
    %v2494 = vor.u32 1.1754944e-38, %v2493
    %v2495 = vsel %vm2492, %v2494, %v2490
    %v2496 = vmul.f32 1.0, %v2495
    %v2497 = vrcp.pop %v2405
    %v2498 = vmul.f32 %v2405, %v2497
    %v2499 = vsub.f32 1.0, %v2498
    %v2500 = vmul.f32 %v2497, %v2499
    %v2501 = vadd.f32 %v2497, %v2500
    %vm2502 = vweird.f32 %v2405
    %vm2503 = vweird.f32 %v2497
    %vm2504 = vmor %vm2502, %vm2503
    %v2505 = vsel %vm2504, %v2497, %v2501
    %v2506 = vand.u32 2147483647, %v2405
    %vm2507 = vcmp.eq.f32.partialorder %v2506, 8.507059e+37
    %v2508 = vand.u32 %v2405, 2147483648
    %v2509 = vor.u32 1.1754944e-38, %v2508
    %v2510 = vsel %vm2507, %v2509, %v2505
    %v2511 = vmul.f32 1.0, %v2510
    %v2512 = vrcp.pop %v2406
    %v2513 = vmul.f32 %v2406, %v2512
    %v2514 = vsub.f32 1.0, %v2513
    %v2515 = vmul.f32 %v2512, %v2514
    %v2516 = vadd.f32 %v2512, %v2515
    %vm2517 = vweird.f32 %v2406
    %vm2518 = vweird.f32 %v2512
    %vm2519 = vmor %vm2517, %vm2518
    %v2520 = vsel %vm2519, %v2512, %v2516
    %v2521 = vand.u32 2147483647, %v2406
    %vm2522 = vcmp.eq.f32.partialorder %v2521, 8.507059e+37
    %v2523 = vand.u32 %v2406, 2147483648
    %v2524 = vor.u32 1.1754944e-38, %v2523
    %v2525 = vsel %vm2522, %v2524, %v2520
    %v2526 = vmul.f32 1.0, %v2525
    %s2527 = scalar_lea.vmem %s1, 16
    %v2528 = vld [vmem:[%s2527] sm:$0xff]
    %v2529 = vld [vmem:[%s2527 + $0x8] sm:$0xff]
    %v2530 = vmul.f32 %v2421, %v2528
    %v2531 = vmul.f32 %v2421, %v2529
    %v2532 = vadd.f32 %v2530, 0.0
    %v2533 = vadd.f32 %v2531, 0.0
    %s2534 = scalar_lea.vmem %s1, 32
    %v2535 = vld [vmem:[%s2534] sm:$0xff]
    %v2536 = vld [vmem:[%s2534 + $0x8] sm:$0xff]
    %v2537 = vmul.f32 %v2436, %v2535
    %v2538 = vmul.f32 %v2436, %v2536
    %v2539 = vadd.f32 %v2532, %v2537
    %v2540 = vadd.f32 %v2533, %v2538
    %s2541 = scalar_lea.vmem %s1, 48
    %v2542 = vld [vmem:[%s2541] sm:$0xff]
    %v2543 = vld [vmem:[%s2541 + $0x8] sm:$0xff]
    %v2544 = vmul.f32 %v2451, %v2542
    %v2545 = vmul.f32 %v2451, %v2543
    %v2546 = vadd.f32 %v2539, %v2544
    %v2547 = vadd.f32 %v2540, %v2545
    %s2548 = scalar_lea.vmem %s1, 64
    %v2549 = vld [vmem:[%s2548] sm:$0xff]
    %v2550 = vld [vmem:[%s2548 + $0x8] sm:$0xff]
    %v2551 = vmul.f32 %v2466, %v2549
    %v2552 = vmul.f32 %v2466, %v2550
    %v2553 = vadd.f32 %v2546, %v2551
    %v2554 = vadd.f32 %v2547, %v2552
    %s2555 = scalar_lea.vmem %s1, 80
    %v2556 = vld [vmem:[%s2555] sm:$0xff]
    %v2557 = vld [vmem:[%s2555 + $0x8] sm:$0xff]
    %v2558 = vmul.f32 %v2481, %v2556
    %v2559 = vmul.f32 %v2481, %v2557
    %v2560 = vadd.f32 %v2553, %v2558
    %v2561 = vadd.f32 %v2554, %v2559
    %s2562 = scalar_lea.vmem %s1, 96
    %v2563 = vld [vmem:[%s2562] sm:$0xff]
    %v2564 = vld [vmem:[%s2562 + $0x8] sm:$0xff]
    %v2565 = vmul.f32 %v2496, %v2563
    %v2566 = vmul.f32 %v2496, %v2564
    %v2567 = vadd.f32 %v2560, %v2565
    %v2568 = vadd.f32 %v2561, %v2566
    %s2569 = scalar_lea.vmem %s1, 112
    %v2570 = vld [vmem:[%s2569] sm:$0xff]
    %v2571 = vld [vmem:[%s2569 + $0x8] sm:$0xff]
    %v2572 = vmul.f32 %v2511, %v2570
    %v2573 = vmul.f32 %v2511, %v2571
    %v2574 = vadd.f32 %v2567, %v2572
    %v2575 = vadd.f32 %v2568, %v2573
    %s2576 = scalar_lea.vmem %s1, 128
    %v2577 = vld [vmem:[%s2576] sm:$0xff]
    %v2578 = vld [vmem:[%s2576 + $0x8] sm:$0xff]
    %v2579 = vmul.f32 %v2526, %v2577
    %v2580 = vmul.f32 %v2526, %v2578
    %v2581 = vadd.f32 %v2574, %v2579
    %v2582 = vadd.f32 %v2575, %v2580
    %v2583 = vld [vmem:[#allocation7] sm:$0xff]
    %v2584 = vld [vmem:[#allocation7 + $0x8] sm:$0xff]
    %v2585 = vld [vmem:[#allocation7 + $0x10] sm:$0xff]
    %v2586 = vld [vmem:[#allocation7 + $0x18] sm:$0xff]
    %v2587 = vld [vmem:[#allocation7 + $0x20] sm:$0xff]
    %v2588 = vld [vmem:[#allocation7 + $0x28] sm:$0xff]
    %v2589 = vld [vmem:[#allocation7 + $0x30] sm:$0xff]
    %v2590 = vld [vmem:[#allocation7 + $0x38] sm:$0xff]
    %v2591 = vld [vmem:[#allocation7 + $0x40] sm:$0xff]
    %v2592 = vld [vmem:[#allocation7 + $0x48] sm:$0xff]
    %v2593 = vld [vmem:[#allocation7 + $0x50] sm:$0xff]
    %v2594 = vld [vmem:[#allocation7 + $0x58] sm:$0xff]
    %v2595 = vld [vmem:[#allocation7 + $0x60] sm:$0xff]
    %v2596 = vld [vmem:[#allocation7 + $0x68] sm:$0xff]
    %v2597 = vld [vmem:[#allocation7 + $0x70] sm:$0xff]
    %v2598 = vld [vmem:[#allocation7 + $0x78] sm:$0xff]
    %v2599 = vld [vmem:[#allocation4] sm:$0xff]
    %v2600 = vld [vmem:[#allocation4 + $0x8] sm:$0xff]
    %v2601 = vld [vmem:[#allocation4 + $0x10] sm:$0xff]
    %v2602 = vld [vmem:[#allocation4 + $0x18] sm:$0xff]
    %v2603 = vld [vmem:[#allocation4 + $0x20] sm:$0xff]
    %v2604 = vld [vmem:[#allocation4 + $0x28] sm:$0xff]
    %v2605 = vld [vmem:[#allocation4 + $0x30] sm:$0xff]
    %v2606 = vld [vmem:[#allocation4 + $0x38] sm:$0xff]
    %v2607 = vld [vmem:[#allocation4 + $0x40] sm:$0xff]
    %v2608 = vld [vmem:[#allocation4 + $0x48] sm:$0xff]
    %v2609 = vld [vmem:[#allocation4 + $0x50] sm:$0xff]
    %v2610 = vld [vmem:[#allocation4 + $0x58] sm:$0xff]
    %v2611 = vld [vmem:[#allocation4 + $0x60] sm:$0xff]
    %v2612 = vld [vmem:[#allocation4 + $0x68] sm:$0xff]
    %v2613 = vld [vmem:[#allocation4 + $0x70] sm:$0xff]
    %v2614 = vld [vmem:[#allocation4 + $0x78] sm:$0xff]
    %v2615 = vld [vmem:[%s14] sm:$0xff]
    %v2616 = vld [vmem:[%s14 + $0x8] sm:$0xff]
    %v2617 = vld [vmem:[%s14 + $0x10] sm:$0xff]
    %v2618 = vld [vmem:[%s14 + $0x18] sm:$0xff]
    %v2619 = vld [vmem:[%s14 + $0x20] sm:$0xff]
    %v2620 = vld [vmem:[%s14 + $0x28] sm:$0xff]
    %v2621 = vld [vmem:[%s14 + $0x30] sm:$0xff]
    %v2622 = vld [vmem:[%s14 + $0x38] sm:$0xff]
    %v2623 = vld [vmem:[%s14 + $0x40] sm:$0xff]
    %v2624 = vld [vmem:[%s14 + $0x48] sm:$0xff]
    %v2625 = vld [vmem:[%s14 + $0x50] sm:$0xff]
    %v2626 = vld [vmem:[%s14 + $0x58] sm:$0xff]
    %v2627 = vld [vmem:[%s14 + $0x60] sm:$0xff]
    %v2628 = vld [vmem:[%s14 + $0x68] sm:$0xff]
    %v2629 = vld [vmem:[%s14 + $0x70] sm:$0xff]
    %v2630 = vld [vmem:[%s14 + $0x78] sm:$0xff]
    %v2632 = vsel %vm146, %v2615, 0
    %v2635 = vsel %vm146, %v2616, 0
    %v2638 = vsel %vm146, %v2617, 0
    %v2641 = vsel %vm146, %v2618, 0
    %v2644 = vsel %vm146, %v2619, 0
    %v2647 = vsel %vm146, %v2620, 0
    %v2650 = vsel %vm146, %v2621, 0
    %v2653 = vsel %vm146, %v2622, 0
    %v2656 = vsel %vm146, %v2623, 0
    %v2659 = vsel %vm146, %v2624, 0
    %v2662 = vsel %vm146, %v2625, 0
    %v2665 = vsel %vm146, %v2626, 0
    %v2668 = vsel %vm146, %v2627, 0
    %v2671 = vsel %vm146, %v2628, 0
    %v2674 = vsel %vm146, %v2629, 0
    %v2677 = vsel %vm146, %v2630, 0
    %2679 = vmatpush.msra.mxu0 0.0
    %2680 = vmatpush.msra.mxu0 0.0
    %2681 = vmatpush.msra.mxu0 0.0
    %2682 = vmatpush.msra.mxu0 0.0
    %2683 = vmatpush.msra.mxu0 0.0
    %2684 = vmatpush.msra.mxu0 0.0
    %2685 = vmatpush.msra.mxu0 0.0
    %2686 = vmatpush.msra.mxu0 0.0
    %2687 = vmatpush.msra.mxu0 0.0
    %2688 = vmatpush.msra.mxu0 0.0
    %2689 = vmatpush.msra.mxu0 0.0
    %2690 = vmatpush.msra.mxu0 0.0
    %2691 = vmatpush.msra.mxu0 0.0
    %2692 = vmatpush.msra.mxu0 0.0
    %2693 = vmatpush.msra.mxu0 %v2582
    %2694 = vmatpush.msra.mxu0 %v2581
    %2695 = vmatmul.f32.gmra.mxu0 %v2632
    %v2696 = vpop.f32.mrf.mxu0
    %v2697 = vadd.f32 0.0, %v2696
    %2698 = vmatmul.f32.gmra.mxu0 %v2635
    %v2699 = vpop.f32.mrf.mxu0
    %v2700 = vadd.f32 0.0, %v2699
    %2701 = vmatmul.f32.gmra.mxu0 %v2638
    %v2702 = vpop.f32.mrf.mxu0
    %v2703 = vadd.f32 0.0, %v2702
    %2704 = vmatmul.f32.gmra.mxu0 %v2641
    %v2705 = vpop.f32.mrf.mxu0
    %v2706 = vadd.f32 0.0, %v2705
    %2707 = vmatmul.f32.gmra.mxu0 %v2644
    %v2708 = vpop.f32.mrf.mxu0
    %v2709 = vadd.f32 0.0, %v2708
    %2710 = vmatmul.f32.gmra.mxu0 %v2647
    %v2711 = vpop.f32.mrf.mxu0
    %v2712 = vadd.f32 0.0, %v2711
    %2713 = vmatmul.f32.gmra.mxu0 %v2650
    %v2714 = vpop.f32.mrf.mxu0
    %v2715 = vadd.f32 0.0, %v2714
    %2716 = vmatmul.f32.gmra.mxu0 %v2653
    %v2717 = vpop.f32.mrf.mxu0
    %v2718 = vadd.f32 0.0, %v2717
    %2719 = vmatmul.f32.gmra.mxu0 %v2656
    %v2720 = vpop.f32.mrf.mxu0
    %v2721 = vadd.f32 0.0, %v2720
    %2722 = vmatmul.f32.gmra.mxu0 %v2659
    %v2723 = vpop.f32.mrf.mxu0
    %v2724 = vadd.f32 0.0, %v2723
    %2725 = vmatmul.f32.gmra.mxu0 %v2662
    %v2726 = vpop.f32.mrf.mxu0
    %v2727 = vadd.f32 0.0, %v2726
    %2728 = vmatmul.f32.gmra.mxu0 %v2665
    %v2729 = vpop.f32.mrf.mxu0
    %v2730 = vadd.f32 0.0, %v2729
    %2731 = vmatmul.f32.gmra.mxu0 %v2668
    %v2732 = vpop.f32.mrf.mxu0
    %v2733 = vadd.f32 0.0, %v2732
    %2734 = vmatmul.f32.gmra.mxu0 %v2671
    %v2735 = vpop.f32.mrf.mxu0
    %v2736 = vadd.f32 0.0, %v2735
    %2737 = vmatmul.f32.gmra.mxu0 %v2674
    %v2738 = vpop.f32.mrf.mxu0
    %v2739 = vadd.f32 0.0, %v2738
    %2740 = vmatmul.f32.gmra.mxu0 %v2677
    %v2741 = vpop.f32.mrf.mxu0
    %v2742 = vadd.f32 0.0, %v2741
    %2743 = vdwg.mxu0
    %2744 = vmatpush.msra.mxu0 %v2614
    %2745 = vmatpush.msra.mxu0 %v2613
    %2746 = vmatpush.msra.mxu0 %v2612
    %2747 = vmatpush.msra.mxu0 %v2611
    %2748 = vmatpush.msra.mxu0 %v2610
    %2749 = vmatpush.msra.mxu0 %v2609
    %2750 = vmatpush.msra.mxu0 %v2608
    %2751 = vmatpush.msra.mxu0 %v2607
    %2752 = vmatpush.msra.mxu0 %v2606
    %2753 = vmatpush.msra.mxu0 %v2605
    %2754 = vmatpush.msra.mxu0 %v2604
    %2755 = vmatpush.msra.mxu0 %v2603
    %2756 = vmatpush.msra.mxu0 %v2602
    %2757 = vmatpush.msra.mxu0 %v2601
    %2758 = vmatpush.msra.mxu0 %v2600
    %2759 = vmatpush.msra.mxu0 %v2599
    %2760 = vmatmul.f32.gmra.mxu0 %v2583
    %v2761 = vpop.f32.mrf.mxu0
    %v2762 = vadd.f32 %v2697, %v2761
    %2763 = vmatmul.f32.gmra.mxu0 %v2584
    %v2764 = vpop.f32.mrf.mxu0
    %v2765 = vadd.f32 %v2700, %v2764
    %2766 = vmatmul.f32.gmra.mxu0 %v2585
    %v2767 = vpop.f32.mrf.mxu0
    %v2768 = vadd.f32 %v2703, %v2767
    %2769 = vmatmul.f32.gmra.mxu0 %v2586
    %v2770 = vpop.f32.mrf.mxu0
    %v2771 = vadd.f32 %v2706, %v2770
    %2772 = vmatmul.f32.gmra.mxu0 %v2587
    %v2773 = vpop.f32.mrf.mxu0
    %v2774 = vadd.f32 %v2709, %v2773
    %2775 = vmatmul.f32.gmra.mxu0 %v2588
    %v2776 = vpop.f32.mrf.mxu0
    %v2777 = vadd.f32 %v2712, %v2776
    %2778 = vmatmul.f32.gmra.mxu0 %v2589
    %v2779 = vpop.f32.mrf.mxu0
    %v2780 = vadd.f32 %v2715, %v2779
    %2781 = vmatmul.f32.gmra.mxu0 %v2590
    %v2782 = vpop.f32.mrf.mxu0
    %v2783 = vadd.f32 %v2718, %v2782
    %2784 = vmatmul.f32.gmra.mxu0 %v2591
    %v2785 = vpop.f32.mrf.mxu0
    %v2786 = vadd.f32 %v2721, %v2785
    %2787 = vmatmul.f32.gmra.mxu0 %v2592
    %v2788 = vpop.f32.mrf.mxu0
    %v2789 = vadd.f32 %v2724, %v2788
    %2790 = vmatmul.f32.gmra.mxu0 %v2593
    %v2791 = vpop.f32.mrf.mxu0
    %v2792 = vadd.f32 %v2727, %v2791
    %2793 = vmatmul.f32.gmra.mxu0 %v2594
    %v2794 = vpop.f32.mrf.mxu0
    %v2795 = vadd.f32 %v2730, %v2794
    %2796 = vmatmul.f32.gmra.mxu0 %v2595
    %v2797 = vpop.f32.mrf.mxu0
    %v2798 = vadd.f32 %v2733, %v2797
    %2799 = vmatmul.f32.gmra.mxu0 %v2596
    %v2800 = vpop.f32.mrf.mxu0
    %v2801 = vadd.f32 %v2736, %v2800
    %2802 = vmatmul.f32.gmra.mxu0 %v2597
    %v2803 = vpop.f32.mrf.mxu0
    %v2804 = vadd.f32 %v2739, %v2803
    %2805 = vmatmul.f32.gmra.mxu0 %v2598
    %v2806 = vpop.f32.mrf.mxu0
    %v2807 = vadd.f32 %v2742, %v2806
    %2808 = vdwg.mxu0
    %v2809 = vld [vmem:[%s15] sm:$0xff]
    %v2810 = vld [vmem:[%s15 + $0x8] sm:$0xff]
    %v2811 = vld [vmem:[%s15 + $0x10] sm:$0xff]
    %v2812 = vld [vmem:[%s15 + $0x18] sm:$0xff]
    %v2813 = vld [vmem:[%s15 + $0x20] sm:$0xff]
    %v2814 = vld [vmem:[%s15 + $0x28] sm:$0xff]
    %v2815 = vld [vmem:[%s15 + $0x30] sm:$0xff]
    %v2816 = vld [vmem:[%s15 + $0x38] sm:$0xff]
    %v2817 = vld [vmem:[%s15 + $0x40] sm:$0xff]
    %v2818 = vld [vmem:[%s15 + $0x48] sm:$0xff]
    %v2819 = vld [vmem:[%s15 + $0x50] sm:$0xff]
    %v2820 = vld [vmem:[%s15 + $0x58] sm:$0xff]
    %v2821 = vld [vmem:[%s15 + $0x60] sm:$0xff]
    %v2822 = vld [vmem:[%s15 + $0x68] sm:$0xff]
    %v2823 = vld [vmem:[%s15 + $0x70] sm:$0xff]
    %v2824 = vld [vmem:[%s15 + $0x78] sm:$0xff]
    %2826 = vset.pattern.permute.xlu0 0
    %2827 = vperm.xlu0 %2826, %v2809
    %v2828 = vpop.permute.xlu0 %2827
    %2831 = vset.pattern.permute.xlu0 0
    %2832 = vperm.xlu0 %2831, %v2810
    %v2833 = vpop.permute.xlu0 %2832
    %2836 = vset.pattern.permute.xlu0 0
    %2837 = vperm.xlu0 %2836, %v2811
    %v2838 = vpop.permute.xlu0 %2837
    %2841 = vset.pattern.permute.xlu0 0
    %2842 = vperm.xlu0 %2841, %v2812
    %v2843 = vpop.permute.xlu0 %2842
    %2846 = vset.pattern.permute.xlu0 0
    %2847 = vperm.xlu0 %2846, %v2813
    %v2848 = vpop.permute.xlu0 %2847
    %2851 = vset.pattern.permute.xlu0 0
    %2852 = vperm.xlu0 %2851, %v2814
    %v2853 = vpop.permute.xlu0 %2852
    %2856 = vset.pattern.permute.xlu0 0
    %2857 = vperm.xlu0 %2856, %v2815
    %v2858 = vpop.permute.xlu0 %2857
    %2861 = vset.pattern.permute.xlu0 0
    %2862 = vperm.xlu0 %2861, %v2816
    %v2863 = vpop.permute.xlu0 %2862
    %2866 = vset.pattern.permute.xlu0 0
    %2867 = vperm.xlu0 %2866, %v2817
    %v2868 = vpop.permute.xlu0 %2867
    %2871 = vset.pattern.permute.xlu0 0
    %2872 = vperm.xlu0 %2871, %v2818
    %v2873 = vpop.permute.xlu0 %2872
    %2876 = vset.pattern.permute.xlu0 0
    %2877 = vperm.xlu0 %2876, %v2819
    %v2878 = vpop.permute.xlu0 %2877
    %2881 = vset.pattern.permute.xlu0 0
    %2882 = vperm.xlu0 %2881, %v2820
    %v2883 = vpop.permute.xlu0 %2882
    %2886 = vset.pattern.permute.xlu0 0
    %2887 = vperm.xlu0 %2886, %v2821
    %v2888 = vpop.permute.xlu0 %2887
    %2891 = vset.pattern.permute.xlu0 0
    %2892 = vperm.xlu0 %2891, %v2822
    %v2893 = vpop.permute.xlu0 %2892
    %2896 = vset.pattern.permute.xlu0 0
    %2897 = vperm.xlu0 %2896, %v2823
    %v2898 = vpop.permute.xlu0 %2897
    %2901 = vset.pattern.permute.xlu0 0
    %2902 = vperm.xlu0 %2901, %v2824
    %v2903 = vpop.permute.xlu0 %2902
    %v2905 = vadd.f32 %v2762, %v2828
    %v2906 = vadd.f32 %v2765, %v2833
    %v2907 = vadd.f32 %v2768, %v2838
    %v2908 = vadd.f32 %v2771, %v2843
    %v2909 = vadd.f32 %v2774, %v2848
    %v2910 = vadd.f32 %v2777, %v2853
    %v2911 = vadd.f32 %v2780, %v2858
    %v2912 = vadd.f32 %v2783, %v2863
    %v2913 = vadd.f32 %v2786, %v2868
    %v2914 = vadd.f32 %v2789, %v2873
    %v2915 = vadd.f32 %v2792, %v2878
    %v2916 = vadd.f32 %v2795, %v2883
    %v2917 = vadd.f32 %v2798, %v2888
    %v2918 = vadd.f32 %v2801, %v2893
    %v2919 = vadd.f32 %v2804, %v2898
    %v2920 = vadd.f32 %v2807, %v2903
    %v2921 = vmax.f32 %v2905, 0.0
    %v2922 = vmax.f32 %v2906, 0.0
    %v2923 = vmax.f32 %v2907, 0.0
    %v2924 = vmax.f32 %v2908, 0.0
    %v2925 = vmax.f32 %v2909, 0.0
    %v2926 = vmax.f32 %v2910, 0.0
    %v2927 = vmax.f32 %v2911, 0.0
    %v2928 = vmax.f32 %v2912, 0.0
    %v2929 = vmax.f32 %v2913, 0.0
    %v2930 = vmax.f32 %v2914, 0.0
    %v2931 = vmax.f32 %v2915, 0.0
    %v2932 = vmax.f32 %v2916, 0.0
    %v2933 = vmax.f32 %v2917, 0.0
    %v2934 = vmax.f32 %v2918, 0.0
    %v2935 = vmax.f32 %v2919, 0.0
    %v2936 = vmax.f32 %v2920, 0.0
    %v2937 = vld [vmem:[%s16] sm:$0xff]
    %v2938 = vld [vmem:[%s16 + $0x8] sm:$0xff]
    %v2939 = vld [vmem:[%s16 + $0x10] sm:$0xff]
    %v2940 = vld [vmem:[%s16 + $0x18] sm:$0xff]
    %v2941 = vld [vmem:[%s16 + $0x20] sm:$0xff]
    %v2942 = vld [vmem:[%s16 + $0x28] sm:$0xff]
    %v2943 = vld [vmem:[%s16 + $0x30] sm:$0xff]
    %v2944 = vld [vmem:[%s16 + $0x38] sm:$0xff]
    %v2945 = vld [vmem:[%s17] sm:$0xff]
    %v2946 = vld [vmem:[%s17 + $0x8] sm:$0xff]
    %v2947 = vld [vmem:[%s17 + $0x10] sm:$0xff]
    %v2948 = vld [vmem:[%s17 + $0x18] sm:$0xff]
    %v2949 = vld [vmem:[%s17 + $0x20] sm:$0xff]
    %v2950 = vld [vmem:[%s17 + $0x28] sm:$0xff]
    %v2951 = vld [vmem:[%s17 + $0x30] sm:$0xff]
    %v2952 = vld [vmem:[%s17 + $0x38] sm:$0xff]
    %2954 = vset.pattern.permute.xlu0 0
    %2955 = vperm.xlu0 %2954, %v2945
    %v2956 = vpop.permute.xlu0 %2955
    %2959 = vset.pattern.permute.xlu0 0
    %2960 = vperm.xlu0 %2959, %v2946
    %v2961 = vpop.permute.xlu0 %2960
    %2964 = vset.pattern.permute.xlu0 0
    %2965 = vperm.xlu0 %2964, %v2947
    %v2966 = vpop.permute.xlu0 %2965
    %2969 = vset.pattern.permute.xlu0 0
    %2970 = vperm.xlu0 %2969, %v2948
    %v2971 = vpop.permute.xlu0 %2970
    %2974 = vset.pattern.permute.xlu0 0
    %2975 = vperm.xlu0 %2974, %v2949
    %v2976 = vpop.permute.xlu0 %2975
    %2979 = vset.pattern.permute.xlu0 0
    %2980 = vperm.xlu0 %2979, %v2950
    %v2981 = vpop.permute.xlu0 %2980
    %2984 = vset.pattern.permute.xlu0 0
    %2985 = vperm.xlu0 %2984, %v2951
    %v2986 = vpop.permute.xlu0 %2985
    %2989 = vset.pattern.permute.xlu0 0
    %2990 = vperm.xlu0 %2989, %v2952
    %v2991 = vpop.permute.xlu0 %2990
    %2993 = vmatpush.msra.mxu0 %v2936
    %2994 = vmatpush.msra.mxu0 %v2935
    %2995 = vmatpush.msra.mxu0 %v2934
    %2996 = vmatpush.msra.mxu0 %v2933
    %2997 = vmatpush.msra.mxu0 %v2932
    %2998 = vmatpush.msra.mxu0 %v2931
    %2999 = vmatpush.msra.mxu0 %v2930
    %3000 = vmatpush.msra.mxu0 %v2929
    %3001 = vmatpush.msra.mxu0 %v2928
    %3002 = vmatpush.msra.mxu0 %v2927
    %3003 = vmatpush.msra.mxu0 %v2926
    %3004 = vmatpush.msra.mxu0 %v2925
    %3005 = vmatpush.msra.mxu0 %v2924
    %3006 = vmatpush.msra.mxu0 %v2923
    %3007 = vmatpush.msra.mxu0 %v2922
    %3008 = vmatpush.msra.mxu0 %v2921
    %3009 = vmatmul.f32.gmra.mxu0 %v2937
    %v3010 = vpop.f32.mrf.mxu0
    %v3011 = vadd.f32 %v2956, %v3010
    %3012 = vmatmul.f32.gmra.mxu0 %v2938
    %v3013 = vpop.f32.mrf.mxu0
    %v3014 = vadd.f32 %v2961, %v3013
    %3015 = vmatmul.f32.gmra.mxu0 %v2939
    %v3016 = vpop.f32.mrf.mxu0
    %v3017 = vadd.f32 %v2966, %v3016
    %3018 = vmatmul.f32.gmra.mxu0 %v2940
    %v3019 = vpop.f32.mrf.mxu0
    %v3020 = vadd.f32 %v2971, %v3019
    %3021 = vmatmul.f32.gmra.mxu0 %v2941
    %v3022 = vpop.f32.mrf.mxu0
    %v3023 = vadd.f32 %v2976, %v3022
    %3024 = vmatmul.f32.gmra.mxu0 %v2942
    %v3025 = vpop.f32.mrf.mxu0
    %v3026 = vadd.f32 %v2981, %v3025
    %3027 = vmatmul.f32.gmra.mxu0 %v2943
    %v3028 = vpop.f32.mrf.mxu0
    %v3029 = vadd.f32 %v2986, %v3028
    %3030 = vmatmul.f32.gmra.mxu0 %v2944
    %v3031 = vpop.f32.mrf.mxu0
    %v3032 = vadd.f32 %v2991, %v3031
    %3033 = vdwg.mxu0
    %v3034 = vmax.f32 %v3011, 0.0
    %v3035 = vmax.f32 %v3014, 0.0
    %v3036 = vmax.f32 %v3017, 0.0
    %v3037 = vmax.f32 %v3020, 0.0
    %v3038 = vmax.f32 %v3023, 0.0
    %v3039 = vmax.f32 %v3026, 0.0
    %v3040 = vmax.f32 %v3029, 0.0
    %v3041 = vmax.f32 %v3032, 0.0
    %v3042 = vld [vmem:[%s18] sm:$0xff]
    %v3043 = vld [vmem:[%s18 + $0x8] sm:$0xff]
    %v3044 = vld [vmem:[%s18 + $0x10] sm:$0xff]
    %v3045 = vld [vmem:[%s18 + $0x18] sm:$0xff]
    %v3046 = vld [vmem:[%s18 + $0x20] sm:$0xff]
    %v3047 = vld [vmem:[%s18 + $0x28] sm:$0xff]
    %v3048 = vld [vmem:[%s18 + $0x30] sm:$0xff]
    %v3049 = vld [vmem:[%s18 + $0x38] sm:$0xff]
    %3051 = vset.pattern.permute.xlu0 0
    %3052 = vperm.xlu0 %3051, %v3042
    %v3053 = vpop.permute.xlu0 %3052
    %3056 = vset.pattern.permute.xlu0 0
    %3057 = vperm.xlu0 %3056, %v3043
    %v3058 = vpop.permute.xlu0 %3057
    %3061 = vset.pattern.permute.xlu0 0
    %3062 = vperm.xlu0 %3061, %v3044
    %v3063 = vpop.permute.xlu0 %3062
    %3066 = vset.pattern.permute.xlu0 0
    %3067 = vperm.xlu0 %3066, %v3045
    %v3068 = vpop.permute.xlu0 %3067
    %3071 = vset.pattern.permute.xlu0 0
    %3072 = vperm.xlu0 %3071, %v3046
    %v3073 = vpop.permute.xlu0 %3072
    %3076 = vset.pattern.permute.xlu0 0
    %3077 = vperm.xlu0 %3076, %v3047
    %v3078 = vpop.permute.xlu0 %3077
    %3081 = vset.pattern.permute.xlu0 0
    %3082 = vperm.xlu0 %3081, %v3048
    %v3083 = vpop.permute.xlu0 %3082
    %3086 = vset.pattern.permute.xlu0 0
    %3087 = vperm.xlu0 %3086, %v3049
    %v3088 = vpop.permute.xlu0 %3087
    %v3090 = vmul.f32 %v3034, %v3053
    %v3091 = vmul.f32 %v3035, %v3058
    %v3092 = vmul.f32 %v3036, %v3063
    %v3093 = vmul.f32 %v3037, %v3068
    %v3094 = vmul.f32 %v3038, %v3073
    %v3095 = vmul.f32 %v3039, %v3078
    %v3096 = vmul.f32 %v3040, %v3083
    %v3097 = vmul.f32 %v3041, %v3088
    %v3098 = vadd.f32 %v3090, %v3091
    %v3099 = vadd.f32 %v3098, %v3092
    %v3100 = vadd.f32 %v3099, %v3093
    %v3101 = vadd.f32 %v3100, %v3094
    %v3102 = vadd.f32 %v3101, %v3095
    %v3103 = vadd.f32 %v3102, %v3096
    %v3104 = vadd.f32 %v3103, %v3097
    %v3105 = vrot.slane %v3104, 4
    %v3106 = vadd.f32 %v3104, %v3105
    %v3107 = vrot.slane %v3106, 2
    %v3108 = vadd.f32 %v3106, %v3107
    %v3109 = vrot.slane %v3108, 1
    %v3110 = vadd.f32 %v3108, %v3109
    %v3111 = vld [vmem:[#allocation3] sm:$0x1]
    %3113 = vset.pattern.permute.xlu0 0
    %3114 = vperm.xlu0 %3113, %v3111
    %v3115 = vpop.permute.xlu0 %3114
    %v3117 = vperm.slane %v3115, 0
    %v3118 = vadd.f32 %v3110, %v3117
    %v3119 = vxor.u32 %v3118, 2147483648
    %v3120 = vmul.f32 %v3119, 1.442695
    %v3121 = vpow.pop %v3120
    %v3122 = vadd.f32 %v3121, 1.0
    %v3123 = vrcp.pop %v3122
    %v3124 = vmul.f32 %v3122, %v3123
    %v3125 = vsub.f32 1.0, %v3124
    %v3126 = vmul.f32 %v3123, %v3125
    %v3127 = vadd.f32 %v3123, %v3126
    %vm3128 = vweird.f32 %v3122
    %vm3129 = vweird.f32 %v3123
    %vm3130 = vmor %vm3128, %vm3129
    %v3131 = vsel %vm3130, %v3123, %v3127
    %v3132 = vand.u32 2147483647, %v3122
    %vm3133 = vcmp.eq.f32.partialorder %v3132, 8.507059e+37
    %v3134 = vand.u32 %v3122, 2147483648
    %v3135 = vor.u32 1.1754944e-38, %v3134
    %v3136 = vsel %vm3133, %v3135, %v3131
    %v3137 = vmul.f32 1.0, %v3136
    %3138 = vst [vmem:[#allocation9] sm:$0x1] %v3137
    // Predicated region
    $region90: #{tpu_custom_call.1} parent=1 // pred_check
      _
    $region91: #{tpu_custom_call.1} parent=1 // pred_check_branch
      %3140 = sbr.rel (0) target = $region93
    $region92: #{tpu_custom_call.1} parent=1 // pred_region
      %3142 = vsyncadd [#allocation6], 0
      %s3144 = sshll.u32 [#allocation9], 4
      %s3145 = int_to_ptr.vmem [resolvable:$true] %s3144
      %s3146 = sshll.u32 %s20, 4
      %s3147 = int_to_ptr.hbm [resolvable:$true] %s3146
      %3149 = dma.vmem_to_hbm [thread:$0]  %s3145, 16, %s3147, [#allocation6]
    $region93: #{tpu_custom_call.1} parent=1 // pred_fallthru
      _
    // Predicated region
    $region94: #{tpu_custom_call.1} parent=1 // pred_check
      _
    $region95: #{tpu_custom_call.1} parent=1 // pred_check_branch
      %3151 = sbr.rel (0) target = $region97
    $region96: #{tpu_custom_call.1} parent=1 // pred_region
      %3153 = dma.done [#allocation6], 16
    $region97: #{tpu_custom_call.1} parent=1 // pred_fallthru
      _
    %3154 = vsyncpa [#allocation5], 1
    %3155 = vsyncpa [#allocation8], 1
    %3156 = vsyncpa [#allocation6], 1

</llo_original>
